<compile_context>
chip_gen: v6e
topology: v6e:2x2x1
jax: 0.10.0
libtpu: 0.0.40
codegen_flags: <defaults>
</compile_context>

<pallas_src>
import functools

import jax
import jax.numpy as jnp
from jax.experimental import pallas as pl
from jax.experimental.pallas import tpu as pltpu

_SUBLANE = 8            # f32 sublane tile
_BF16_SUBLANE = 16      # bf16 packed sublane tile
_UNROLL_T_MAX = 16      # fully unroll the in-kernel time loop up to this T
_FORI_UNROLL = 4        # unroll factor for the fori_loop fallback


# ----------------------------------------------------------------------------
# Fused Pallas kernel: all LSTM layers + linear head in one invocation
# ----------------------------------------------------------------------------
def fused_lstm_kernel(*refs, T, Bb, H, L):
    """Fused multi-layer LSTM + Linear head (one batch block per grid step).

    refs layout:
      [0]               x          (T*Bb, D_in)  bf16 (time-major, batch block)
      [1 + 3*l + 0]     w_ih[l]    (4, D_l, H)   bf16  per-gate, transposed
      [1 + 3*l + 1]     w_hh[l]    (4, H, H)     bf16  per-gate, transposed
      [1 + 3*l + 2]     bias[l]    (4, 1, H)     f32   (b_ih + b_hh)
      [1 + 3*L]         w_lin_t    (H, O)        f32
      [2 + 3*L]         b_lin      (1, O)        f32
      [3 + 3*L]         out        (Bb, O)       f32   (output)
      [4+3L .. 7+3L]    xproj[g]   (T*Bb, H)     act   per-gate hoisted proj
      [8 + 3*L]         hseq       (T*Bb, H)     act   inter-layer h sequence
    PyTorch gate order: g = 0:i, 1:f, 2:g(candidate), 3:o.
    """
    x_ref = refs[0]
    layer_refs = refs[1:1 + 3 * L]
    w_lin_ref = refs[1 + 3 * L]
    b_lin_ref = refs[2 + 3 * L]
    out_ref = refs[3 + 3 * L]
    xp_refs = refs[4 + 3 * L:8 + 3 * L]
    hseq_ref = refs[8 + 3 * L]

    xin = x_ref[...]                                 # (T*Bb, D_in) bf16
    h_last = None
    for l in range(L):                               # unrolled over layers
        w_ih_ref = layer_refs[3 * l + 0]
        w_hh_ref = layer_refs[3 * l + 1]
        b_ref = layer_refs[3 * l + 2]
        is_last = (l == L - 1)

        # Hoisted input projection (+ fused bias) for the whole sequence, one
        # lane-aligned (T*Bb, H) block per gate: big MXU matmuls off the serial
        # recurrent path, bf16 operands, f32 accumulation.
        xin_b = xin if xin.dtype == jnp.bfloat16 else xin.astype(jnp.bfloat16)
        for g in range(4):
            xp_refs[g][...] = (
                jnp.dot(xin_b, w_ih_ref[g], preferred_element_type=jnp.float32)
                + b_ref[g]
            ).astype(xp_refs[g].dtype)

        # Recurrent weights: load once per layer (hoisted out of the time loop).
        w_hh = [w_hh_ref[g] for g in range(4)]
        # TODO(synk): hold W_hh resident in the MXU across the time loop via
        # pltpu.matmul_push_rhs / matmul_acc_lhs / matmul_pop to amortize the
        # per-step weight push over T steps.

        def step(t, carry, w_hh=w_hh, is_last=is_last):
            h, c = carry
            off = t * Bb
            if not isinstance(off, int):             # dynamic (fori_loop) path
                off = pl.multiple_of(off, Bb)        # sublane-aligned slice
            h_b = h.astype(jnp.bfloat16)
            # Per-gate pre-activations: lane-aligned (Bb, H) blocks, no slicing.
            pre = [
                xp_refs[g][pl.ds(off, Bb), :].astype(jnp.float32)
                + jnp.dot(h_b, w_hh[g], preferred_element_type=jnp.float32)
                for g in range(4)
            ]
            # Per-gate activations (sigmoid on i/f/o, tanh on g only): ~5H
            # columns of transcendentals per step instead of ~9H.
            i_g = jax.nn.sigmoid(pre[0])
            f_g = jax.nn.sigmoid(pre[1])
            g_g = jnp.tanh(pre[2])
            o_g = jax.nn.sigmoid(pre[3])
            c_new = f_g * c + i_g * g_g
            h_new = o_g * jnp.tanh(c_new)
            if not is_last:                          # feed the next layer
                hseq_ref[pl.ds(off, Bb), :] = h_new.astype(hseq_ref.dtype)
            return h_new, c_new

        carry = (jnp.zeros((Bb, H), jnp.float32),    # h0
                 jnp.zeros((Bb, H), jnp.float32))    # c0
        if T <= _UNROLL_T_MAX:
            for t in range(T):                       # static, tile-aligned slices
                carry = step(t, carry)
        else:
            carry = jax.lax.fori_loop(0, T, step, carry, unroll=_FORI_UNROLL)
        h_last = carry[0]
        if not is_last:
            xin = hseq_ref[...]                      # next layer's input sequence

    # Linear head on the last timestep's hidden state of the last layer.
    out_ref[...] = (
        jnp.dot(h_last, w_lin_ref[...], preferred_element_type=jnp.float32)
        + b_lin_ref[...]
    )


# ----------------------------------------------------------------------------
# Wrappers
# ----------------------------------------------------------------------------
def _device_kind():
    try:
        return jax.devices()[0].device_kind.lower()
    except Exception:
        return ""


def _vmem_limit_bytes():
    kind = _device_kind()
    if "v5" in kind or "v6" in kind:
        return 96 * 1024 * 1024      # 128 MiB physical on v5e/v6e
    return 56 * 1024 * 1024          # v7x: 64 MiB physical; conservative default


def _num_batch_blocks(Bp):
    # Split the batch across TensorCores only on multi-TC chips (v7x); on a
    # single-TC chip extra grid steps would just serialize the recurrence.
    kind = _device_kind()
    if "v7" in kind and Bp % (2 * _SUBLANE) == 0:
        return 2
    return 1


def lstm_model_pallas(x_blocks, lstm_layers, w_lin_t, b_lin, *, T, Bp, Bb):
    """x_blocks: (nbb, T*Bb, D_in) bf16, batch-block-major, time-major inside."""
    nbb = Bp // Bb
    H = lstm_layers[0]["w_hh"].shape[-1]
    O = w_lin_t.shape[1]
    L = len(lstm_layers)
    Din = x_blocks.shape[-1]

    # bf16 activation scratch only when per-step (Bb, H) slices are aligned to
    # the bf16 sublane packing; f32 otherwise keeps every per-timestep
    # load/store tile-aligned (demo Bb=8 -> f32).
    act_dtype = jnp.bfloat16 if Bb % _BF16_SUBLANE == 0 else jnp.float32

    in_specs = [pl.BlockSpec((None, T * Bb, Din), lambda i: (i, 0, 0))]
    args = [x_blocks]
    for lp in lstm_layers:
        for name in ("w_ih", "w_hh", "bias"):
            a = lp[name]
            in_specs.append(pl.BlockSpec(a.shape, lambda i: (0, 0, 0)))
            args.append(a)
    in_specs += [pl.BlockSpec(w_lin_t.shape, lambda i: (0, 0)),
                 pl.BlockSpec(b_lin.shape, lambda i: (0, 0))]
    args += [w_lin_t, b_lin]

    kernel = functools.partial(fused_lstm_kernel, T=T, Bb=Bb, H=H, L=L)

    grid_spec = pltpu.PrefetchScalarGridSpec(
        num_scalar_prefetch=0,
        grid=(nbb,),
        in_specs=in_specs,
        out_specs=pl.BlockSpec((Bb, O), lambda i: (i, 0)),
        scratch_shapes=[pltpu.VMEM((T * Bb, H), act_dtype)      # 4x per-gate xproj
                        for _ in range(4)]
                       + [pltpu.VMEM((T * Bb, H), act_dtype)],  # inter-layer hseq
    )
    # TODO(synk): for production T/H/L, stream x and per-layer weights from HBM
    # (memory_space=pl.ANY + make_async_copy double-buffering, T-chunked xproj)
    # instead of holding everything VMEM-resident.
    return pl.pallas_call(
        kernel,
        out_shape=jax.ShapeDtypeStruct((Bp, O), jnp.float32),
        grid_spec=grid_spec,
        compiler_params=pltpu.CompilerParams(
            dimension_semantics=("parallel",),       # batch blocks -> v7x TCs
            vmem_limit_bytes=_vmem_limit_bytes()),
    )(*args)


def init_params(key, input_size, hidden_size, num_layers, output_size):
    """Deterministic init mimicking PyTorch's U(-1/sqrt(H), 1/sqrt(H))."""
    H = hidden_size
    k = 1.0 / jnp.sqrt(jnp.asarray(H, jnp.float32))
    params = {"lstm": []}
    keys = jax.random.split(key, num_layers * 4 + 2)
    idx = 0
    for layer in range(num_layers):
        d_in = input_size if layer == 0 else H
        w_ih = jax.random.uniform(keys[idx], (4 * H, d_in), jnp.float32, -k, k); idx += 1
        w_hh = jax.random.uniform(keys[idx], (4 * H, H), jnp.float32, -k, k); idx += 1
        b_ih = jax.random.uniform(keys[idx], (4 * H,), jnp.float32, -k, k); idx += 1
        b_hh = jax.random.uniform(keys[idx], (4 * H,), jnp.float32, -k, k); idx += 1
        params["lstm"].append({
            # Per-gate (PyTorch order [i,f,g,o]), transposed, bf16 MXU operands;
            # accumulation and state stay f32 in-kernel.
            "w_ih": jnp.transpose(w_ih.reshape(4, H, d_in), (0, 2, 1)).astype(jnp.bfloat16),
            "w_hh": jnp.transpose(w_hh.reshape(4, H, H), (0, 2, 1)).astype(jnp.bfloat16),
            "bias": (b_ih + b_hh).reshape(4, 1, H),              # f32, fused bias
        })
    w_lin = jax.random.uniform(keys[idx], (output_size, hidden_size),
                               jnp.float32, -k, k); idx += 1
    b_lin = jax.random.uniform(keys[idx], (output_size,), jnp.float32, -k, k); idx += 1
    params["linear"] = {"w_t": jnp.transpose(w_lin), "b": b_lin[None, :]}
    return params


@jax.jit
def lstm_model_forward(params, x):
    """x: (B, T, input_size) batch_first, like the PyTorch module.

    Returns (B, output_size) = Linear(last-timestep hidden of last layer).
    """
    B, T, D = x.shape
    Bp = -(-B // _SUBLANE) * _SUBLANE                # pad batch to a sublane tile
    nbb = _num_batch_blocks(Bp)
    Bb = Bp // nbb

    xt = jnp.transpose(x, (1, 0, 2))                 # (T, B, D), time-major
    if Bp != B:
        xt = jnp.pad(xt, ((0, 0), (0, Bp - B), (0, 0)))
    # (T, Bp, D) -> (nbb, T*Bb, D): batch blocks outermost so each grid step /
    # TensorCore gets a contiguous time-major slab.
    xb = (xt.reshape(T, nbb, Bb, D).transpose(1, 0, 2, 3)
            .reshape(nbb, T * Bb, D).astype(jnp.bfloat16))
    # TODO(synk): inter-layer dropout (p=0.1) is train-only in PyTorch; the
    # eval/inference forward is identity, so it is intentionally omitted.
    out_p = lstm_model_pallas(xb, params["lstm"],
                              params["linear"]["w_t"], params["linear"]["b"],
                              T=T, Bp=Bp, Bb=Bb)
    return out_p[:B]


if __name__ == "__main__":
    # Small shapes consistent with the module's forward.
    batch, seq_len = 2, 8
    input_size, hidden_size, num_layers, output_size = 16, 32, 2, 4

    key = jax.random.PRNGKey(0)
    pkey, xkey = jax.random.split(key)
    params = init_params(pkey, input_size, hidden_size, num_layers, output_size)
    x = jax.random.normal(xkey, (batch, seq_len, input_size), jnp.float32)

    out = lstm_model_forward(params, x)
    jax.block_until_ready(out)
    assert out.shape == (batch, output_size)
    print("KERNEL_OK")
</pallas_src>

<mosaic_0001>
module attributes {stable_mosaic.version = 11 : i64} {
  func.func @fused_lstm_kernel(%arg0: i32, %arg1: memref<1x64x16xbf16, #tpu.memory_space<vmem>>, %arg2: memref<4x16x32xbf16, #tpu.memory_space<vmem>>, %arg3: memref<4x32x32xbf16, #tpu.memory_space<vmem>>, %arg4: memref<4x1x32xf32, #tpu.memory_space<vmem>>, %arg5: memref<4x32x32xbf16, #tpu.memory_space<vmem>>, %arg6: memref<4x32x32xbf16, #tpu.memory_space<vmem>>, %arg7: memref<4x1x32xf32, #tpu.memory_space<vmem>>, %arg8: memref<32x4xf32, #tpu.memory_space<vmem>>, %arg9: memref<1x4xf32, #tpu.memory_space<vmem>>, %arg10: memref<8x4xf32, #tpu.memory_space<vmem>>, %arg11: memref<64x32xf32, #tpu.memory_space<vmem>>, %arg12: memref<64x32xf32, #tpu.memory_space<vmem>>, %arg13: memref<64x32xf32, #tpu.memory_space<vmem>>, %arg14: memref<64x32xf32, #tpu.memory_space<vmem>>, %arg15: memref<64x32xf32, #tpu.memory_space<vmem>>) attributes {dimension_semantics = [#tpu.dimension_semantics<parallel>], iteration_bounds = array<i64: 1>, scalar_prefetch = 0 : i64, scratch_operands = 5 : i64, tpu.core_type = #tpu.core_type<tc>, window_params = [{transform_indices = @transform_0, window_bounds = array<i64: 1, 64, 16>}, {pipeline_mode = #tpu.pipeline_mode<synchronous>, transform_indices = @transform_1, window_bounds = array<i64: 4, 16, 32>}, {pipeline_mode = #tpu.pipeline_mode<synchronous>, transform_indices = @transform_2, window_bounds = array<i64: 4, 32, 32>}, {pipeline_mode = #tpu.pipeline_mode<synchronous>, transform_indices = @transform_3, window_bounds = array<i64: 4, 1, 32>}, {pipeline_mode = #tpu.pipeline_mode<synchronous>, transform_indices = @transform_4, window_bounds = array<i64: 4, 32, 32>}, {pipeline_mode = #tpu.pipeline_mode<synchronous>, transform_indices = @transform_5, window_bounds = array<i64: 4, 32, 32>}, {pipeline_mode = #tpu.pipeline_mode<synchronous>, transform_indices = @transform_6, window_bounds = array<i64: 4, 1, 32>}, {pipeline_mode = #tpu.pipeline_mode<synchronous>, transform_indices = @transform_7, window_bounds = array<i64: 32, 4>}, {pipeline_mode = #tpu.pipeline_mode<synchronous>, transform_indices = @transform_8, window_bounds = array<i64: 1, 4>}, {transform_indices = @transform_9, window_bounds = array<i64: 8, 4>}]} {
    %c0 = arith.constant 0 : index
    %c0_0 = arith.constant 0 : index
    %c0_1 = arith.constant 0 : index
    %0 = vector.load %arg1[%c0, %c0_0, %c0_1] : memref<1x64x16xbf16, #tpu.memory_space<vmem>>, vector<1x64x16xbf16>
    %1 = vector.shape_cast %0 : vector<1x64x16xbf16> to vector<64x16xbf16>
    %c0_2 = arith.constant 0 : index
    %c0_3 = arith.constant 0 : index
    %c0_4 = arith.constant 0 : index
    %2 = vector.load %arg2[%c0_2, %c0_3, %c0_4] : memref<4x16x32xbf16, #tpu.memory_space<vmem>>, vector<1x16x32xbf16>
    %3 = vector.shape_cast %2 : vector<1x16x32xbf16> to vector<16x32xbf16>
    %cst = arith.constant dense<0.000000e+00> : vector<64x32xf32>
    %4 = tpu.matmul %1, %3, %cst {dimension_numbers = #tpu.dot_dimension_numbers<[1], [0], [0], [1], [0, 0, 1, 1], [], []>} : vector<64x16xbf16>, vector<16x32xbf16>, vector<64x32xf32> -> vector<64x32xf32>
    %c0_5 = arith.constant 0 : index
    %c0_6 = arith.constant 0 : index
    %c0_7 = arith.constant 0 : index
    %5 = vector.load %arg4[%c0_5, %c0_6, %c0_7] : memref<4x1x32xf32, #tpu.memory_space<vmem>>, vector<1x1x32xf32>
    %6 = vector.shape_cast %5 : vector<1x1x32xf32> to vector<1x32xf32>
    %7 = vector.broadcast %6 : vector<1x32xf32> to vector<64x32xf32>
    %8 = arith.addf %4, %7 : vector<64x32xf32>
    %c0_8 = arith.constant 0 : index
    %c0_9 = arith.constant 0 : index
    %9 = vector.load %arg11[%c0_8, %c0_9] : memref<64x32xf32, #tpu.memory_space<vmem>>, vector<64x32xf32>
    tpu.vector_store %arg11[%c0_8, %c0_9], %8 {strides = array<i32>} : memref<64x32xf32, #tpu.memory_space<vmem>>, vector<64x32xf32>,
    %c1 = arith.constant 1 : index
    %c0_10 = arith.constant 0 : index
    %c0_11 = arith.constant 0 : index
    %10 = vector.load %arg2[%c1, %c0_10, %c0_11] : memref<4x16x32xbf16, #tpu.memory_space<vmem>>, vector<1x16x32xbf16>
    %11 = vector.shape_cast %10 : vector<1x16x32xbf16> to vector<16x32xbf16>
    %cst_12 = arith.constant dense<0.000000e+00> : vector<64x32xf32>
    %12 = tpu.matmul %1, %11, %cst_12 {dimension_numbers = #tpu.dot_dimension_numbers<[1], [0], [0], [1], [0, 0, 1, 1], [], []>} : vector<64x16xbf16>, vector<16x32xbf16>, vector<64x32xf32> -> vector<64x32xf32>
    %c1_13 = arith.constant 1 : index
    %c0_14 = arith.constant 0 : index
    %c0_15 = arith.constant 0 : index
    %13 = vector.load %arg4[%c1_13, %c0_14, %c0_15] : memref<4x1x32xf32, #tpu.memory_space<vmem>>, vector<1x1x32xf32>
    %14 = vector.shape_cast %13 : vector<1x1x32xf32> to vector<1x32xf32>
    %15 = vector.broadcast %14 : vector<1x32xf32> to vector<64x32xf32>
    %16 = arith.addf %12, %15 : vector<64x32xf32>
    %c0_16 = arith.constant 0 : index
    %c0_17 = arith.constant 0 : index
    %17 = vector.load %arg12[%c0_16, %c0_17] : memref<64x32xf32, #tpu.memory_space<vmem>>, vector<64x32xf32>
    tpu.vector_store %arg12[%c0_16, %c0_17], %16 {strides = array<i32>} : memref<64x32xf32, #tpu.memory_space<vmem>>, vector<64x32xf32>,
    %c2 = arith.constant 2 : index
    %c0_18 = arith.constant 0 : index
    %c0_19 = arith.constant 0 : index
    %18 = vector.load %arg2[%c2, %c0_18, %c0_19] : memref<4x16x32xbf16, #tpu.memory_space<vmem>>, vector<1x16x32xbf16>
    %19 = vector.shape_cast %18 : vector<1x16x32xbf16> to vector<16x32xbf16>
    %cst_20 = arith.constant dense<0.000000e+00> : vector<64x32xf32>
    %20 = tpu.matmul %1, %19, %cst_20 {dimension_numbers = #tpu.dot_dimension_numbers<[1], [0], [0], [1], [0, 0, 1, 1], [], []>} : vector<64x16xbf16>, vector<16x32xbf16>, vector<64x32xf32> -> vector<64x32xf32>
    %c2_21 = arith.constant 2 : index
    %c0_22 = arith.constant 0 : index
    %c0_23 = arith.constant 0 : index
    %21 = vector.load %arg4[%c2_21, %c0_22, %c0_23] : memref<4x1x32xf32, #tpu.memory_space<vmem>>, vector<1x1x32xf32>
    %22 = vector.shape_cast %21 : vector<1x1x32xf32> to vector<1x32xf32>
    %23 = vector.broadcast %22 : vector<1x32xf32> to vector<64x32xf32>
    %24 = arith.addf %20, %23 : vector<64x32xf32>
    %c0_24 = arith.constant 0 : index
    %c0_25 = arith.constant 0 : index
    %25 = vector.load %arg13[%c0_24, %c0_25] : memref<64x32xf32, #tpu.memory_space<vmem>>, vector<64x32xf32>
    tpu.vector_store %arg13[%c0_24, %c0_25], %24 {strides = array<i32>} : memref<64x32xf32, #tpu.memory_space<vmem>>, vector<64x32xf32>,
    %c3 = arith.constant 3 : index
    %c0_26 = arith.constant 0 : index
    %c0_27 = arith.constant 0 : index
    %26 = vector.load %arg2[%c3, %c0_26, %c0_27] : memref<4x16x32xbf16, #tpu.memory_space<vmem>>, vector<1x16x32xbf16>
    %27 = vector.shape_cast %26 : vector<1x16x32xbf16> to vector<16x32xbf16>
    %cst_28 = arith.constant dense<0.000000e+00> : vector<64x32xf32>
    %28 = tpu.matmul %1, %27, %cst_28 {dimension_numbers = #tpu.dot_dimension_numbers<[1], [0], [0], [1], [0, 0, 1, 1], [], []>} : vector<64x16xbf16>, vector<16x32xbf16>, vector<64x32xf32> -> vector<64x32xf32>
    %c3_29 = arith.constant 3 : index
    %c0_30 = arith.constant 0 : index
    %c0_31 = arith.constant 0 : index
    %29 = vector.load %arg4[%c3_29, %c0_30, %c0_31] : memref<4x1x32xf32, #tpu.memory_space<vmem>>, vector<1x1x32xf32>
    %30 = vector.shape_cast %29 : vector<1x1x32xf32> to vector<1x32xf32>
    %31 = vector.broadcast %30 : vector<1x32xf32> to vector<64x32xf32>
    %32 = arith.addf %28, %31 : vector<64x32xf32>
    %c0_32 = arith.constant 0 : index
    %c0_33 = arith.constant 0 : index
    %33 = vector.load %arg14[%c0_32, %c0_33] : memref<64x32xf32, #tpu.memory_space<vmem>>, vector<64x32xf32>
    tpu.vector_store %arg14[%c0_32, %c0_33], %32 {strides = array<i32>} : memref<64x32xf32, #tpu.memory_space<vmem>>, vector<64x32xf32>,
    %c0_34 = arith.constant 0 : index
    %c0_35 = arith.constant 0 : index
    %c0_36 = arith.constant 0 : index
    %34 = vector.load %arg3[%c0_34, %c0_35, %c0_36] : memref<4x32x32xbf16, #tpu.memory_space<vmem>>, vector<1x32x32xbf16>
    %35 = vector.shape_cast %34 : vector<1x32x32xbf16> to vector<32x32xbf16>
    %c1_37 = arith.constant 1 : index
    %c0_38 = arith.constant 0 : index
    %c0_39 = arith.constant 0 : index
    %36 = vector.load %arg3[%c1_37, %c0_38, %c0_39] : memref<4x32x32xbf16, #tpu.memory_space<vmem>>, vector<1x32x32xbf16>
    %37 = vector.shape_cast %36 : vector<1x32x32xbf16> to vector<32x32xbf16>
    %c2_40 = arith.constant 2 : index
    %c0_41 = arith.constant 0 : index
    %c0_42 = arith.constant 0 : index
    %38 = vector.load %arg3[%c2_40, %c0_41, %c0_42] : memref<4x32x32xbf16, #tpu.memory_space<vmem>>, vector<1x32x32xbf16>
    %39 = vector.shape_cast %38 : vector<1x32x32xbf16> to vector<32x32xbf16>
    %c3_43 = arith.constant 3 : index
    %c0_44 = arith.constant 0 : index
    %c0_45 = arith.constant 0 : index
    %40 = vector.load %arg3[%c3_43, %c0_44, %c0_45] : memref<4x32x32xbf16, #tpu.memory_space<vmem>>, vector<1x32x32xbf16>
    %41 = vector.shape_cast %40 : vector<1x32x32xbf16> to vector<32x32xbf16>
    %cst_46 = arith.constant 0.000000e+00 : f32
    %42 = vector.broadcast %cst_46 : f32 to vector<8x32xf32>
    %cst_47 = arith.constant 0.000000e+00 : f32
    %43 = vector.broadcast %cst_47 : f32 to vector<8x32xf32>
    %44 = arith.truncf %42 : vector<8x32xf32> to vector<8x32xbf16>
    %c0_48 = arith.constant 0 : index
    %c0_49 = arith.constant 0 : index
    %45 = vector.load %arg11[%c0_48, %c0_49] : memref<64x32xf32, #tpu.memory_space<vmem>>, vector<8x32xf32>
    %cst_50 = arith.constant dense<0.000000e+00> : vector<8x32xf32>
    %46 = tpu.matmul %44, %35, %cst_50 {dimension_numbers = #tpu.dot_dimension_numbers<[1], [0], [0], [1], [0, 0, 1, 1], [], []>} : vector<8x32xbf16>, vector<32x32xbf16>, vector<8x32xf32> -> vector<8x32xf32>
    %47 = arith.addf %45, %46 : vector<8x32xf32>
    %c0_51 = arith.constant 0 : index
    %c0_52 = arith.constant 0 : index
    %48 = vector.load %arg12[%c0_51, %c0_52] : memref<64x32xf32, #tpu.memory_space<vmem>>, vector<8x32xf32>
    %cst_53 = arith.constant dense<0.000000e+00> : vector<8x32xf32>
    %49 = tpu.matmul %44, %37, %cst_53 {dimension_numbers = #tpu.dot_dimension_numbers<[1], [0], [0], [1], [0, 0, 1, 1], [], []>} : vector<8x32xbf16>, vector<32x32xbf16>, vector<8x32xf32> -> vector<8x32xf32>
    %50 = arith.addf %48, %49 : vector<8x32xf32>
    %c0_54 = arith.constant 0 : index
    %c0_55 = arith.constant 0 : index
    %51 = vector.load %arg13[%c0_54, %c0_55] : memref<64x32xf32, #tpu.memory_space<vmem>>, vector<8x32xf32>
    %cst_56 = arith.constant dense<0.000000e+00> : vector<8x32xf32>
    %52 = tpu.matmul %44, %39, %cst_56 {dimension_numbers = #tpu.dot_dimension_numbers<[1], [0], [0], [1], [0, 0, 1, 1], [], []>} : vector<8x32xbf16>, vector<32x32xbf16>, vector<8x32xf32> -> vector<8x32xf32>
    %53 = arith.addf %51, %52 : vector<8x32xf32>
    %c0_57 = arith.constant 0 : index
    %c0_58 = arith.constant 0 : index
    %54 = vector.load %arg14[%c0_57, %c0_58] : memref<64x32xf32, #tpu.memory_space<vmem>>, vector<8x32xf32>
    %cst_59 = arith.constant dense<0.000000e+00> : vector<8x32xf32>
    %55 = tpu.matmul %44, %41, %cst_59 {dimension_numbers = #tpu.dot_dimension_numbers<[1], [0], [0], [1], [0, 0, 1, 1], [], []>} : vector<8x32xbf16>, vector<32x32xbf16>, vector<8x32xf32> -> vector<8x32xf32>
    %56 = arith.addf %54, %55 : vector<8x32xf32>
    %57 = arith.negf %47 : vector<8x32xf32>
    %58 = math.exp %57 : vector<8x32xf32>
    %cst_60 = arith.constant 1.000000e+00 : f32
    %59 = vector.broadcast %cst_60 : f32 to vector<8x32xf32>
    %60 = arith.addf %59, %58 : vector<8x32xf32>
    %61 = arith.divf %59, %60 : vector<8x32xf32>
    %62 = arith.negf %50 : vector<8x32xf32>
    %63 = math.exp %62 : vector<8x32xf32>
    %cst_61 = arith.constant 1.000000e+00 : f32
    %64 = vector.broadcast %cst_61 : f32 to vector<8x32xf32>
    %65 = arith.addf %64, %63 : vector<8x32xf32>
    %66 = arith.divf %64, %65 : vector<8x32xf32>
    %67 = math.tanh %53 : vector<8x32xf32>
    %68 = arith.negf %56 : vector<8x32xf32>
    %69 = math.exp %68 : vector<8x32xf32>
    %cst_62 = arith.constant 1.000000e+00 : f32
    %70 = vector.broadcast %cst_62 : f32 to vector<8x32xf32>
    %71 = arith.addf %70, %69 : vector<8x32xf32>
    %72 = arith.divf %70, %71 : vector<8x32xf32>
    %73 = arith.mulf %66, %43 : vector<8x32xf32>
    %74 = arith.mulf %61, %67 : vector<8x32xf32>
    %75 = arith.addf %73, %74 : vector<8x32xf32>
    %76 = math.tanh %75 : vector<8x32xf32>
    %77 = arith.mulf %72, %76 : vector<8x32xf32>
    %c0_63 = arith.constant 0 : index
    %c0_64 = arith.constant 0 : index
    %78 = vector.load %arg15[%c0_63, %c0_64] : memref<64x32xf32, #tpu.memory_space<vmem>>, vector<8x32xf32>
    tpu.vector_store %arg15[%c0_63, %c0_64], %77 {strides = array<i32>} : memref<64x32xf32, #tpu.memory_space<vmem>>, vector<8x32xf32>,
    %79 = arith.truncf %77 : vector<8x32xf32> to vector<8x32xbf16>
    %c8 = arith.constant 8 : index
    %c0_65 = arith.constant 0 : index
    %80 = vector.load %arg11[%c8, %c0_65] : memref<64x32xf32, #tpu.memory_space<vmem>>, vector<8x32xf32>
    %cst_66 = arith.constant dense<0.000000e+00> : vector<8x32xf32>
    %81 = tpu.matmul %79, %35, %cst_66 {dimension_numbers = #tpu.dot_dimension_numbers<[1], [0], [0], [1], [0, 0, 1, 1], [], []>} : vector<8x32xbf16>, vector<32x32xbf16>, vector<8x32xf32> -> vector<8x32xf32>
    %82 = arith.addf %80, %81 : vector<8x32xf32>
    %c8_67 = arith.constant 8 : index
    %c0_68 = arith.constant 0 : index
    %83 = vector.load %arg12[%c8_67, %c0_68] : memref<64x32xf32, #tpu.memory_space<vmem>>, vector<8x32xf32>
    %cst_69 = arith.constant dense<0.000000e+00> : vector<8x32xf32>
    %84 = tpu.matmul %79, %37, %cst_69 {dimension_numbers = #tpu.dot_dimension_numbers<[1], [0], [0], [1], [0, 0, 1, 1], [], []>} : vector<8x32xbf16>, vector<32x32xbf16>, vector<8x32xf32> -> vector<8x32xf32>
    %85 = arith.addf %83, %84 : vector<8x32xf32>
    %c8_70 = arith.constant 8 : index
    %c0_71 = arith.constant 0 : index
    %86 = vector.load %arg13[%c8_70, %c0_71] : memref<64x32xf32, #tpu.memory_space<vmem>>, vector<8x32xf32>
    %cst_72 = arith.constant dense<0.000000e+00> : vector<8x32xf32>
    %87 = tpu.matmul %79, %39, %cst_72 {dimension_numbers = #tpu.dot_dimension_numbers<[1], [0], [0], [1], [0, 0, 1, 1], [], []>} : vector<8x32xbf16>, vector<32x32xbf16>, vector<8x32xf32> -> vector<8x32xf32>
    %88 = arith.addf %86, %87 : vector<8x32xf32>
    %c8_73 = arith.constant 8 : index
    %c0_74 = arith.constant 0 : index
    %89 = vector.load %arg14[%c8_73, %c0_74] : memref<64x32xf32, #tpu.memory_space<vmem>>, vector<8x32xf32>
    %cst_75 = arith.constant dense<0.000000e+00> : vector<8x32xf32>
    %90 = tpu.matmul %79, %41, %cst_75 {dimension_numbers = #tpu.dot_dimension_numbers<[1], [0], [0], [1], [0, 0, 1, 1], [], []>} : vector<8x32xbf16>, vector<32x32xbf16>, vector<8x32xf32> -> vector<8x32xf32>
    %91 = arith.addf %89, %90 : vector<8x32xf32>
    %92 = arith.negf %82 : vector<8x32xf32>
    %93 = math.exp %92 : vector<8x32xf32>
    %cst_76 = arith.constant 1.000000e+00 : f32
    %94 = vector.broadcast %cst_76 : f32 to vector<8x32xf32>
    %95 = arith.addf %94, %93 : vector<8x32xf32>
    %96 = arith.divf %94, %95 : vector<8x32xf32>
    %97 = arith.negf %85 : vector<8x32xf32>
    %98 = math.exp %97 : vector<8x32xf32>
    %cst_77 = arith.constant 1.000000e+00 : f32
    %99 = vector.broadcast %cst_77 : f32 to vector<8x32xf32>
    %100 = arith.addf %99, %98 : vector<8x32xf32>
    %101 = arith.divf %99, %100 : vector<8x32xf32>
    %102 = math.tanh %88 : vector<8x32xf32>
    %103 = arith.negf %91 : vector<8x32xf32>
    %104 = math.exp %103 : vector<8x32xf32>
    %cst_78 = arith.constant 1.000000e+00 : f32
    %105 = vector.broadcast %cst_78 : f32 to vector<8x32xf32>
    %106 = arith.addf %105, %104 : vector<8x32xf32>
    %107 = arith.divf %105, %106 : vector<8x32xf32>
    %108 = arith.mulf %101, %75 : vector<8x32xf32>
    %109 = arith.mulf %96, %102 : vector<8x32xf32>
    %110 = arith.addf %108, %109 : vector<8x32xf32>
    %111 = math.tanh %110 : vector<8x32xf32>
    %112 = arith.mulf %107, %111 : vector<8x32xf32>
    %c8_79 = arith.constant 8 : index
    %c0_80 = arith.constant 0 : index
    %113 = vector.load %arg15[%c8_79, %c0_80] : memref<64x32xf32, #tpu.memory_space<vmem>>, vector<8x32xf32>
    tpu.vector_store %arg15[%c8_79, %c0_80], %112 {strides = array<i32>} : memref<64x32xf32, #tpu.memory_space<vmem>>, vector<8x32xf32>,
    %114 = arith.truncf %112 : vector<8x32xf32> to vector<8x32xbf16>
    %c16 = arith.constant 16 : index
    %c0_81 = arith.constant 0 : index
    %115 = vector.load %arg11[%c16, %c0_81] : memref<64x32xf32, #tpu.memory_space<vmem>>, vector<8x32xf32>
    %cst_82 = arith.constant dense<0.000000e+00> : vector<8x32xf32>
    %116 = tpu.matmul %114, %35, %cst_82 {dimension_numbers = #tpu.dot_dimension_numbers<[1], [0], [0], [1], [0, 0, 1, 1], [], []>} : vector<8x32xbf16>, vector<32x32xbf16>, vector<8x32xf32> -> vector<8x32xf32>
    %117 = arith.addf %115, %116 : vector<8x32xf32>
    %c16_83 = arith.constant 16 : index
    %c0_84 = arith.constant 0 : index
    %118 = vector.load %arg12[%c16_83, %c0_84] : memref<64x32xf32, #tpu.memory_space<vmem>>, vector<8x32xf32>
    %cst_85 = arith.constant dense<0.000000e+00> : vector<8x32xf32>
    %119 = tpu.matmul %114, %37, %cst_85 {dimension_numbers = #tpu.dot_dimension_numbers<[1], [0], [0], [1], [0, 0, 1, 1], [], []>} : vector<8x32xbf16>, vector<32x32xbf16>, vector<8x32xf32> -> vector<8x32xf32>
    %120 = arith.addf %118, %119 : vector<8x32xf32>
    %c16_86 = arith.constant 16 : index
    %c0_87 = arith.constant 0 : index
    %121 = vector.load %arg13[%c16_86, %c0_87] : memref<64x32xf32, #tpu.memory_space<vmem>>, vector<8x32xf32>
    %cst_88 = arith.constant dense<0.000000e+00> : vector<8x32xf32>
    %122 = tpu.matmul %114, %39, %cst_88 {dimension_numbers = #tpu.dot_dimension_numbers<[1], [0], [0], [1], [0, 0, 1, 1], [], []>} : vector<8x32xbf16>, vector<32x32xbf16>, vector<8x32xf32> -> vector<8x32xf32>
    %123 = arith.addf %121, %122 : vector<8x32xf32>
    %c16_89 = arith.constant 16 : index
    %c0_90 = arith.constant 0 : index
    %124 = vector.load %arg14[%c16_89, %c0_90] : memref<64x32xf32, #tpu.memory_space<vmem>>, vector<8x32xf32>
    %cst_91 = arith.constant dense<0.000000e+00> : vector<8x32xf32>
    %125 = tpu.matmul %114, %41, %cst_91 {dimension_numbers = #tpu.dot_dimension_numbers<[1], [0], [0], [1], [0, 0, 1, 1], [], []>} : vector<8x32xbf16>, vector<32x32xbf16>, vector<8x32xf32> -> vector<8x32xf32>
    %126 = arith.addf %124, %125 : vector<8x32xf32>
    %127 = arith.negf %117 : vector<8x32xf32>
    %128 = math.exp %127 : vector<8x32xf32>
    %cst_92 = arith.constant 1.000000e+00 : f32
    %129 = vector.broadcast %cst_92 : f32 to vector<8x32xf32>
    %130 = arith.addf %129, %128 : vector<8x32xf32>
    %131 = arith.divf %129, %130 : vector<8x32xf32>
    %132 = arith.negf %120 : vector<8x32xf32>
    %133 = math.exp %132 : vector<8x32xf32>
    %cst_93 = arith.constant 1.000000e+00 : f32
    %134 = vector.broadcast %cst_93 : f32 to vector<8x32xf32>
    %135 = arith.addf %134, %133 : vector<8x32xf32>
    %136 = arith.divf %134, %135 : vector<8x32xf32>
    %137 = math.tanh %123 : vector<8x32xf32>
    %138 = arith.negf %126 : vector<8x32xf32>
    %139 = math.exp %138 : vector<8x32xf32>
    %cst_94 = arith.constant 1.000000e+00 : f32
    %140 = vector.broadcast %cst_94 : f32 to vector<8x32xf32>
    %141 = arith.addf %140, %139 : vector<8x32xf32>
    %142 = arith.divf %140, %141 : vector<8x32xf32>
    %143 = arith.mulf %136, %110 : vector<8x32xf32>
    %144 = arith.mulf %131, %137 : vector<8x32xf32>
    %145 = arith.addf %143, %144 : vector<8x32xf32>
    %146 = math.tanh %145 : vector<8x32xf32>
    %147 = arith.mulf %142, %146 : vector<8x32xf32>
    %c16_95 = arith.constant 16 : index
    %c0_96 = arith.constant 0 : index
    %148 = vector.load %arg15[%c16_95, %c0_96] : memref<64x32xf32, #tpu.memory_space<vmem>>, vector<8x32xf32>
    tpu.vector_store %arg15[%c16_95, %c0_96], %147 {strides = array<i32>} : memref<64x32xf32, #tpu.memory_space<vmem>>, vector<8x32xf32>,
    %149 = arith.truncf %147 : vector<8x32xf32> to vector<8x32xbf16>
    %c24 = arith.constant 24 : index
    %c0_97 = arith.constant 0 : index
    %150 = vector.load %arg11[%c24, %c0_97] : memref<64x32xf32, #tpu.memory_space<vmem>>, vector<8x32xf32>
    %cst_98 = arith.constant dense<0.000000e+00> : vector<8x32xf32>
    %151 = tpu.matmul %149, %35, %cst_98 {dimension_numbers = #tpu.dot_dimension_numbers<[1], [0], [0], [1], [0, 0, 1, 1], [], []>} : vector<8x32xbf16>, vector<32x32xbf16>, vector<8x32xf32> -> vector<8x32xf32>
    %152 = arith.addf %150, %151 : vector<8x32xf32>
    %c24_99 = arith.constant 24 : index
    %c0_100 = arith.constant 0 : index
    %153 = vector.load %arg12[%c24_99, %c0_100] : memref<64x32xf32, #tpu.memory_space<vmem>>, vector<8x32xf32>
    %cst_101 = arith.constant dense<0.000000e+00> : vector<8x32xf32>
    %154 = tpu.matmul %149, %37, %cst_101 {dimension_numbers = #tpu.dot_dimension_numbers<[1], [0], [0], [1], [0, 0, 1, 1], [], []>} : vector<8x32xbf16>, vector<32x32xbf16>, vector<8x32xf32> -> vector<8x32xf32>
    %155 = arith.addf %153, %154 : vector<8x32xf32>
    %c24_102 = arith.constant 24 : index
    %c0_103 = arith.constant 0 : index
    %156 = vector.load %arg13[%c24_102, %c0_103] : memref<64x32xf32, #tpu.memory_space<vmem>>, vector<8x32xf32>
    %cst_104 = arith.constant dense<0.000000e+00> : vector<8x32xf32>
    %157 = tpu.matmul %149, %39, %cst_104 {dimension_numbers = #tpu.dot_dimension_numbers<[1], [0], [0], [1], [0, 0, 1, 1], [], []>} : vector<8x32xbf16>, vector<32x32xbf16>, vector<8x32xf32> -> vector<8x32xf32>
    %158 = arith.addf %156, %157 : vector<8x32xf32>
    %c24_105 = arith.constant 24 : index
    %c0_106 = arith.constant 0 : index
    %159 = vector.load %arg14[%c24_105, %c0_106] : memref<64x32xf32, #tpu.memory_space<vmem>>, vector<8x32xf32>
    %cst_107 = arith.constant dense<0.000000e+00> : vector<8x32xf32>
    %160 = tpu.matmul %149, %41, %cst_107 {dimension_numbers = #tpu.dot_dimension_numbers<[1], [0], [0], [1], [0, 0, 1, 1], [], []>} : vector<8x32xbf16>, vector<32x32xbf16>, vector<8x32xf32> -> vector<8x32xf32>
    %161 = arith.addf %159, %160 : vector<8x32xf32>
    %162 = arith.negf %152 : vector<8x32xf32>
    %163 = math.exp %162 : vector<8x32xf32>
    %cst_108 = arith.constant 1.000000e+00 : f32
    %164 = vector.broadcast %cst_108 : f32 to vector<8x32xf32>
    %165 = arith.addf %164, %163 : vector<8x32xf32>
    %166 = arith.divf %164, %165 : vector<8x32xf32>
    %167 = arith.negf %155 : vector<8x32xf32>
    %168 = math.exp %167 : vector<8x32xf32>
    %cst_109 = arith.constant 1.000000e+00 : f32
    %169 = vector.broadcast %cst_109 : f32 to vector<8x32xf32>
    %170 = arith.addf %169, %168 : vector<8x32xf32>
    %171 = arith.divf %169, %170 : vector<8x32xf32>
    %172 = math.tanh %158 : vector<8x32xf32>
    %173 = arith.negf %161 : vector<8x32xf32>
    %174 = math.exp %173 : vector<8x32xf32>
    %cst_110 = arith.constant 1.000000e+00 : f32
    %175 = vector.broadcast %cst_110 : f32 to vector<8x32xf32>
    %176 = arith.addf %175, %174 : vector<8x32xf32>
    %177 = arith.divf %175, %176 : vector<8x32xf32>
    %178 = arith.mulf %171, %145 : vector<8x32xf32>
    %179 = arith.mulf %166, %172 : vector<8x32xf32>
    %180 = arith.addf %178, %179 : vector<8x32xf32>
    %181 = math.tanh %180 : vector<8x32xf32>
    %182 = arith.mulf %177, %181 : vector<8x32xf32>
    %c24_111 = arith.constant 24 : index
    %c0_112 = arith.constant 0 : index
    %183 = vector.load %arg15[%c24_111, %c0_112] : memref<64x32xf32, #tpu.memory_space<vmem>>, vector<8x32xf32>
    tpu.vector_store %arg15[%c24_111, %c0_112], %182 {strides = array<i32>} : memref<64x32xf32, #tpu.memory_space<vmem>>, vector<8x32xf32>,
    %184 = arith.truncf %182 : vector<8x32xf32> to vector<8x32xbf16>
    %c32 = arith.constant 32 : index
    %c0_113 = arith.constant 0 : index
    %185 = vector.load %arg11[%c32, %c0_113] : memref<64x32xf32, #tpu.memory_space<vmem>>, vector<8x32xf32>
    %cst_114 = arith.constant dense<0.000000e+00> : vector<8x32xf32>
    %186 = tpu.matmul %184, %35, %cst_114 {dimension_numbers = #tpu.dot_dimension_numbers<[1], [0], [0], [1], [0, 0, 1, 1], [], []>} : vector<8x32xbf16>, vector<32x32xbf16>, vector<8x32xf32> -> vector<8x32xf32>
    %187 = arith.addf %185, %186 : vector<8x32xf32>
    %c32_115 = arith.constant 32 : index
    %c0_116 = arith.constant 0 : index
    %188 = vector.load %arg12[%c32_115, %c0_116] : memref<64x32xf32, #tpu.memory_space<vmem>>, vector<8x32xf32>
    %cst_117 = arith.constant dense<0.000000e+00> : vector<8x32xf32>
    %189 = tpu.matmul %184, %37, %cst_117 {dimension_numbers = #tpu.dot_dimension_numbers<[1], [0], [0], [1], [0, 0, 1, 1], [], []>} : vector<8x32xbf16>, vector<32x32xbf16>, vector<8x32xf32> -> vector<8x32xf32>
    %190 = arith.addf %188, %189 : vector<8x32xf32>
    %c32_118 = arith.constant 32 : index
    %c0_119 = arith.constant 0 : index
    %191 = vector.load %arg13[%c32_118, %c0_119] : memref<64x32xf32, #tpu.memory_space<vmem>>, vector<8x32xf32>
    %cst_120 = arith.constant dense<0.000000e+00> : vector<8x32xf32>
    %192 = tpu.matmul %184, %39, %cst_120 {dimension_numbers = #tpu.dot_dimension_numbers<[1], [0], [0], [1], [0, 0, 1, 1], [], []>} : vector<8x32xbf16>, vector<32x32xbf16>, vector<8x32xf32> -> vector<8x32xf32>
    %193 = arith.addf %191, %192 : vector<8x32xf32>
    %c32_121 = arith.constant 32 : index
    %c0_122 = arith.constant 0 : index
    %194 = vector.load %arg14[%c32_121, %c0_122] : memref<64x32xf32, #tpu.memory_space<vmem>>, vector<8x32xf32>
    %cst_123 = arith.constant dense<0.000000e+00> : vector<8x32xf32>
    %195 = tpu.matmul %184, %41, %cst_123 {dimension_numbers = #tpu.dot_dimension_numbers<[1], [0], [0], [1], [0, 0, 1, 1], [], []>} : vector<8x32xbf16>, vector<32x32xbf16>, vector<8x32xf32> -> vector<8x32xf32>
    %196 = arith.addf %194, %195 : vector<8x32xf32>
    %197 = arith.negf %187 : vector<8x32xf32>
    %198 = math.exp %197 : vector<8x32xf32>
    %cst_124 = arith.constant 1.000000e+00 : f32
    %199 = vector.broadcast %cst_124 : f32 to vector<8x32xf32>
    %200 = arith.addf %199, %198 : vector<8x32xf32>
    %201 = arith.divf %199, %200 : vector<8x32xf32>
    %202 = arith.negf %190 : vector<8x32xf32>
    %203 = math.exp %202 : vector<8x32xf32>
    %cst_125 = arith.constant 1.000000e+00 : f32
    %204 = vector.broadcast %cst_125 : f32 to vector<8x32xf32>
    %205 = arith.addf %204, %203 : vector<8x32xf32>
    %206 = arith.divf %204, %205 : vector<8x32xf32>
    %207 = math.tanh %193 : vector<8x32xf32>
    %208 = arith.negf %196 : vector<8x32xf32>
    %209 = math.exp %208 : vector<8x32xf32>
    %cst_126 = arith.constant 1.000000e+00 : f32
    %210 = vector.broadcast %cst_126 : f32 to vector<8x32xf32>
    %211 = arith.addf %210, %209 : vector<8x32xf32>
    %212 = arith.divf %210, %211 : vector<8x32xf32>
    %213 = arith.mulf %206, %180 : vector<8x32xf32>
    %214 = arith.mulf %201, %207 : vector<8x32xf32>
    %215 = arith.addf %213, %214 : vector<8x32xf32>
    %216 = math.tanh %215 : vector<8x32xf32>
    %217 = arith.mulf %212, %216 : vector<8x32xf32>
    %c32_127 = arith.constant 32 : index
    %c0_128 = arith.constant 0 : index
    %218 = vector.load %arg15[%c32_127, %c0_128] : memref<64x32xf32, #tpu.memory_space<vmem>>, vector<8x32xf32>
    tpu.vector_store %arg15[%c32_127, %c0_128], %217 {strides = array<i32>} : memref<64x32xf32, #tpu.memory_space<vmem>>, vector<8x32xf32>,
    %219 = arith.truncf %217 : vector<8x32xf32> to vector<8x32xbf16>
    %c40 = arith.constant 40 : index
    %c0_129 = arith.constant 0 : index
    %220 = vector.load %arg11[%c40, %c0_129] : memref<64x32xf32, #tpu.memory_space<vmem>>, vector<8x32xf32>
    %cst_130 = arith.constant dense<0.000000e+00> : vector<8x32xf32>
    %221 = tpu.matmul %219, %35, %cst_130 {dimension_numbers = #tpu.dot_dimension_numbers<[1], [0], [0], [1], [0, 0, 1, 1], [], []>} : vector<8x32xbf16>, vector<32x32xbf16>, vector<8x32xf32> -> vector<8x32xf32>
    %222 = arith.addf %220, %221 : vector<8x32xf32>
    %c40_131 = arith.constant 40 : index
    %c0_132 = arith.constant 0 : index
    %223 = vector.load %arg12[%c40_131, %c0_132] : memref<64x32xf32, #tpu.memory_space<vmem>>, vector<8x32xf32>
    %cst_133 = arith.constant dense<0.000000e+00> : vector<8x32xf32>
    %224 = tpu.matmul %219, %37, %cst_133 {dimension_numbers = #tpu.dot_dimension_numbers<[1], [0], [0], [1], [0, 0, 1, 1], [], []>} : vector<8x32xbf16>, vector<32x32xbf16>, vector<8x32xf32> -> vector<8x32xf32>
    %225 = arith.addf %223, %224 : vector<8x32xf32>
    %c40_134 = arith.constant 40 : index
    %c0_135 = arith.constant 0 : index
    %226 = vector.load %arg13[%c40_134, %c0_135] : memref<64x32xf32, #tpu.memory_space<vmem>>, vector<8x32xf32>
    %cst_136 = arith.constant dense<0.000000e+00> : vector<8x32xf32>
    %227 = tpu.matmul %219, %39, %cst_136 {dimension_numbers = #tpu.dot_dimension_numbers<[1], [0], [0], [1], [0, 0, 1, 1], [], []>} : vector<8x32xbf16>, vector<32x32xbf16>, vector<8x32xf32> -> vector<8x32xf32>
    %228 = arith.addf %226, %227 : vector<8x32xf32>
    %c40_137 = arith.constant 40 : index
    %c0_138 = arith.constant 0 : index
    %229 = vector.load %arg14[%c40_137, %c0_138] : memref<64x32xf32, #tpu.memory_space<vmem>>, vector<8x32xf32>
    %cst_139 = arith.constant dense<0.000000e+00> : vector<8x32xf32>
    %230 = tpu.matmul %219, %41, %cst_139 {dimension_numbers = #tpu.dot_dimension_numbers<[1], [0], [0], [1], [0, 0, 1, 1], [], []>} : vector<8x32xbf16>, vector<32x32xbf16>, vector<8x32xf32> -> vector<8x32xf32>
    %231 = arith.addf %229, %230 : vector<8x32xf32>
    %232 = arith.negf %222 : vector<8x32xf32>
    %233 = math.exp %232 : vector<8x32xf32>
    %cst_140 = arith.constant 1.000000e+00 : f32
    %234 = vector.broadcast %cst_140 : f32 to vector<8x32xf32>
    %235 = arith.addf %234, %233 : vector<8x32xf32>
    %236 = arith.divf %234, %235 : vector<8x32xf32>
    %237 = arith.negf %225 : vector<8x32xf32>
    %238 = math.exp %237 : vector<8x32xf32>
    %cst_141 = arith.constant 1.000000e+00 : f32
    %239 = vector.broadcast %cst_141 : f32 to vector<8x32xf32>
    %240 = arith.addf %239, %238 : vector<8x32xf32>
    %241 = arith.divf %239, %240 : vector<8x32xf32>
    %242 = math.tanh %228 : vector<8x32xf32>
    %243 = arith.negf %231 : vector<8x32xf32>
    %244 = math.exp %243 : vector<8x32xf32>
    %cst_142 = arith.constant 1.000000e+00 : f32
    %245 = vector.broadcast %cst_142 : f32 to vector<8x32xf32>
    %246 = arith.addf %245, %244 : vector<8x32xf32>
    %247 = arith.divf %245, %246 : vector<8x32xf32>
    %248 = arith.mulf %241, %215 : vector<8x32xf32>
    %249 = arith.mulf %236, %242 : vector<8x32xf32>
    %250 = arith.addf %248, %249 : vector<8x32xf32>
    %251 = math.tanh %250 : vector<8x32xf32>
    %252 = arith.mulf %247, %251 : vector<8x32xf32>
    %c40_143 = arith.constant 40 : index
    %c0_144 = arith.constant 0 : index
    %253 = vector.load %arg15[%c40_143, %c0_144] : memref<64x32xf32, #tpu.memory_space<vmem>>, vector<8x32xf32>
    tpu.vector_store %arg15[%c40_143, %c0_144], %252 {strides = array<i32>} : memref<64x32xf32, #tpu.memory_space<vmem>>, vector<8x32xf32>,
    %254 = arith.truncf %252 : vector<8x32xf32> to vector<8x32xbf16>
    %c48 = arith.constant 48 : index
    %c0_145 = arith.constant 0 : index
    %255 = vector.load %arg11[%c48, %c0_145] : memref<64x32xf32, #tpu.memory_space<vmem>>, vector<8x32xf32>
    %cst_146 = arith.constant dense<0.000000e+00> : vector<8x32xf32>
    %256 = tpu.matmul %254, %35, %cst_146 {dimension_numbers = #tpu.dot_dimension_numbers<[1], [0], [0], [1], [0, 0, 1, 1], [], []>} : vector<8x32xbf16>, vector<32x32xbf16>, vector<8x32xf32> -> vector<8x32xf32>
    %257 = arith.addf %255, %256 : vector<8x32xf32>
    %c48_147 = arith.constant 48 : index
    %c0_148 = arith.constant 0 : index
    %258 = vector.load %arg12[%c48_147, %c0_148] : memref<64x32xf32, #tpu.memory_space<vmem>>, vector<8x32xf32>
    %cst_149 = arith.constant dense<0.000000e+00> : vector<8x32xf32>
    %259 = tpu.matmul %254, %37, %cst_149 {dimension_numbers = #tpu.dot_dimension_numbers<[1], [0], [0], [1], [0, 0, 1, 1], [], []>} : vector<8x32xbf16>, vector<32x32xbf16>, vector<8x32xf32> -> vector<8x32xf32>
    %260 = arith.addf %258, %259 : vector<8x32xf32>
    %c48_150 = arith.constant 48 : index
    %c0_151 = arith.constant 0 : index
    %261 = vector.load %arg13[%c48_150, %c0_151] : memref<64x32xf32, #tpu.memory_space<vmem>>, vector<8x32xf32>
    %cst_152 = arith.constant dense<0.000000e+00> : vector<8x32xf32>
    %262 = tpu.matmul %254, %39, %cst_152 {dimension_numbers = #tpu.dot_dimension_numbers<[1], [0], [0], [1], [0, 0, 1, 1], [], []>} : vector<8x32xbf16>, vector<32x32xbf16>, vector<8x32xf32> -> vector<8x32xf32>
    %263 = arith.addf %261, %262 : vector<8x32xf32>
    %c48_153 = arith.constant 48 : index
    %c0_154 = arith.constant 0 : index
    %264 = vector.load %arg14[%c48_153, %c0_154] : memref<64x32xf32, #tpu.memory_space<vmem>>, vector<8x32xf32>
    %cst_155 = arith.constant dense<0.000000e+00> : vector<8x32xf32>
    %265 = tpu.matmul %254, %41, %cst_155 {dimension_numbers = #tpu.dot_dimension_numbers<[1], [0], [0], [1], [0, 0, 1, 1], [], []>} : vector<8x32xbf16>, vector<32x32xbf16>, vector<8x32xf32> -> vector<8x32xf32>
    %266 = arith.addf %264, %265 : vector<8x32xf32>
    %267 = arith.negf %257 : vector<8x32xf32>
    %268 = math.exp %267 : vector<8x32xf32>
    %cst_156 = arith.constant 1.000000e+00 : f32
    %269 = vector.broadcast %cst_156 : f32 to vector<8x32xf32>
    %270 = arith.addf %269, %268 : vector<8x32xf32>
    %271 = arith.divf %269, %270 : vector<8x32xf32>
    %272 = arith.negf %260 : vector<8x32xf32>
    %273 = math.exp %272 : vector<8x32xf32>
    %cst_157 = arith.constant 1.000000e+00 : f32
    %274 = vector.broadcast %cst_157 : f32 to vector<8x32xf32>
    %275 = arith.addf %274, %273 : vector<8x32xf32>
    %276 = arith.divf %274, %275 : vector<8x32xf32>
    %277 = math.tanh %263 : vector<8x32xf32>
    %278 = arith.negf %266 : vector<8x32xf32>
    %279 = math.exp %278 : vector<8x32xf32>
    %cst_158 = arith.constant 1.000000e+00 : f32
    %280 = vector.broadcast %cst_158 : f32 to vector<8x32xf32>
    %281 = arith.addf %280, %279 : vector<8x32xf32>
    %282 = arith.divf %280, %281 : vector<8x32xf32>
    %283 = arith.mulf %276, %250 : vector<8x32xf32>
    %284 = arith.mulf %271, %277 : vector<8x32xf32>
    %285 = arith.addf %283, %284 : vector<8x32xf32>
    %286 = math.tanh %285 : vector<8x32xf32>
    %287 = arith.mulf %282, %286 : vector<8x32xf32>
    %c48_159 = arith.constant 48 : index
    %c0_160 = arith.constant 0 : index
    %288 = vector.load %arg15[%c48_159, %c0_160] : memref<64x32xf32, #tpu.memory_space<vmem>>, vector<8x32xf32>
    tpu.vector_store %arg15[%c48_159, %c0_160], %287 {strides = array<i32>} : memref<64x32xf32, #tpu.memory_space<vmem>>, vector<8x32xf32>,
    %289 = arith.truncf %287 : vector<8x32xf32> to vector<8x32xbf16>
    %c56 = arith.constant 56 : index
    %c0_161 = arith.constant 0 : index
    %290 = vector.load %arg11[%c56, %c0_161] : memref<64x32xf32, #tpu.memory_space<vmem>>, vector<8x32xf32>
    %cst_162 = arith.constant dense<0.000000e+00> : vector<8x32xf32>
    %291 = tpu.matmul %289, %35, %cst_162 {dimension_numbers = #tpu.dot_dimension_numbers<[1], [0], [0], [1], [0, 0, 1, 1], [], []>} : vector<8x32xbf16>, vector<32x32xbf16>, vector<8x32xf32> -> vector<8x32xf32>
    %292 = arith.addf %290, %291 : vector<8x32xf32>
    %c56_163 = arith.constant 56 : index
    %c0_164 = arith.constant 0 : index
    %293 = vector.load %arg12[%c56_163, %c0_164] : memref<64x32xf32, #tpu.memory_space<vmem>>, vector<8x32xf32>
    %cst_165 = arith.constant dense<0.000000e+00> : vector<8x32xf32>
    %294 = tpu.matmul %289, %37, %cst_165 {dimension_numbers = #tpu.dot_dimension_numbers<[1], [0], [0], [1], [0, 0, 1, 1], [], []>} : vector<8x32xbf16>, vector<32x32xbf16>, vector<8x32xf32> -> vector<8x32xf32>
    %295 = arith.addf %293, %294 : vector<8x32xf32>
    %c56_166 = arith.constant 56 : index
    %c0_167 = arith.constant 0 : index
    %296 = vector.load %arg13[%c56_166, %c0_167] : memref<64x32xf32, #tpu.memory_space<vmem>>, vector<8x32xf32>
    %cst_168 = arith.constant dense<0.000000e+00> : vector<8x32xf32>
    %297 = tpu.matmul %289, %39, %cst_168 {dimension_numbers = #tpu.dot_dimension_numbers<[1], [0], [0], [1], [0, 0, 1, 1], [], []>} : vector<8x32xbf16>, vector<32x32xbf16>, vector<8x32xf32> -> vector<8x32xf32>
    %298 = arith.addf %296, %297 : vector<8x32xf32>
    %c56_169 = arith.constant 56 : index
    %c0_170 = arith.constant 0 : index
    %299 = vector.load %arg14[%c56_169, %c0_170] : memref<64x32xf32, #tpu.memory_space<vmem>>, vector<8x32xf32>
    %cst_171 = arith.constant dense<0.000000e+00> : vector<8x32xf32>
    %300 = tpu.matmul %289, %41, %cst_171 {dimension_numbers = #tpu.dot_dimension_numbers<[1], [0], [0], [1], [0, 0, 1, 1], [], []>} : vector<8x32xbf16>, vector<32x32xbf16>, vector<8x32xf32> -> vector<8x32xf32>
    %301 = arith.addf %299, %300 : vector<8x32xf32>
    %302 = arith.negf %292 : vector<8x32xf32>
    %303 = math.exp %302 : vector<8x32xf32>
    %cst_172 = arith.constant 1.000000e+00 : f32
    %304 = vector.broadcast %cst_172 : f32 to vector<8x32xf32>
    %305 = arith.addf %304, %303 : vector<8x32xf32>
    %306 = arith.divf %304, %305 : vector<8x32xf32>
    %307 = arith.negf %295 : vector<8x32xf32>
    %308 = math.exp %307 : vector<8x32xf32>
    %cst_173 = arith.constant 1.000000e+00 : f32
    %309 = vector.broadcast %cst_173 : f32 to vector<8x32xf32>
    %310 = arith.addf %309, %308 : vector<8x32xf32>
    %311 = arith.divf %309, %310 : vector<8x32xf32>
    %312 = math.tanh %298 : vector<8x32xf32>
    %313 = arith.negf %301 : vector<8x32xf32>
    %314 = math.exp %313 : vector<8x32xf32>
    %cst_174 = arith.constant 1.000000e+00 : f32
    %315 = vector.broadcast %cst_174 : f32 to vector<8x32xf32>
    %316 = arith.addf %315, %314 : vector<8x32xf32>
    %317 = arith.divf %315, %316 : vector<8x32xf32>
    %318 = arith.mulf %311, %285 : vector<8x32xf32>
    %319 = arith.mulf %306, %312 : vector<8x32xf32>
    %320 = arith.addf %318, %319 : vector<8x32xf32>
    %321 = math.tanh %320 : vector<8x32xf32>
    %322 = arith.mulf %317, %321 : vector<8x32xf32>
    %c56_175 = arith.constant 56 : index
    %c0_176 = arith.constant 0 : index
    %323 = vector.load %arg15[%c56_175, %c0_176] : memref<64x32xf32, #tpu.memory_space<vmem>>, vector<8x32xf32>
    tpu.vector_store %arg15[%c56_175, %c0_176], %322 {strides = array<i32>} : memref<64x32xf32, #tpu.memory_space<vmem>>, vector<8x32xf32>,
    %c0_177 = arith.constant 0 : index
    %c0_178 = arith.constant 0 : index
    %324 = vector.load %arg15[%c0_177, %c0_178] : memref<64x32xf32, #tpu.memory_space<vmem>>, vector<64x32xf32>
    %325 = arith.truncf %324 : vector<64x32xf32> to vector<64x32xbf16>
    %c0_179 = arith.constant 0 : index
    %c0_180 = arith.constant 0 : index
    %c0_181 = arith.constant 0 : index
    %326 = vector.load %arg5[%c0_179, %c0_180, %c0_181] : memref<4x32x32xbf16, #tpu.memory_space<vmem>>, vector<1x32x32xbf16>
    %327 = vector.shape_cast %326 : vector<1x32x32xbf16> to vector<32x32xbf16>
    %cst_182 = arith.constant dense<0.000000e+00> : vector<64x32xf32>
    %328 = tpu.matmul %325, %327, %cst_182 {dimension_numbers = #tpu.dot_dimension_numbers<[1], [0], [0], [1], [0, 0, 1, 1], [], []>} : vector<64x32xbf16>, vector<32x32xbf16>, vector<64x32xf32> -> vector<64x32xf32>
    %c0_183 = arith.constant 0 : index
    %c0_184 = arith.constant 0 : index
    %c0_185 = arith.constant 0 : index
    %329 = vector.load %arg7[%c0_183, %c0_184, %c0_185] : memref<4x1x32xf32, #tpu.memory_space<vmem>>, vector<1x1x32xf32>
    %330 = vector.shape_cast %329 : vector<1x1x32xf32> to vector<1x32xf32>
    %331 = vector.broadcast %330 : vector<1x32xf32> to vector<64x32xf32>
    %332 = arith.addf %328, %331 : vector<64x32xf32>
    %c0_186 = arith.constant 0 : index
    %c0_187 = arith.constant 0 : index
    %333 = vector.load %arg11[%c0_186, %c0_187] : memref<64x32xf32, #tpu.memory_space<vmem>>, vector<64x32xf32>
    tpu.vector_store %arg11[%c0_186, %c0_187], %332 {strides = array<i32>} : memref<64x32xf32, #tpu.memory_space<vmem>>, vector<64x32xf32>,
    %c1_188 = arith.constant 1 : index
    %c0_189 = arith.constant 0 : index
    %c0_190 = arith.constant 0 : index
    %334 = vector.load %arg5[%c1_188, %c0_189, %c0_190] : memref<4x32x32xbf16, #tpu.memory_space<vmem>>, vector<1x32x32xbf16>
    %335 = vector.shape_cast %334 : vector<1x32x32xbf16> to vector<32x32xbf16>
    %cst_191 = arith.constant dense<0.000000e+00> : vector<64x32xf32>
    %336 = tpu.matmul %325, %335, %cst_191 {dimension_numbers = #tpu.dot_dimension_numbers<[1], [0], [0], [1], [0, 0, 1, 1], [], []>} : vector<64x32xbf16>, vector<32x32xbf16>, vector<64x32xf32> -> vector<64x32xf32>
    %c1_192 = arith.constant 1 : index
    %c0_193 = arith.constant 0 : index
    %c0_194 = arith.constant 0 : index
    %337 = vector.load %arg7[%c1_192, %c0_193, %c0_194] : memref<4x1x32xf32, #tpu.memory_space<vmem>>, vector<1x1x32xf32>
    %338 = vector.shape_cast %337 : vector<1x1x32xf32> to vector<1x32xf32>
    %339 = vector.broadcast %338 : vector<1x32xf32> to vector<64x32xf32>
    %340 = arith.addf %336, %339 : vector<64x32xf32>
    %c0_195 = arith.constant 0 : index
    %c0_196 = arith.constant 0 : index
    %341 = vector.load %arg12[%c0_195, %c0_196] : memref<64x32xf32, #tpu.memory_space<vmem>>, vector<64x32xf32>
    tpu.vector_store %arg12[%c0_195, %c0_196], %340 {strides = array<i32>} : memref<64x32xf32, #tpu.memory_space<vmem>>, vector<64x32xf32>,
    %c2_197 = arith.constant 2 : index
    %c0_198 = arith.constant 0 : index
    %c0_199 = arith.constant 0 : index
    %342 = vector.load %arg5[%c2_197, %c0_198, %c0_199] : memref<4x32x32xbf16, #tpu.memory_space<vmem>>, vector<1x32x32xbf16>
    %343 = vector.shape_cast %342 : vector<1x32x32xbf16> to vector<32x32xbf16>
    %cst_200 = arith.constant dense<0.000000e+00> : vector<64x32xf32>
    %344 = tpu.matmul %325, %343, %cst_200 {dimension_numbers = #tpu.dot_dimension_numbers<[1], [0], [0], [1], [0, 0, 1, 1], [], []>} : vector<64x32xbf16>, vector<32x32xbf16>, vector<64x32xf32> -> vector<64x32xf32>
    %c2_201 = arith.constant 2 : index
    %c0_202 = arith.constant 0 : index
    %c0_203 = arith.constant 0 : index
    %345 = vector.load %arg7[%c2_201, %c0_202, %c0_203] : memref<4x1x32xf32, #tpu.memory_space<vmem>>, vector<1x1x32xf32>
    %346 = vector.shape_cast %345 : vector<1x1x32xf32> to vector<1x32xf32>
    %347 = vector.broadcast %346 : vector<1x32xf32> to vector<64x32xf32>
    %348 = arith.addf %344, %347 : vector<64x32xf32>
    %c0_204 = arith.constant 0 : index
    %c0_205 = arith.constant 0 : index
    %349 = vector.load %arg13[%c0_204, %c0_205] : memref<64x32xf32, #tpu.memory_space<vmem>>, vector<64x32xf32>
    tpu.vector_store %arg13[%c0_204, %c0_205], %348 {strides = array<i32>} : memref<64x32xf32, #tpu.memory_space<vmem>>, vector<64x32xf32>,
    %c3_206 = arith.constant 3 : index
    %c0_207 = arith.constant 0 : index
    %c0_208 = arith.constant 0 : index
    %350 = vector.load %arg5[%c3_206, %c0_207, %c0_208] : memref<4x32x32xbf16, #tpu.memory_space<vmem>>, vector<1x32x32xbf16>
    %351 = vector.shape_cast %350 : vector<1x32x32xbf16> to vector<32x32xbf16>
    %cst_209 = arith.constant dense<0.000000e+00> : vector<64x32xf32>
    %352 = tpu.matmul %325, %351, %cst_209 {dimension_numbers = #tpu.dot_dimension_numbers<[1], [0], [0], [1], [0, 0, 1, 1], [], []>} : vector<64x32xbf16>, vector<32x32xbf16>, vector<64x32xf32> -> vector<64x32xf32>
    %c3_210 = arith.constant 3 : index
    %c0_211 = arith.constant 0 : index
    %c0_212 = arith.constant 0 : index
    %353 = vector.load %arg7[%c3_210, %c0_211, %c0_212] : memref<4x1x32xf32, #tpu.memory_space<vmem>>, vector<1x1x32xf32>
    %354 = vector.shape_cast %353 : vector<1x1x32xf32> to vector<1x32xf32>
    %355 = vector.broadcast %354 : vector<1x32xf32> to vector<64x32xf32>
    %356 = arith.addf %352, %355 : vector<64x32xf32>
    %c0_213 = arith.constant 0 : index
    %c0_214 = arith.constant 0 : index
    %357 = vector.load %arg14[%c0_213, %c0_214] : memref<64x32xf32, #tpu.memory_space<vmem>>, vector<64x32xf32>
    tpu.vector_store %arg14[%c0_213, %c0_214], %356 {strides = array<i32>} : memref<64x32xf32, #tpu.memory_space<vmem>>, vector<64x32xf32>,
    %c0_215 = arith.constant 0 : index
    %c0_216 = arith.constant 0 : index
    %c0_217 = arith.constant 0 : index
    %358 = vector.load %arg6[%c0_215, %c0_216, %c0_217] : memref<4x32x32xbf16, #tpu.memory_space<vmem>>, vector<1x32x32xbf16>
    %359 = vector.shape_cast %358 : vector<1x32x32xbf16> to vector<32x32xbf16>
    %c1_218 = arith.constant 1 : index
    %c0_219 = arith.constant 0 : index
    %c0_220 = arith.constant 0 : index
    %360 = vector.load %arg6[%c1_218, %c0_219, %c0_220] : memref<4x32x32xbf16, #tpu.memory_space<vmem>>, vector<1x32x32xbf16>
    %361 = vector.shape_cast %360 : vector<1x32x32xbf16> to vector<32x32xbf16>
    %c2_221 = arith.constant 2 : index
    %c0_222 = arith.constant 0 : index
    %c0_223 = arith.constant 0 : index
    %362 = vector.load %arg6[%c2_221, %c0_222, %c0_223] : memref<4x32x32xbf16, #tpu.memory_space<vmem>>, vector<1x32x32xbf16>
    %363 = vector.shape_cast %362 : vector<1x32x32xbf16> to vector<32x32xbf16>
    %c3_224 = arith.constant 3 : index
    %c0_225 = arith.constant 0 : index
    %c0_226 = arith.constant 0 : index
    %364 = vector.load %arg6[%c3_224, %c0_225, %c0_226] : memref<4x32x32xbf16, #tpu.memory_space<vmem>>, vector<1x32x32xbf16>
    %365 = vector.shape_cast %364 : vector<1x32x32xbf16> to vector<32x32xbf16>
    %cst_227 = arith.constant 0.000000e+00 : f32
    %366 = vector.broadcast %cst_227 : f32 to vector<8x32xf32>
    %cst_228 = arith.constant 0.000000e+00 : f32
    %367 = vector.broadcast %cst_228 : f32 to vector<8x32xf32>
    %368 = arith.truncf %366 : vector<8x32xf32> to vector<8x32xbf16>
    %c0_229 = arith.constant 0 : index
    %c0_230 = arith.constant 0 : index
    %369 = vector.load %arg11[%c0_229, %c0_230] : memref<64x32xf32, #tpu.memory_space<vmem>>, vector<8x32xf32>
    %cst_231 = arith.constant dense<0.000000e+00> : vector<8x32xf32>
    %370 = tpu.matmul %368, %359, %cst_231 {dimension_numbers = #tpu.dot_dimension_numbers<[1], [0], [0], [1], [0, 0, 1, 1], [], []>} : vector<8x32xbf16>, vector<32x32xbf16>, vector<8x32xf32> -> vector<8x32xf32>
    %371 = arith.addf %369, %370 : vector<8x32xf32>
    %c0_232 = arith.constant 0 : index
    %c0_233 = arith.constant 0 : index
    %372 = vector.load %arg12[%c0_232, %c0_233] : memref<64x32xf32, #tpu.memory_space<vmem>>, vector<8x32xf32>
    %cst_234 = arith.constant dense<0.000000e+00> : vector<8x32xf32>
    %373 = tpu.matmul %368, %361, %cst_234 {dimension_numbers = #tpu.dot_dimension_numbers<[1], [0], [0], [1], [0, 0, 1, 1], [], []>} : vector<8x32xbf16>, vector<32x32xbf16>, vector<8x32xf32> -> vector<8x32xf32>
    %374 = arith.addf %372, %373 : vector<8x32xf32>
    %c0_235 = arith.constant 0 : index
    %c0_236 = arith.constant 0 : index
    %375 = vector.load %arg13[%c0_235, %c0_236] : memref<64x32xf32, #tpu.memory_space<vmem>>, vector<8x32xf32>
    %cst_237 = arith.constant dense<0.000000e+00> : vector<8x32xf32>
    %376 = tpu.matmul %368, %363, %cst_237 {dimension_numbers = #tpu.dot_dimension_numbers<[1], [0], [0], [1], [0, 0, 1, 1], [], []>} : vector<8x32xbf16>, vector<32x32xbf16>, vector<8x32xf32> -> vector<8x32xf32>
    %377 = arith.addf %375, %376 : vector<8x32xf32>
    %c0_238 = arith.constant 0 : index
    %c0_239 = arith.constant 0 : index
    %378 = vector.load %arg14[%c0_238, %c0_239] : memref<64x32xf32, #tpu.memory_space<vmem>>, vector<8x32xf32>
    %cst_240 = arith.constant dense<0.000000e+00> : vector<8x32xf32>
    %379 = tpu.matmul %368, %365, %cst_240 {dimension_numbers = #tpu.dot_dimension_numbers<[1], [0], [0], [1], [0, 0, 1, 1], [], []>} : vector<8x32xbf16>, vector<32x32xbf16>, vector<8x32xf32> -> vector<8x32xf32>
    %380 = arith.addf %378, %379 : vector<8x32xf32>
    %381 = arith.negf %371 : vector<8x32xf32>
    %382 = math.exp %381 : vector<8x32xf32>
    %cst_241 = arith.constant 1.000000e+00 : f32
    %383 = vector.broadcast %cst_241 : f32 to vector<8x32xf32>
    %384 = arith.addf %383, %382 : vector<8x32xf32>
    %385 = arith.divf %383, %384 : vector<8x32xf32>
    %386 = arith.negf %374 : vector<8x32xf32>
    %387 = math.exp %386 : vector<8x32xf32>
    %cst_242 = arith.constant 1.000000e+00 : f32
    %388 = vector.broadcast %cst_242 : f32 to vector<8x32xf32>
    %389 = arith.addf %388, %387 : vector<8x32xf32>
    %390 = arith.divf %388, %389 : vector<8x32xf32>
    %391 = math.tanh %377 : vector<8x32xf32>
    %392 = arith.negf %380 : vector<8x32xf32>
    %393 = math.exp %392 : vector<8x32xf32>
    %cst_243 = arith.constant 1.000000e+00 : f32
    %394 = vector.broadcast %cst_243 : f32 to vector<8x32xf32>
    %395 = arith.addf %394, %393 : vector<8x32xf32>
    %396 = arith.divf %394, %395 : vector<8x32xf32>
    %397 = arith.mulf %390, %367 : vector<8x32xf32>
    %398 = arith.mulf %385, %391 : vector<8x32xf32>
    %399 = arith.addf %397, %398 : vector<8x32xf32>
    %400 = math.tanh %399 : vector<8x32xf32>
    %401 = arith.mulf %396, %400 : vector<8x32xf32>
    %402 = arith.truncf %401 : vector<8x32xf32> to vector<8x32xbf16>
    %c8_244 = arith.constant 8 : index
    %c0_245 = arith.constant 0 : index
    %403 = vector.load %arg11[%c8_244, %c0_245] : memref<64x32xf32, #tpu.memory_space<vmem>>, vector<8x32xf32>
    %cst_246 = arith.constant dense<0.000000e+00> : vector<8x32xf32>
    %404 = tpu.matmul %402, %359, %cst_246 {dimension_numbers = #tpu.dot_dimension_numbers<[1], [0], [0], [1], [0, 0, 1, 1], [], []>} : vector<8x32xbf16>, vector<32x32xbf16>, vector<8x32xf32> -> vector<8x32xf32>
    %405 = arith.addf %403, %404 : vector<8x32xf32>
    %c8_247 = arith.constant 8 : index
    %c0_248 = arith.constant 0 : index
    %406 = vector.load %arg12[%c8_247, %c0_248] : memref<64x32xf32, #tpu.memory_space<vmem>>, vector<8x32xf32>
    %cst_249 = arith.constant dense<0.000000e+00> : vector<8x32xf32>
    %407 = tpu.matmul %402, %361, %cst_249 {dimension_numbers = #tpu.dot_dimension_numbers<[1], [0], [0], [1], [0, 0, 1, 1], [], []>} : vector<8x32xbf16>, vector<32x32xbf16>, vector<8x32xf32> -> vector<8x32xf32>
    %408 = arith.addf %406, %407 : vector<8x32xf32>
    %c8_250 = arith.constant 8 : index
    %c0_251 = arith.constant 0 : index
    %409 = vector.load %arg13[%c8_250, %c0_251] : memref<64x32xf32, #tpu.memory_space<vmem>>, vector<8x32xf32>
    %cst_252 = arith.constant dense<0.000000e+00> : vector<8x32xf32>
    %410 = tpu.matmul %402, %363, %cst_252 {dimension_numbers = #tpu.dot_dimension_numbers<[1], [0], [0], [1], [0, 0, 1, 1], [], []>} : vector<8x32xbf16>, vector<32x32xbf16>, vector<8x32xf32> -> vector<8x32xf32>
    %411 = arith.addf %409, %410 : vector<8x32xf32>
    %c8_253 = arith.constant 8 : index
    %c0_254 = arith.constant 0 : index
    %412 = vector.load %arg14[%c8_253, %c0_254] : memref<64x32xf32, #tpu.memory_space<vmem>>, vector<8x32xf32>
    %cst_255 = arith.constant dense<0.000000e+00> : vector<8x32xf32>
    %413 = tpu.matmul %402, %365, %cst_255 {dimension_numbers = #tpu.dot_dimension_numbers<[1], [0], [0], [1], [0, 0, 1, 1], [], []>} : vector<8x32xbf16>, vector<32x32xbf16>, vector<8x32xf32> -> vector<8x32xf32>
    %414 = arith.addf %412, %413 : vector<8x32xf32>
    %415 = arith.negf %405 : vector<8x32xf32>
    %416 = math.exp %415 : vector<8x32xf32>
    %cst_256 = arith.constant 1.000000e+00 : f32
    %417 = vector.broadcast %cst_256 : f32 to vector<8x32xf32>
    %418 = arith.addf %417, %416 : vector<8x32xf32>
    %419 = arith.divf %417, %418 : vector<8x32xf32>
    %420 = arith.negf %408 : vector<8x32xf32>
    %421 = math.exp %420 : vector<8x32xf32>
    %cst_257 = arith.constant 1.000000e+00 : f32
    %422 = vector.broadcast %cst_257 : f32 to vector<8x32xf32>
    %423 = arith.addf %422, %421 : vector<8x32xf32>
    %424 = arith.divf %422, %423 : vector<8x32xf32>
    %425 = math.tanh %411 : vector<8x32xf32>
    %426 = arith.negf %414 : vector<8x32xf32>
    %427 = math.exp %426 : vector<8x32xf32>
    %cst_258 = arith.constant 1.000000e+00 : f32
    %428 = vector.broadcast %cst_258 : f32 to vector<8x32xf32>
    %429 = arith.addf %428, %427 : vector<8x32xf32>
    %430 = arith.divf %428, %429 : vector<8x32xf32>
    %431 = arith.mulf %424, %399 : vector<8x32xf32>
    %432 = arith.mulf %419, %425 : vector<8x32xf32>
    %433 = arith.addf %431, %432 : vector<8x32xf32>
    %434 = math.tanh %433 : vector<8x32xf32>
    %435 = arith.mulf %430, %434 : vector<8x32xf32>
    %436 = arith.truncf %435 : vector<8x32xf32> to vector<8x32xbf16>
    %c16_259 = arith.constant 16 : index
    %c0_260 = arith.constant 0 : index
    %437 = vector.load %arg11[%c16_259, %c0_260] : memref<64x32xf32, #tpu.memory_space<vmem>>, vector<8x32xf32>
    %cst_261 = arith.constant dense<0.000000e+00> : vector<8x32xf32>
    %438 = tpu.matmul %436, %359, %cst_261 {dimension_numbers = #tpu.dot_dimension_numbers<[1], [0], [0], [1], [0, 0, 1, 1], [], []>} : vector<8x32xbf16>, vector<32x32xbf16>, vector<8x32xf32> -> vector<8x32xf32>
    %439 = arith.addf %437, %438 : vector<8x32xf32>
    %c16_262 = arith.constant 16 : index
    %c0_263 = arith.constant 0 : index
    %440 = vector.load %arg12[%c16_262, %c0_263] : memref<64x32xf32, #tpu.memory_space<vmem>>, vector<8x32xf32>
    %cst_264 = arith.constant dense<0.000000e+00> : vector<8x32xf32>
    %441 = tpu.matmul %436, %361, %cst_264 {dimension_numbers = #tpu.dot_dimension_numbers<[1], [0], [0], [1], [0, 0, 1, 1], [], []>} : vector<8x32xbf16>, vector<32x32xbf16>, vector<8x32xf32> -> vector<8x32xf32>
    %442 = arith.addf %440, %441 : vector<8x32xf32>
    %c16_265 = arith.constant 16 : index
    %c0_266 = arith.constant 0 : index
    %443 = vector.load %arg13[%c16_265, %c0_266] : memref<64x32xf32, #tpu.memory_space<vmem>>, vector<8x32xf32>
    %cst_267 = arith.constant dense<0.000000e+00> : vector<8x32xf32>
    %444 = tpu.matmul %436, %363, %cst_267 {dimension_numbers = #tpu.dot_dimension_numbers<[1], [0], [0], [1], [0, 0, 1, 1], [], []>} : vector<8x32xbf16>, vector<32x32xbf16>, vector<8x32xf32> -> vector<8x32xf32>
    %445 = arith.addf %443, %444 : vector<8x32xf32>
    %c16_268 = arith.constant 16 : index
    %c0_269 = arith.constant 0 : index
    %446 = vector.load %arg14[%c16_268, %c0_269] : memref<64x32xf32, #tpu.memory_space<vmem>>, vector<8x32xf32>
    %cst_270 = arith.constant dense<0.000000e+00> : vector<8x32xf32>
    %447 = tpu.matmul %436, %365, %cst_270 {dimension_numbers = #tpu.dot_dimension_numbers<[1], [0], [0], [1], [0, 0, 1, 1], [], []>} : vector<8x32xbf16>, vector<32x32xbf16>, vector<8x32xf32> -> vector<8x32xf32>
    %448 = arith.addf %446, %447 : vector<8x32xf32>
    %449 = arith.negf %439 : vector<8x32xf32>
    %450 = math.exp %449 : vector<8x32xf32>
    %cst_271 = arith.constant 1.000000e+00 : f32
    %451 = vector.broadcast %cst_271 : f32 to vector<8x32xf32>
    %452 = arith.addf %451, %450 : vector<8x32xf32>
    %453 = arith.divf %451, %452 : vector<8x32xf32>
    %454 = arith.negf %442 : vector<8x32xf32>
    %455 = math.exp %454 : vector<8x32xf32>
    %cst_272 = arith.constant 1.000000e+00 : f32
    %456 = vector.broadcast %cst_272 : f32 to vector<8x32xf32>
    %457 = arith.addf %456, %455 : vector<8x32xf32>
    %458 = arith.divf %456, %457 : vector<8x32xf32>
    %459 = math.tanh %445 : vector<8x32xf32>
    %460 = arith.negf %448 : vector<8x32xf32>
    %461 = math.exp %460 : vector<8x32xf32>
    %cst_273 = arith.constant 1.000000e+00 : f32
    %462 = vector.broadcast %cst_273 : f32 to vector<8x32xf32>
    %463 = arith.addf %462, %461 : vector<8x32xf32>
    %464 = arith.divf %462, %463 : vector<8x32xf32>
    %465 = arith.mulf %458, %433 : vector<8x32xf32>
    %466 = arith.mulf %453, %459 : vector<8x32xf32>
    %467 = arith.addf %465, %466 : vector<8x32xf32>
    %468 = math.tanh %467 : vector<8x32xf32>
    %469 = arith.mulf %464, %468 : vector<8x32xf32>
    %470 = arith.truncf %469 : vector<8x32xf32> to vector<8x32xbf16>
    %c24_274 = arith.constant 24 : index
    %c0_275 = arith.constant 0 : index
    %471 = vector.load %arg11[%c24_274, %c0_275] : memref<64x32xf32, #tpu.memory_space<vmem>>, vector<8x32xf32>
    %cst_276 = arith.constant dense<0.000000e+00> : vector<8x32xf32>
    %472 = tpu.matmul %470, %359, %cst_276 {dimension_numbers = #tpu.dot_dimension_numbers<[1], [0], [0], [1], [0, 0, 1, 1], [], []>} : vector<8x32xbf16>, vector<32x32xbf16>, vector<8x32xf32> -> vector<8x32xf32>
    %473 = arith.addf %471, %472 : vector<8x32xf32>
    %c24_277 = arith.constant 24 : index
    %c0_278 = arith.constant 0 : index
    %474 = vector.load %arg12[%c24_277, %c0_278] : memref<64x32xf32, #tpu.memory_space<vmem>>, vector<8x32xf32>
    %cst_279 = arith.constant dense<0.000000e+00> : vector<8x32xf32>
    %475 = tpu.matmul %470, %361, %cst_279 {dimension_numbers = #tpu.dot_dimension_numbers<[1], [0], [0], [1], [0, 0, 1, 1], [], []>} : vector<8x32xbf16>, vector<32x32xbf16>, vector<8x32xf32> -> vector<8x32xf32>
    %476 = arith.addf %474, %475 : vector<8x32xf32>
    %c24_280 = arith.constant 24 : index
    %c0_281 = arith.constant 0 : index
    %477 = vector.load %arg13[%c24_280, %c0_281] : memref<64x32xf32, #tpu.memory_space<vmem>>, vector<8x32xf32>
    %cst_282 = arith.constant dense<0.000000e+00> : vector<8x32xf32>
    %478 = tpu.matmul %470, %363, %cst_282 {dimension_numbers = #tpu.dot_dimension_numbers<[1], [0], [0], [1], [0, 0, 1, 1], [], []>} : vector<8x32xbf16>, vector<32x32xbf16>, vector<8x32xf32> -> vector<8x32xf32>
    %479 = arith.addf %477, %478 : vector<8x32xf32>
    %c24_283 = arith.constant 24 : index
    %c0_284 = arith.constant 0 : index
    %480 = vector.load %arg14[%c24_283, %c0_284] : memref<64x32xf32, #tpu.memory_space<vmem>>, vector<8x32xf32>
    %cst_285 = arith.constant dense<0.000000e+00> : vector<8x32xf32>
    %481 = tpu.matmul %470, %365, %cst_285 {dimension_numbers = #tpu.dot_dimension_numbers<[1], [0], [0], [1], [0, 0, 1, 1], [], []>} : vector<8x32xbf16>, vector<32x32xbf16>, vector<8x32xf32> -> vector<8x32xf32>
    %482 = arith.addf %480, %481 : vector<8x32xf32>
    %483 = arith.negf %473 : vector<8x32xf32>
    %484 = math.exp %483 : vector<8x32xf32>
    %cst_286 = arith.constant 1.000000e+00 : f32
    %485 = vector.broadcast %cst_286 : f32 to vector<8x32xf32>
    %486 = arith.addf %485, %484 : vector<8x32xf32>
    %487 = arith.divf %485, %486 : vector<8x32xf32>
    %488 = arith.negf %476 : vector<8x32xf32>
    %489 = math.exp %488 : vector<8x32xf32>
    %cst_287 = arith.constant 1.000000e+00 : f32
    %490 = vector.broadcast %cst_287 : f32 to vector<8x32xf32>
    %491 = arith.addf %490, %489 : vector<8x32xf32>
    %492 = arith.divf %490, %491 : vector<8x32xf32>
    %493 = math.tanh %479 : vector<8x32xf32>
    %494 = arith.negf %482 : vector<8x32xf32>
    %495 = math.exp %494 : vector<8x32xf32>
    %cst_288 = arith.constant 1.000000e+00 : f32
    %496 = vector.broadcast %cst_288 : f32 to vector<8x32xf32>
    %497 = arith.addf %496, %495 : vector<8x32xf32>
    %498 = arith.divf %496, %497 : vector<8x32xf32>
    %499 = arith.mulf %492, %467 : vector<8x32xf32>
    %500 = arith.mulf %487, %493 : vector<8x32xf32>
    %501 = arith.addf %499, %500 : vector<8x32xf32>
    %502 = math.tanh %501 : vector<8x32xf32>
    %503 = arith.mulf %498, %502 : vector<8x32xf32>
    %504 = arith.truncf %503 : vector<8x32xf32> to vector<8x32xbf16>
    %c32_289 = arith.constant 32 : index
    %c0_290 = arith.constant 0 : index
    %505 = vector.load %arg11[%c32_289, %c0_290] : memref<64x32xf32, #tpu.memory_space<vmem>>, vector<8x32xf32>
    %cst_291 = arith.constant dense<0.000000e+00> : vector<8x32xf32>
    %506 = tpu.matmul %504, %359, %cst_291 {dimension_numbers = #tpu.dot_dimension_numbers<[1], [0], [0], [1], [0, 0, 1, 1], [], []>} : vector<8x32xbf16>, vector<32x32xbf16>, vector<8x32xf32> -> vector<8x32xf32>
    %507 = arith.addf %505, %506 : vector<8x32xf32>
    %c32_292 = arith.constant 32 : index
    %c0_293 = arith.constant 0 : index
    %508 = vector.load %arg12[%c32_292, %c0_293] : memref<64x32xf32, #tpu.memory_space<vmem>>, vector<8x32xf32>
    %cst_294 = arith.constant dense<0.000000e+00> : vector<8x32xf32>
    %509 = tpu.matmul %504, %361, %cst_294 {dimension_numbers = #tpu.dot_dimension_numbers<[1], [0], [0], [1], [0, 0, 1, 1], [], []>} : vector<8x32xbf16>, vector<32x32xbf16>, vector<8x32xf32> -> vector<8x32xf32>
    %510 = arith.addf %508, %509 : vector<8x32xf32>
    %c32_295 = arith.constant 32 : index
    %c0_296 = arith.constant 0 : index
    %511 = vector.load %arg13[%c32_295, %c0_296] : memref<64x32xf32, #tpu.memory_space<vmem>>, vector<8x32xf32>
    %cst_297 = arith.constant dense<0.000000e+00> : vector<8x32xf32>
    %512 = tpu.matmul %504, %363, %cst_297 {dimension_numbers = #tpu.dot_dimension_numbers<[1], [0], [0], [1], [0, 0, 1, 1], [], []>} : vector<8x32xbf16>, vector<32x32xbf16>, vector<8x32xf32> -> vector<8x32xf32>
    %513 = arith.addf %511, %512 : vector<8x32xf32>
    %c32_298 = arith.constant 32 : index
    %c0_299 = arith.constant 0 : index
    %514 = vector.load %arg14[%c32_298, %c0_299] : memref<64x32xf32, #tpu.memory_space<vmem>>, vector<8x32xf32>
    %cst_300 = arith.constant dense<0.000000e+00> : vector<8x32xf32>
    %515 = tpu.matmul %504, %365, %cst_300 {dimension_numbers = #tpu.dot_dimension_numbers<[1], [0], [0], [1], [0, 0, 1, 1], [], []>} : vector<8x32xbf16>, vector<32x32xbf16>, vector<8x32xf32> -> vector<8x32xf32>
    %516 = arith.addf %514, %515 : vector<8x32xf32>
    %517 = arith.negf %507 : vector<8x32xf32>
    %518 = math.exp %517 : vector<8x32xf32>
    %cst_301 = arith.constant 1.000000e+00 : f32
    %519 = vector.broadcast %cst_301 : f32 to vector<8x32xf32>
    %520 = arith.addf %519, %518 : vector<8x32xf32>
    %521 = arith.divf %519, %520 : vector<8x32xf32>
    %522 = arith.negf %510 : vector<8x32xf32>
    %523 = math.exp %522 : vector<8x32xf32>
    %cst_302 = arith.constant 1.000000e+00 : f32
    %524 = vector.broadcast %cst_302 : f32 to vector<8x32xf32>
    %525 = arith.addf %524, %523 : vector<8x32xf32>
    %526 = arith.divf %524, %525 : vector<8x32xf32>
    %527 = math.tanh %513 : vector<8x32xf32>
    %528 = arith.negf %516 : vector<8x32xf32>
    %529 = math.exp %528 : vector<8x32xf32>
    %cst_303 = arith.constant 1.000000e+00 : f32
    %530 = vector.broadcast %cst_303 : f32 to vector<8x32xf32>
    %531 = arith.addf %530, %529 : vector<8x32xf32>
    %532 = arith.divf %530, %531 : vector<8x32xf32>
    %533 = arith.mulf %526, %501 : vector<8x32xf32>
    %534 = arith.mulf %521, %527 : vector<8x32xf32>
    %535 = arith.addf %533, %534 : vector<8x32xf32>
    %536 = math.tanh %535 : vector<8x32xf32>
    %537 = arith.mulf %532, %536 : vector<8x32xf32>
    %538 = arith.truncf %537 : vector<8x32xf32> to vector<8x32xbf16>
    %c40_304 = arith.constant 40 : index
    %c0_305 = arith.constant 0 : index
    %539 = vector.load %arg11[%c40_304, %c0_305] : memref<64x32xf32, #tpu.memory_space<vmem>>, vector<8x32xf32>
    %cst_306 = arith.constant dense<0.000000e+00> : vector<8x32xf32>
    %540 = tpu.matmul %538, %359, %cst_306 {dimension_numbers = #tpu.dot_dimension_numbers<[1], [0], [0], [1], [0, 0, 1, 1], [], []>} : vector<8x32xbf16>, vector<32x32xbf16>, vector<8x32xf32> -> vector<8x32xf32>
    %541 = arith.addf %539, %540 : vector<8x32xf32>
    %c40_307 = arith.constant 40 : index
    %c0_308 = arith.constant 0 : index
    %542 = vector.load %arg12[%c40_307, %c0_308] : memref<64x32xf32, #tpu.memory_space<vmem>>, vector<8x32xf32>
    %cst_309 = arith.constant dense<0.000000e+00> : vector<8x32xf32>
    %543 = tpu.matmul %538, %361, %cst_309 {dimension_numbers = #tpu.dot_dimension_numbers<[1], [0], [0], [1], [0, 0, 1, 1], [], []>} : vector<8x32xbf16>, vector<32x32xbf16>, vector<8x32xf32> -> vector<8x32xf32>
    %544 = arith.addf %542, %543 : vector<8x32xf32>
    %c40_310 = arith.constant 40 : index
    %c0_311 = arith.constant 0 : index
    %545 = vector.load %arg13[%c40_310, %c0_311] : memref<64x32xf32, #tpu.memory_space<vmem>>, vector<8x32xf32>
    %cst_312 = arith.constant dense<0.000000e+00> : vector<8x32xf32>
    %546 = tpu.matmul %538, %363, %cst_312 {dimension_numbers = #tpu.dot_dimension_numbers<[1], [0], [0], [1], [0, 0, 1, 1], [], []>} : vector<8x32xbf16>, vector<32x32xbf16>, vector<8x32xf32> -> vector<8x32xf32>
    %547 = arith.addf %545, %546 : vector<8x32xf32>
    %c40_313 = arith.constant 40 : index
    %c0_314 = arith.constant 0 : index
    %548 = vector.load %arg14[%c40_313, %c0_314] : memref<64x32xf32, #tpu.memory_space<vmem>>, vector<8x32xf32>
    %cst_315 = arith.constant dense<0.000000e+00> : vector<8x32xf32>
    %549 = tpu.matmul %538, %365, %cst_315 {dimension_numbers = #tpu.dot_dimension_numbers<[1], [0], [0], [1], [0, 0, 1, 1], [], []>} : vector<8x32xbf16>, vector<32x32xbf16>, vector<8x32xf32> -> vector<8x32xf32>
    %550 = arith.addf %548, %549 : vector<8x32xf32>
    %551 = arith.negf %541 : vector<8x32xf32>
    %552 = math.exp %551 : vector<8x32xf32>
    %cst_316 = arith.constant 1.000000e+00 : f32
    %553 = vector.broadcast %cst_316 : f32 to vector<8x32xf32>
    %554 = arith.addf %553, %552 : vector<8x32xf32>
    %555 = arith.divf %553, %554 : vector<8x32xf32>
    %556 = arith.negf %544 : vector<8x32xf32>
    %557 = math.exp %556 : vector<8x32xf32>
    %cst_317 = arith.constant 1.000000e+00 : f32
    %558 = vector.broadcast %cst_317 : f32 to vector<8x32xf32>
    %559 = arith.addf %558, %557 : vector<8x32xf32>
    %560 = arith.divf %558, %559 : vector<8x32xf32>
    %561 = math.tanh %547 : vector<8x32xf32>
    %562 = arith.negf %550 : vector<8x32xf32>
    %563 = math.exp %562 : vector<8x32xf32>
    %cst_318 = arith.constant 1.000000e+00 : f32
    %564 = vector.broadcast %cst_318 : f32 to vector<8x32xf32>
    %565 = arith.addf %564, %563 : vector<8x32xf32>
    %566 = arith.divf %564, %565 : vector<8x32xf32>
    %567 = arith.mulf %560, %535 : vector<8x32xf32>
    %568 = arith.mulf %555, %561 : vector<8x32xf32>
    %569 = arith.addf %567, %568 : vector<8x32xf32>
    %570 = math.tanh %569 : vector<8x32xf32>
    %571 = arith.mulf %566, %570 : vector<8x32xf32>
    %572 = arith.truncf %571 : vector<8x32xf32> to vector<8x32xbf16>
    %c48_319 = arith.constant 48 : index
    %c0_320 = arith.constant 0 : index
    %573 = vector.load %arg11[%c48_319, %c0_320] : memref<64x32xf32, #tpu.memory_space<vmem>>, vector<8x32xf32>
    %cst_321 = arith.constant dense<0.000000e+00> : vector<8x32xf32>
    %574 = tpu.matmul %572, %359, %cst_321 {dimension_numbers = #tpu.dot_dimension_numbers<[1], [0], [0], [1], [0, 0, 1, 1], [], []>} : vector<8x32xbf16>, vector<32x32xbf16>, vector<8x32xf32> -> vector<8x32xf32>
    %575 = arith.addf %573, %574 : vector<8x32xf32>
    %c48_322 = arith.constant 48 : index
    %c0_323 = arith.constant 0 : index
    %576 = vector.load %arg12[%c48_322, %c0_323] : memref<64x32xf32, #tpu.memory_space<vmem>>, vector<8x32xf32>
    %cst_324 = arith.constant dense<0.000000e+00> : vector<8x32xf32>
    %577 = tpu.matmul %572, %361, %cst_324 {dimension_numbers = #tpu.dot_dimension_numbers<[1], [0], [0], [1], [0, 0, 1, 1], [], []>} : vector<8x32xbf16>, vector<32x32xbf16>, vector<8x32xf32> -> vector<8x32xf32>
    %578 = arith.addf %576, %577 : vector<8x32xf32>
    %c48_325 = arith.constant 48 : index
    %c0_326 = arith.constant 0 : index
    %579 = vector.load %arg13[%c48_325, %c0_326] : memref<64x32xf32, #tpu.memory_space<vmem>>, vector<8x32xf32>
    %cst_327 = arith.constant dense<0.000000e+00> : vector<8x32xf32>
    %580 = tpu.matmul %572, %363, %cst_327 {dimension_numbers = #tpu.dot_dimension_numbers<[1], [0], [0], [1], [0, 0, 1, 1], [], []>} : vector<8x32xbf16>, vector<32x32xbf16>, vector<8x32xf32> -> vector<8x32xf32>
    %581 = arith.addf %579, %580 : vector<8x32xf32>
    %c48_328 = arith.constant 48 : index
    %c0_329 = arith.constant 0 : index
    %582 = vector.load %arg14[%c48_328, %c0_329] : memref<64x32xf32, #tpu.memory_space<vmem>>, vector<8x32xf32>
    %cst_330 = arith.constant dense<0.000000e+00> : vector<8x32xf32>
    %583 = tpu.matmul %572, %365, %cst_330 {dimension_numbers = #tpu.dot_dimension_numbers<[1], [0], [0], [1], [0, 0, 1, 1], [], []>} : vector<8x32xbf16>, vector<32x32xbf16>, vector<8x32xf32> -> vector<8x32xf32>
    %584 = arith.addf %582, %583 : vector<8x32xf32>
    %585 = arith.negf %575 : vector<8x32xf32>
    %586 = math.exp %585 : vector<8x32xf32>
    %cst_331 = arith.constant 1.000000e+00 : f32
    %587 = vector.broadcast %cst_331 : f32 to vector<8x32xf32>
    %588 = arith.addf %587, %586 : vector<8x32xf32>
    %589 = arith.divf %587, %588 : vector<8x32xf32>
    %590 = arith.negf %578 : vector<8x32xf32>
    %591 = math.exp %590 : vector<8x32xf32>
    %cst_332 = arith.constant 1.000000e+00 : f32
    %592 = vector.broadcast %cst_332 : f32 to vector<8x32xf32>
    %593 = arith.addf %592, %591 : vector<8x32xf32>
    %594 = arith.divf %592, %593 : vector<8x32xf32>
    %595 = math.tanh %581 : vector<8x32xf32>
    %596 = arith.negf %584 : vector<8x32xf32>
    %597 = math.exp %596 : vector<8x32xf32>
    %cst_333 = arith.constant 1.000000e+00 : f32
    %598 = vector.broadcast %cst_333 : f32 to vector<8x32xf32>
    %599 = arith.addf %598, %597 : vector<8x32xf32>
    %600 = arith.divf %598, %599 : vector<8x32xf32>
    %601 = arith.mulf %594, %569 : vector<8x32xf32>
    %602 = arith.mulf %589, %595 : vector<8x32xf32>
    %603 = arith.addf %601, %602 : vector<8x32xf32>
    %604 = math.tanh %603 : vector<8x32xf32>
    %605 = arith.mulf %600, %604 : vector<8x32xf32>
    %606 = arith.truncf %605 : vector<8x32xf32> to vector<8x32xbf16>
    %c56_334 = arith.constant 56 : index
    %c0_335 = arith.constant 0 : index
    %607 = vector.load %arg11[%c56_334, %c0_335] : memref<64x32xf32, #tpu.memory_space<vmem>>, vector<8x32xf32>
    %cst_336 = arith.constant dense<0.000000e+00> : vector<8x32xf32>
    %608 = tpu.matmul %606, %359, %cst_336 {dimension_numbers = #tpu.dot_dimension_numbers<[1], [0], [0], [1], [0, 0, 1, 1], [], []>} : vector<8x32xbf16>, vector<32x32xbf16>, vector<8x32xf32> -> vector<8x32xf32>
    %609 = arith.addf %607, %608 : vector<8x32xf32>
    %c56_337 = arith.constant 56 : index
    %c0_338 = arith.constant 0 : index
    %610 = vector.load %arg12[%c56_337, %c0_338] : memref<64x32xf32, #tpu.memory_space<vmem>>, vector<8x32xf32>
    %cst_339 = arith.constant dense<0.000000e+00> : vector<8x32xf32>
    %611 = tpu.matmul %606, %361, %cst_339 {dimension_numbers = #tpu.dot_dimension_numbers<[1], [0], [0], [1], [0, 0, 1, 1], [], []>} : vector<8x32xbf16>, vector<32x32xbf16>, vector<8x32xf32> -> vector<8x32xf32>
    %612 = arith.addf %610, %611 : vector<8x32xf32>
    %c56_340 = arith.constant 56 : index
    %c0_341 = arith.constant 0 : index
    %613 = vector.load %arg13[%c56_340, %c0_341] : memref<64x32xf32, #tpu.memory_space<vmem>>, vector<8x32xf32>
    %cst_342 = arith.constant dense<0.000000e+00> : vector<8x32xf32>
    %614 = tpu.matmul %606, %363, %cst_342 {dimension_numbers = #tpu.dot_dimension_numbers<[1], [0], [0], [1], [0, 0, 1, 1], [], []>} : vector<8x32xbf16>, vector<32x32xbf16>, vector<8x32xf32> -> vector<8x32xf32>
    %615 = arith.addf %613, %614 : vector<8x32xf32>
    %c56_343 = arith.constant 56 : index
    %c0_344 = arith.constant 0 : index
    %616 = vector.load %arg14[%c56_343, %c0_344] : memref<64x32xf32, #tpu.memory_space<vmem>>, vector<8x32xf32>
    %cst_345 = arith.constant dense<0.000000e+00> : vector<8x32xf32>
    %617 = tpu.matmul %606, %365, %cst_345 {dimension_numbers = #tpu.dot_dimension_numbers<[1], [0], [0], [1], [0, 0, 1, 1], [], []>} : vector<8x32xbf16>, vector<32x32xbf16>, vector<8x32xf32> -> vector<8x32xf32>
    %618 = arith.addf %616, %617 : vector<8x32xf32>
    %619 = arith.negf %609 : vector<8x32xf32>
    %620 = math.exp %619 : vector<8x32xf32>
    %cst_346 = arith.constant 1.000000e+00 : f32
    %621 = vector.broadcast %cst_346 : f32 to vector<8x32xf32>
    %622 = arith.addf %621, %620 : vector<8x32xf32>
    %623 = arith.divf %621, %622 : vector<8x32xf32>
    %624 = arith.negf %612 : vector<8x32xf32>
    %625 = math.exp %624 : vector<8x32xf32>
    %cst_347 = arith.constant 1.000000e+00 : f32
    %626 = vector.broadcast %cst_347 : f32 to vector<8x32xf32>
    %627 = arith.addf %626, %625 : vector<8x32xf32>
    %628 = arith.divf %626, %627 : vector<8x32xf32>
    %629 = math.tanh %615 : vector<8x32xf32>
    %630 = arith.negf %618 : vector<8x32xf32>
    %631 = math.exp %630 : vector<8x32xf32>
    %cst_348 = arith.constant 1.000000e+00 : f32
    %632 = vector.broadcast %cst_348 : f32 to vector<8x32xf32>
    %633 = arith.addf %632, %631 : vector<8x32xf32>
    %634 = arith.divf %632, %633 : vector<8x32xf32>
    %635 = arith.mulf %628, %603 : vector<8x32xf32>
    %636 = arith.mulf %623, %629 : vector<8x32xf32>
    %637 = arith.addf %635, %636 : vector<8x32xf32>
    %638 = math.tanh %637 : vector<8x32xf32>
    %639 = arith.mulf %634, %638 : vector<8x32xf32>
    %c0_349 = arith.constant 0 : index
    %c0_350 = arith.constant 0 : index
    %640 = vector.load %arg8[%c0_349, %c0_350] : memref<32x4xf32, #tpu.memory_space<vmem>>, vector<32x4xf32>
    %cst_351 = arith.constant dense<0.000000e+00> : vector<8x4xf32>
    %641 = tpu.matmul %639, %640, %cst_351 {dimension_numbers = #tpu.dot_dimension_numbers<[1], [0], [0], [1], [0, 0, 1, 1], [], []>} : vector<8x32xf32>, vector<32x4xf32>, vector<8x4xf32> -> vector<8x4xf32>
    %c0_352 = arith.constant 0 : index
    %c0_353 = arith.constant 0 : index
    %642 = vector.load %arg9[%c0_352, %c0_353] : memref<1x4xf32, #tpu.memory_space<vmem>>, vector<1x4xf32>
    %643 = vector.broadcast %642 : vector<1x4xf32> to vector<8x4xf32>
    %644 = arith.addf %641, %643 : vector<8x4xf32>
    %c0_354 = arith.constant 0 : index
    %c0_355 = arith.constant 0 : index
    %645 = vector.load %arg10[%c0_354, %c0_355] : memref<8x4xf32, #tpu.memory_space<vmem>>, vector<8x4xf32>
    tpu.vector_store %arg10[%c0_354, %c0_355], %644 {strides = array<i32>} : memref<8x4xf32, #tpu.memory_space<vmem>>, vector<8x4xf32>,
    return
  }
  func.func @transform_0(%arg0: i32) -> (i32, i32, i32) {
    %c0_i32 = arith.constant 0 : i32
    %c0_i32_0 = arith.constant 0 : i32
    %c0_i32_1 = arith.constant 0 : i32
    return %arg0, %c0_i32, %c0_i32_0 : i32, i32, i32
  }
  func.func @transform_1(%arg0: i32) -> (i32, i32, i32) {
    %c0_i32 = arith.constant 0 : i32
    %c0_i32_0 = arith.constant 0 : i32
    %c0_i32_1 = arith.constant 0 : i32
    %c0_i32_2 = arith.constant 0 : i32
    return %c0_i32, %c0_i32_0, %c0_i32_1 : i32, i32, i32
  }
  func.func @transform_2(%arg0: i32) -> (i32, i32, i32) {
    %c0_i32 = arith.constant 0 : i32
    %c0_i32_0 = arith.constant 0 : i32
    %c0_i32_1 = arith.constant 0 : i32
    %c0_i32_2 = arith.constant 0 : i32
    return %c0_i32, %c0_i32_0, %c0_i32_1 : i32, i32, i32
  }
  func.func @transform_3(%arg0: i32) -> (i32, i32, i32) {
    %c0_i32 = arith.constant 0 : i32
    %c0_i32_0 = arith.constant 0 : i32
    %c0_i32_1 = arith.constant 0 : i32
    %c0_i32_2 = arith.constant 0 : i32
    return %c0_i32, %c0_i32_0, %c0_i32_1 : i32, i32, i32
  }
  func.func @transform_4(%arg0: i32) -> (i32, i32, i32) {
    %c0_i32 = arith.constant 0 : i32
    %c0_i32_0 = arith.constant 0 : i32
    %c0_i32_1 = arith.constant 0 : i32
    %c0_i32_2 = arith.constant 0 : i32
    return %c0_i32, %c0_i32_0, %c0_i32_1 : i32, i32, i32
  }
  func.func @transform_5(%arg0: i32) -> (i32, i32, i32) {
    %c0_i32 = arith.constant 0 : i32
    %c0_i32_0 = arith.constant 0 : i32
    %c0_i32_1 = arith.constant 0 : i32
    %c0_i32_2 = arith.constant 0 : i32
    return %c0_i32, %c0_i32_0, %c0_i32_1 : i32, i32, i32
  }
  func.func @transform_6(%arg0: i32) -> (i32, i32, i32) {
    %c0_i32 = arith.constant 0 : i32
    %c0_i32_0 = arith.constant 0 : i32
    %c0_i32_1 = arith.constant 0 : i32
    %c0_i32_2 = arith.constant 0 : i32
    return %c0_i32, %c0_i32_0, %c0_i32_1 : i32, i32, i32
  }
  func.func @transform_7(%arg0: i32) -> (i32, i32) {
    %c0_i32 = arith.constant 0 : i32
    %c0_i32_0 = arith.constant 0 : i32
    %c0_i32_1 = arith.constant 0 : i32
    return %c0_i32, %c0_i32_0 : i32, i32
  }
  func.func @transform_8(%arg0: i32) -> (i32, i32) {
    %c0_i32 = arith.constant 0 : i32
    %c0_i32_0 = arith.constant 0 : i32
    %c0_i32_1 = arith.constant 0 : i32
    return %c0_i32, %c0_i32_0 : i32, i32
  }
  func.func @transform_9(%arg0: i32) -> (i32, i32) {
    %c0_i32 = arith.constant 0 : i32
    %c0_i32_0 = arith.constant 0 : i32
    return %arg0, %c0_i32 : i32, i32
  }
}

</mosaic_0001>

<llo_original>
// kernel: lstm_model_forward.1
$region0: #{lstm_model_forward.1}
  #allocation0 [shape = 'u32[]', space=smem, size = 0x4, offset = 0x4, fixed_abs, tag = 'smem constant byte address 0x4 - core index']
  #allocation1 [shape = 'u32[144,128]{1,0:T(1,128)}', space=vmem, size = 0x12000, scoped, tag = 'internal scratch']
  #allocation2 [shape = 'f32[64,32]{1,0:T(8,128)}', space=vmem, size = 0x8000, scoped, tag = 'scratch operand']
  #allocation3 [shape = 'f32[64,32]{1,0:T(8,128)}', space=vmem, size = 0x8000, scoped, tag = 'scratch operand']
  #allocation4 [shape = 'f32[64,32]{1,0:T(8,128)}', space=vmem, size = 0x8000, scoped, tag = 'scratch operand']
  #allocation5 [shape = 'f32[64,32]{1,0:T(8,128)}', space=vmem, size = 0x8000, scoped, tag = 'scratch operand']
  #allocation6 [shape = 'f32[64,32]{1,0:T(8,128)}', space=vmem, size = 0x8000, scoped, tag = 'scratch operand']
  %s0 = inlined_call_operand.vmem [shape: bf16[1,64,16], index: 0, kind: input, shape index: {}]
  %s1 = inlined_call_operand.hbm [shape: bf16[4,16,32], index: 1, kind: input, shape index: {}]
  %s2 = inlined_call_operand.vmem [shape: bf16[4,32,32], index: 2, kind: input, shape index: {}]
  %s3 = inlined_call_operand.hbm [shape: f32[4,1,32], index: 3, kind: input, shape index: {}]
  %s4 = inlined_call_operand.vmem [shape: bf16[4,32,32], index: 4, kind: input, shape index: {}]
  %s5 = inlined_call_operand.hbm [shape: bf16[4,32,32], index: 5, kind: input, shape index: {}]
  %s6 = inlined_call_operand.hbm [shape: f32[4,1,32], index: 6, kind: input, shape index: {}]
  %s7 = inlined_call_operand.vmem [shape: f32[32,4], index: 7, kind: input, shape index: {}]
  %s8 = inlined_call_operand.hbm [shape: f32[1,4], index: 8, kind: input, shape index: {}]
  %s9 = inlined_call_operand.vmem [shape: f32[8,4], index: 9, kind: output, shape index: {}]
  %s10 = sld [smem:[#allocation0]]
  $region66: #{lstm_model_forward.1} parent=0
    _
  %s12 = ssub.s32 1, %s10
  %s13 = scalar_select 0, %s12, %s10
  $region1: #{lstm_model_forward.1} parent=0
    #allocation7 [shape = 'u8[16384]{0}', space=vmem, size = 0x4000, scoped, tag = 'input window, operand 1, single buffered']
    #allocation8 [shape = 's32[1]{0}', space=sflag, size = 0x4, scoped, tag = 'scoped memory for lstm_model_forward.1']
    #allocation9 [shape = 'u8[2048]{0}', space=vmem, size = 0x800, scoped, tag = 'input window, operand 3, single buffered']
    #allocation10 [shape = 's32[1]{0}', space=sflag, size = 0x4, scoped, tag = 'scoped memory for lstm_model_forward.1']
    #allocation11 [shape = 'u8[32768]{0}', space=vmem, size = 0x8000, scoped, tag = 'input window, operand 5, single buffered']
    #allocation12 [shape = 'u8[2048]{0}', space=vmem, size = 0x800, scoped, tag = 'input window, operand 6, single buffered']
    #allocation13 [shape = 's32[1]{0}', space=sflag, size = 0x4, scoped, tag = 'scoped memory for lstm_model_forward.1']
    #allocation14 [shape = 'u8[512]{0}', space=vmem, size = 0x400, scoped, tag = 'input window, operand 8, single buffered']
    %14 = vsyncpa [#allocation8], 0
    %15 = vsyncpa [#allocation10], 0
    %16 = vsyncpa [#allocation13], 0
    // Predicated region
    $region2: #{lstm_model_forward.1} parent=1 // pred_check
      _
    $region3: #{lstm_model_forward.1} parent=1 // pred_check_branch
      %18 = sbr.rel (0) target = $region5
    $region4: #{lstm_model_forward.1} parent=1 // pred_region
      _
    $region5: #{lstm_model_forward.1} parent=1 // pred_fallthru
      _
    // Predicated region
    $region6: #{lstm_model_forward.1} parent=1 // pred_check
      _
    $region7: #{lstm_model_forward.1} parent=1 // pred_check_branch
      %20 = sbr.rel (0) target = $region9
    $region8: #{lstm_model_forward.1} parent=1 // pred_region
      %s22 = ssub.s32 512, 512
      %23 = vsyncadd [#allocation8], %s22
      %s24 = sshll.u32 [#allocation7], 4
      %s25 = int_to_ptr.vmem [resolvable:$true] %s24
      %30 = dma.hbm_to_vmem [thread:$0]  %s1, 512, %s25, [#allocation8], 64, 64, 4
    $region9: #{lstm_model_forward.1} parent=1 // pred_fallthru
      _
    // Predicated region
    $region10: #{lstm_model_forward.1} parent=1 // pred_check
      _
    $region11: #{lstm_model_forward.1} parent=1 // pred_check_branch
      %32 = sbr.rel (0) target = $region13
    $region12: #{lstm_model_forward.1} parent=1 // pred_region
      _
    $region13: #{lstm_model_forward.1} parent=1 // pred_fallthru
      _
    // Predicated region
    $region14: #{lstm_model_forward.1} parent=1 // pred_check
      _
    $region15: #{lstm_model_forward.1} parent=1 // pred_check_branch
      %34 = sbr.rel (0) target = $region17
    $region16: #{lstm_model_forward.1} parent=1 // pred_region
      %s36 = ssub.s32 64, 64
      %37 = vsyncadd [#allocation10], %s36
      %s38 = sshll.u32 [#allocation9], 4
      %s39 = int_to_ptr.vmem [resolvable:$true] %s38
      %44 = dma.hbm_to_vmem [thread:$0]  %s3, 64, %s39, [#allocation10], 16, 16, 1
    $region17: #{lstm_model_forward.1} parent=1 // pred_fallthru
      _
    // Predicated region
    $region18: #{lstm_model_forward.1} parent=1 // pred_check
      _
    $region19: #{lstm_model_forward.1} parent=1 // pred_check_branch
      %46 = sbr.rel (0) target = $region21
    $region20: #{lstm_model_forward.1} parent=1 // pred_region
      _
    $region21: #{lstm_model_forward.1} parent=1 // pred_fallthru
      _
    // Predicated region
    $region22: #{lstm_model_forward.1} parent=1 // pred_check
      _
    $region23: #{lstm_model_forward.1} parent=1 // pred_check_branch
      %48 = sbr.rel (0) target = $region25
    $region24: #{lstm_model_forward.1} parent=1 // pred_region
      %s50 = ssub.s32 1024, 1024
      %51 = vsyncadd [#allocation10], %s50
      %s52 = sshll.u32 [#allocation11], 4
      %s53 = int_to_ptr.vmem [resolvable:$true] %s52
      %58 = dma.hbm_to_vmem [thread:$0]  %s5, 1024, %s53, [#allocation10], 64, 64, 4
    $region25: #{lstm_model_forward.1} parent=1 // pred_fallthru
      _
    // Predicated region
    $region26: #{lstm_model_forward.1} parent=1 // pred_check
      _
    $region27: #{lstm_model_forward.1} parent=1 // pred_check_branch
      %60 = sbr.rel (0) target = $region29
    $region28: #{lstm_model_forward.1} parent=1 // pred_region
      %s62 = ssub.s32 64, 64
      %63 = vsyncadd [#allocation13], %s62
      %s64 = sshll.u32 [#allocation12], 4
      %s65 = int_to_ptr.vmem [resolvable:$true] %s64
      %70 = dma.hbm_to_vmem [thread:$0]  %s6, 64, %s65, [#allocation13], 16, 16, 1
    $region29: #{lstm_model_forward.1} parent=1 // pred_fallthru
      _
    // Predicated region
    $region30: #{lstm_model_forward.1} parent=1 // pred_check
      _
    $region31: #{lstm_model_forward.1} parent=1 // pred_check_branch
      %72 = sbr.rel (0) target = $region33
    $region32: #{lstm_model_forward.1} parent=1 // pred_region
      _
    $region33: #{lstm_model_forward.1} parent=1 // pred_fallthru
      _
    // Predicated region
    $region34: #{lstm_model_forward.1} parent=1 // pred_check
      _
    $region35: #{lstm_model_forward.1} parent=1 // pred_check_branch
      %74 = sbr.rel (0) target = $region37
    $region36: #{lstm_model_forward.1} parent=1 // pred_region
      %s76 = ssub.s32 16, 16
      %77 = vsyncadd [#allocation13], %s76
      %s79 = sshll.u32 [#allocation14], 4
      %s80 = int_to_ptr.vmem [resolvable:$true] %s79
      %82 = dma.hbm_to_vmem [thread:$0]  %s8, 16, %s80, [#allocation13]
    $region37: #{lstm_model_forward.1} parent=1 // pred_fallthru
      _
    // Predicated region
    $region38: #{lstm_model_forward.1} parent=1 // pred_check
      _
    $region39: #{lstm_model_forward.1} parent=1 // pred_check_branch
      %84 = sbr.rel (0) target = $region41
    $region40: #{lstm_model_forward.1} parent=1 // pred_region
      %85 = dma.done [#allocation8], 512
    $region41: #{lstm_model_forward.1} parent=1 // pred_fallthru
      _
    // Predicated region
    $region42: #{lstm_model_forward.1} parent=1 // pred_check
      _
    $region43: #{lstm_model_forward.1} parent=1 // pred_check_branch
      %87 = sbr.rel (0) target = $region45
    $region44: #{lstm_model_forward.1} parent=1 // pred_region
      %88 = dma.done [#allocation10], 64
    $region45: #{lstm_model_forward.1} parent=1 // pred_fallthru
      _
    // Predicated region
    $region46: #{lstm_model_forward.1} parent=1 // pred_check
      _
    $region47: #{lstm_model_forward.1} parent=1 // pred_check_branch
      %90 = sbr.rel (0) target = $region49
    $region48: #{lstm_model_forward.1} parent=1 // pred_region
      %91 = dma.done [#allocation10], 1024
    $region49: #{lstm_model_forward.1} parent=1 // pred_fallthru
      _
    // Predicated region
    $region50: #{lstm_model_forward.1} parent=1 // pred_check
      _
    $region51: #{lstm_model_forward.1} parent=1 // pred_check_branch
      %93 = sbr.rel (0) target = $region53
    $region52: #{lstm_model_forward.1} parent=1 // pred_region
      %94 = dma.done [#allocation13], 64
    $region53: #{lstm_model_forward.1} parent=1 // pred_fallthru
      _
    // Predicated region
    $region54: #{lstm_model_forward.1} parent=1 // pred_check
      _
    $region55: #{lstm_model_forward.1} parent=1 // pred_check_branch
      %96 = sbr.rel (0) target = $region57
    $region56: #{lstm_model_forward.1} parent=1 // pred_region
      %97 = dma.done [#allocation13], 16
    $region57: #{lstm_model_forward.1} parent=1 // pred_fallthru
      _
    %v99 = vld [vmem:[%s0] sm:$0xf]
    %v100 = vld [vmem:[%s0 + $0x4] sm:$0xf]
    %v101 = vld [vmem:[%s0 + $0x8] sm:$0xf]
    %v102 = vld [vmem:[%s0 + $0xc] sm:$0xf]
    %v103 = vld [vmem:[%s0 + $0x10] sm:$0xf]
    %v104 = vld [vmem:[%s0 + $0x14] sm:$0xf]
    %v105 = vld [vmem:[%s0 + $0x18] sm:$0xf]
    %v106 = vld [vmem:[%s0 + $0x1c] sm:$0xf]
    %v107 = vld [vmem:[#allocation7] sm:$0xf]
    %v108 = vld [vmem:[#allocation7 + $0x4] sm:$0xf]
    %v109 = vld [vmem:[#allocation9] sm:$0x1]
    %v111 = vlaneseq
    %v112 = vshrl.u32 %v111, 7
    %v113 = vsub.s32 0, %v112
    %v114 = vrot.slane %v109, %v113
    %v124 = vunpack.c.l.b16 %v99
    %v125 = vunpack.c.l.b16 %v100
    %v126 = vunpack.c.l.b16 %v101
    %v127 = vunpack.c.l.b16 %v102
    %v128 = vunpack.c.l.b16 %v103
    %v129 = vunpack.c.l.b16 %v104
    %v130 = vunpack.c.l.b16 %v105
    %v131 = vunpack.c.l.b16 %v106
    %v132 = vpack.c.b16 %v125, %v124
    %v133 = vpack.c.b16 %v127, %v126
    %v134 = vpack.c.b16 %v129, %v128
    %v135 = vpack.c.b16 %v131, %v130
    %v138 = vunpack.c.l.b16 %v107
    %v139 = vunpack.c.l.b16 %v108
    %v140 = vpack.c.b16 %v139, %v138
    %vm142 = vcmask 130048
    %v144 = vsel %vm142, %v132, 0
    %v147 = vsel %vm142, %v133, 0
    %v150 = vsel %vm142, %v134, 0
    %v153 = vsel %vm142, %v135, 0
    %155 = vmatprep.subr.bf16.mxu0 0
    %156 = vmatpush1.bf16.msra.mxu0 0
    %157 = vmatprep.subr.bf16.mxu0 0
    %158 = vmatpush1.bf16.msra.mxu0 0
    %159 = vmatprep.subr.bf16.mxu0 0
    %160 = vmatpush1.bf16.msra.mxu0 0
    %161 = vmatprep.subr.bf16.mxu0 0
    %162 = vmatpush1.bf16.msra.mxu0 0
    %163 = vmatprep.subr.bf16.mxu0 0
    %164 = vmatpush1.bf16.msra.mxu0 0
    %165 = vmatprep.subr.bf16.mxu0 0
    %166 = vmatpush1.bf16.msra.mxu0 0
    %167 = vmatprep.subr.bf16.mxu0 0
    %168 = vmatpush1.bf16.msra.mxu0 0
    %169 = vmatprep.subr.bf16.mxu0 0
    %170 = vmatpush1.bf16.msra.mxu0 %v140
    %171 = vmatprep.subr.bf16.mxu0 0
    %172 = vmatpush2.bf16.msra.mxu0 0
    %173 = vmatprep.subr.bf16.mxu0 0
    %174 = vmatpush2.bf16.msra.mxu0 0
    %175 = vmatprep.subr.bf16.mxu0 0
    %176 = vmatpush2.bf16.msra.mxu0 0
    %177 = vmatprep.subr.bf16.mxu0 0
    %178 = vmatpush2.bf16.msra.mxu0 0
    %179 = vmatprep.subr.bf16.mxu0 0
    %180 = vmatpush2.bf16.msra.mxu0 0
    %181 = vmatprep.subr.bf16.mxu0 0
    %182 = vmatpush2.bf16.msra.mxu0 0
    %183 = vmatprep.subr.bf16.mxu0 0
    %184 = vmatpush2.bf16.msra.mxu0 0
    %185 = vmatprep.subr.bf16.mxu0 0
    %186 = vmatpush2.bf16.msra.mxu0 0
    %187 = vmatprep.mubr.bf16.mxu0 0
    %188 = vmatmul.mubr.bf16.gmra.mxu0 %v144
    %v189 = vpop.f32.mrf.mxu0
    %v190 = vadd.f32 %v114, %v189
    %v191 = vpop.f32.mrf.mxu0
    %v192 = vpop.f32.mrf.mxu0
    %v193 = vadd.f32 %v114, %v192
    %v194 = vpop.f32.mrf.mxu0
    %195 = vmatprep.mubr.bf16.mxu0 0
    %196 = vmatmul.mubr.bf16.gmra.mxu0 %v147
    %v197 = vpop.f32.mrf.mxu0
    %v198 = vadd.f32 %v114, %v197
    %v199 = vpop.f32.mrf.mxu0
    %v200 = vpop.f32.mrf.mxu0
    %v201 = vadd.f32 %v114, %v200
    %v202 = vpop.f32.mrf.mxu0
    %203 = vmatprep.mubr.bf16.mxu0 0
    %204 = vmatmul.mubr.bf16.gmra.mxu0 %v150
    %v205 = vpop.f32.mrf.mxu0
    %v206 = vadd.f32 %v114, %v205
    %v207 = vpop.f32.mrf.mxu0
    %v208 = vpop.f32.mrf.mxu0
    %v209 = vadd.f32 %v114, %v208
    %v210 = vpop.f32.mrf.mxu0
    %211 = vmatprep.mubr.bf16.mxu0 0
    %212 = vmatmul.mubr.bf16.gmra.mxu0 %v153
    %v213 = vpop.f32.mrf.mxu0
    %v214 = vadd.f32 %v114, %v213
    %v215 = vpop.f32.mrf.mxu0
    %v216 = vpop.f32.mrf.mxu0
    %v217 = vadd.f32 %v114, %v216
    %v218 = vpop.f32.mrf.mxu0
    %219 = vdwg.mxu0
    %vm220 = vcmask 261120
    %221 = vst.msk [vmem:[#allocation2] sm:$0xff] %vm220, %v190
    %222 = vst.msk [vmem:[#allocation2 + $0x8] sm:$0xff] %vm220, %v193
    %223 = vst.msk [vmem:[#allocation2 + $0x10] sm:$0xff] %vm220, %v198
    %224 = vst.msk [vmem:[#allocation2 + $0x18] sm:$0xff] %vm220, %v201
    %225 = vst.msk [vmem:[#allocation2 + $0x20] sm:$0xff] %vm220, %v206
    %226 = vst.msk [vmem:[#allocation2 + $0x28] sm:$0xff] %vm220, %v209
    %227 = vst.msk [vmem:[#allocation2 + $0x30] sm:$0xff] %vm220, %v214
    %228 = vst.msk [vmem:[#allocation2 + $0x38] sm:$0xff] %vm220, %v217
    %s229 = scalar_lea.vmem [#allocation7], 8
    %v230 = vld [vmem:[%s229] sm:$0xf]
    %v231 = vld [vmem:[%s229 + $0x4] sm:$0xf]
    %s232 = scalar_lea.vmem [#allocation9], 1
    %v233 = vld [vmem:[%s232] sm:$0x1]
    %v235 = vlaneseq
    %v236 = vshrl.u32 %v235, 7
    %v237 = vsub.s32 0, %v236
    %v238 = vrot.slane %v233, %v237
    %v242 = vunpack.c.l.b16 %v230
    %v243 = vunpack.c.l.b16 %v231
    %v244 = vpack.c.b16 %v243, %v242
    %246 = vmatprep.subr.bf16.mxu0 0
    %247 = vmatpush1.bf16.msra.mxu0 0
    %248 = vmatprep.subr.bf16.mxu0 0
    %249 = vmatpush1.bf16.msra.mxu0 0
    %250 = vmatprep.subr.bf16.mxu0 0
    %251 = vmatpush1.bf16.msra.mxu0 0
    %252 = vmatprep.subr.bf16.mxu0 0
    %253 = vmatpush1.bf16.msra.mxu0 0
    %254 = vmatprep.subr.bf16.mxu0 0
    %255 = vmatpush1.bf16.msra.mxu0 0
    %256 = vmatprep.subr.bf16.mxu0 0
    %257 = vmatpush1.bf16.msra.mxu0 0
    %258 = vmatprep.subr.bf16.mxu0 0
    %259 = vmatpush1.bf16.msra.mxu0 0
    %260 = vmatprep.subr.bf16.mxu0 0
    %261 = vmatpush1.bf16.msra.mxu0 %v244
    %262 = vmatprep.subr.bf16.mxu0 0
    %263 = vmatpush2.bf16.msra.mxu0 0
    %264 = vmatprep.subr.bf16.mxu0 0
    %265 = vmatpush2.bf16.msra.mxu0 0
    %266 = vmatprep.subr.bf16.mxu0 0
    %267 = vmatpush2.bf16.msra.mxu0 0
    %268 = vmatprep.subr.bf16.mxu0 0
    %269 = vmatpush2.bf16.msra.mxu0 0
    %270 = vmatprep.subr.bf16.mxu0 0
    %271 = vmatpush2.bf16.msra.mxu0 0
    %272 = vmatprep.subr.bf16.mxu0 0
    %273 = vmatpush2.bf16.msra.mxu0 0
    %274 = vmatprep.subr.bf16.mxu0 0
    %275 = vmatpush2.bf16.msra.mxu0 0
    %276 = vmatprep.subr.bf16.mxu0 0
    %277 = vmatpush2.bf16.msra.mxu0 0
    %278 = vmatprep.mubr.bf16.mxu0 0
    %279 = vmatmul.mubr.bf16.gmra.mxu0 %v144
    %v280 = vpop.f32.mrf.mxu0
    %v281 = vadd.f32 %v238, %v280
    %v282 = vpop.f32.mrf.mxu0
    %v283 = vpop.f32.mrf.mxu0
    %v284 = vadd.f32 %v238, %v283
    %v285 = vpop.f32.mrf.mxu0
    %286 = vmatprep.mubr.bf16.mxu0 0
    %287 = vmatmul.mubr.bf16.gmra.mxu0 %v147
    %v288 = vpop.f32.mrf.mxu0
    %v289 = vadd.f32 %v238, %v288
    %v290 = vpop.f32.mrf.mxu0
    %v291 = vpop.f32.mrf.mxu0
    %v292 = vadd.f32 %v238, %v291
    %v293 = vpop.f32.mrf.mxu0
    %294 = vmatprep.mubr.bf16.mxu0 0
    %295 = vmatmul.mubr.bf16.gmra.mxu0 %v150
    %v296 = vpop.f32.mrf.mxu0
    %v297 = vadd.f32 %v238, %v296
    %v298 = vpop.f32.mrf.mxu0
    %v299 = vpop.f32.mrf.mxu0
    %v300 = vadd.f32 %v238, %v299
    %v301 = vpop.f32.mrf.mxu0
    %302 = vmatprep.mubr.bf16.mxu0 0
    %303 = vmatmul.mubr.bf16.gmra.mxu0 %v153
    %v304 = vpop.f32.mrf.mxu0
    %v305 = vadd.f32 %v238, %v304
    %v306 = vpop.f32.mrf.mxu0
    %v307 = vpop.f32.mrf.mxu0
    %v308 = vadd.f32 %v238, %v307
    %v309 = vpop.f32.mrf.mxu0
    %310 = vdwg.mxu0
    %311 = vst.msk [vmem:[#allocation3] sm:$0xff] %vm220, %v281
    %312 = vst.msk [vmem:[#allocation3 + $0x8] sm:$0xff] %vm220, %v284
    %313 = vst.msk [vmem:[#allocation3 + $0x10] sm:$0xff] %vm220, %v289
    %314 = vst.msk [vmem:[#allocation3 + $0x18] sm:$0xff] %vm220, %v292
    %315 = vst.msk [vmem:[#allocation3 + $0x20] sm:$0xff] %vm220, %v297
    %316 = vst.msk [vmem:[#allocation3 + $0x28] sm:$0xff] %vm220, %v300
    %317 = vst.msk [vmem:[#allocation3 + $0x30] sm:$0xff] %vm220, %v305
    %318 = vst.msk [vmem:[#allocation3 + $0x38] sm:$0xff] %vm220, %v308
    %s319 = scalar_lea.vmem [#allocation7], 16
    %v320 = vld [vmem:[%s319] sm:$0xf]
    %v321 = vld [vmem:[%s319 + $0x4] sm:$0xf]
    %s322 = scalar_lea.vmem [#allocation9], 2
    %v323 = vld [vmem:[%s322] sm:$0x1]
    %v325 = vlaneseq
    %v326 = vshrl.u32 %v325, 7
    %v327 = vsub.s32 0, %v326
    %v328 = vrot.slane %v323, %v327
    %v332 = vunpack.c.l.b16 %v320
    %v333 = vunpack.c.l.b16 %v321
    %v334 = vpack.c.b16 %v333, %v332
    %336 = vmatprep.subr.bf16.mxu0 0
    %337 = vmatpush1.bf16.msra.mxu0 0
    %338 = vmatprep.subr.bf16.mxu0 0
    %339 = vmatpush1.bf16.msra.mxu0 0
    %340 = vmatprep.subr.bf16.mxu0 0
    %341 = vmatpush1.bf16.msra.mxu0 0
    %342 = vmatprep.subr.bf16.mxu0 0
    %343 = vmatpush1.bf16.msra.mxu0 0
    %344 = vmatprep.subr.bf16.mxu0 0
    %345 = vmatpush1.bf16.msra.mxu0 0
    %346 = vmatprep.subr.bf16.mxu0 0
    %347 = vmatpush1.bf16.msra.mxu0 0
    %348 = vmatprep.subr.bf16.mxu0 0
    %349 = vmatpush1.bf16.msra.mxu0 0
    %350 = vmatprep.subr.bf16.mxu0 0
    %351 = vmatpush1.bf16.msra.mxu0 %v334
    %352 = vmatprep.subr.bf16.mxu0 0
    %353 = vmatpush2.bf16.msra.mxu0 0
    %354 = vmatprep.subr.bf16.mxu0 0
    %355 = vmatpush2.bf16.msra.mxu0 0
    %356 = vmatprep.subr.bf16.mxu0 0
    %357 = vmatpush2.bf16.msra.mxu0 0
    %358 = vmatprep.subr.bf16.mxu0 0
    %359 = vmatpush2.bf16.msra.mxu0 0
    %360 = vmatprep.subr.bf16.mxu0 0
    %361 = vmatpush2.bf16.msra.mxu0 0
    %362 = vmatprep.subr.bf16.mxu0 0
    %363 = vmatpush2.bf16.msra.mxu0 0
    %364 = vmatprep.subr.bf16.mxu0 0
    %365 = vmatpush2.bf16.msra.mxu0 0
    %366 = vmatprep.subr.bf16.mxu0 0
    %367 = vmatpush2.bf16.msra.mxu0 0
    %368 = vmatprep.mubr.bf16.mxu0 0
    %369 = vmatmul.mubr.bf16.gmra.mxu0 %v144
    %v370 = vpop.f32.mrf.mxu0
    %v371 = vadd.f32 %v328, %v370
    %v372 = vpop.f32.mrf.mxu0
    %v373 = vpop.f32.mrf.mxu0
    %v374 = vadd.f32 %v328, %v373
    %v375 = vpop.f32.mrf.mxu0
    %376 = vmatprep.mubr.bf16.mxu0 0
    %377 = vmatmul.mubr.bf16.gmra.mxu0 %v147
    %v378 = vpop.f32.mrf.mxu0
    %v379 = vadd.f32 %v328, %v378
    %v380 = vpop.f32.mrf.mxu0
    %v381 = vpop.f32.mrf.mxu0
    %v382 = vadd.f32 %v328, %v381
    %v383 = vpop.f32.mrf.mxu0
    %384 = vmatprep.mubr.bf16.mxu0 0
    %385 = vmatmul.mubr.bf16.gmra.mxu0 %v150
    %v386 = vpop.f32.mrf.mxu0
    %v387 = vadd.f32 %v328, %v386
    %v388 = vpop.f32.mrf.mxu0
    %v389 = vpop.f32.mrf.mxu0
    %v390 = vadd.f32 %v328, %v389
    %v391 = vpop.f32.mrf.mxu0
    %392 = vmatprep.mubr.bf16.mxu0 0
    %393 = vmatmul.mubr.bf16.gmra.mxu0 %v153
    %v394 = vpop.f32.mrf.mxu0
    %v395 = vadd.f32 %v328, %v394
    %v396 = vpop.f32.mrf.mxu0
    %v397 = vpop.f32.mrf.mxu0
    %v398 = vadd.f32 %v328, %v397
    %v399 = vpop.f32.mrf.mxu0
    %400 = vdwg.mxu0
    %401 = vst.msk [vmem:[#allocation4] sm:$0xff] %vm220, %v371
    %402 = vst.msk [vmem:[#allocation4 + $0x8] sm:$0xff] %vm220, %v374
    %403 = vst.msk [vmem:[#allocation4 + $0x10] sm:$0xff] %vm220, %v379
    %404 = vst.msk [vmem:[#allocation4 + $0x18] sm:$0xff] %vm220, %v382
    %405 = vst.msk [vmem:[#allocation4 + $0x20] sm:$0xff] %vm220, %v387
    %406 = vst.msk [vmem:[#allocation4 + $0x28] sm:$0xff] %vm220, %v390
    %407 = vst.msk [vmem:[#allocation4 + $0x30] sm:$0xff] %vm220, %v395
    %408 = vst.msk [vmem:[#allocation4 + $0x38] sm:$0xff] %vm220, %v398
    %s409 = scalar_lea.vmem [#allocation7], 24
    %v410 = vld [vmem:[%s409] sm:$0xf]
    %v411 = vld [vmem:[%s409 + $0x4] sm:$0xf]
    %s412 = scalar_lea.vmem [#allocation9], 3
    %v413 = vld [vmem:[%s412] sm:$0x1]
    %v415 = vlaneseq
    %v416 = vshrl.u32 %v415, 7
    %v417 = vsub.s32 0, %v416
    %v418 = vrot.slane %v413, %v417
    %v422 = vunpack.c.l.b16 %v410
    %v423 = vunpack.c.l.b16 %v411
    %v424 = vpack.c.b16 %v423, %v422
    %426 = vmatprep.subr.bf16.mxu0 0
    %427 = vmatpush1.bf16.msra.mxu0 0
    %428 = vmatprep.subr.bf16.mxu0 0
    %429 = vmatpush1.bf16.msra.mxu0 0
    %430 = vmatprep.subr.bf16.mxu0 0
    %431 = vmatpush1.bf16.msra.mxu0 0
    %432 = vmatprep.subr.bf16.mxu0 0
    %433 = vmatpush1.bf16.msra.mxu0 0
    %434 = vmatprep.subr.bf16.mxu0 0
    %435 = vmatpush1.bf16.msra.mxu0 0
    %436 = vmatprep.subr.bf16.mxu0 0
    %437 = vmatpush1.bf16.msra.mxu0 0
    %438 = vmatprep.subr.bf16.mxu0 0
    %439 = vmatpush1.bf16.msra.mxu0 0
    %440 = vmatprep.subr.bf16.mxu0 0
    %441 = vmatpush1.bf16.msra.mxu0 %v424
    %442 = vmatprep.subr.bf16.mxu0 0
    %443 = vmatpush2.bf16.msra.mxu0 0
    %444 = vmatprep.subr.bf16.mxu0 0
    %445 = vmatpush2.bf16.msra.mxu0 0
    %446 = vmatprep.subr.bf16.mxu0 0
    %447 = vmatpush2.bf16.msra.mxu0 0
    %448 = vmatprep.subr.bf16.mxu0 0
    %449 = vmatpush2.bf16.msra.mxu0 0
    %450 = vmatprep.subr.bf16.mxu0 0
    %451 = vmatpush2.bf16.msra.mxu0 0
    %452 = vmatprep.subr.bf16.mxu0 0
    %453 = vmatpush2.bf16.msra.mxu0 0
    %454 = vmatprep.subr.bf16.mxu0 0
    %455 = vmatpush2.bf16.msra.mxu0 0
    %456 = vmatprep.subr.bf16.mxu0 0
    %457 = vmatpush2.bf16.msra.mxu0 0
    %458 = vmatprep.mubr.bf16.mxu0 0
    %459 = vmatmul.mubr.bf16.gmra.mxu0 %v144
    %v460 = vpop.f32.mrf.mxu0
    %v461 = vadd.f32 %v418, %v460
    %v462 = vpop.f32.mrf.mxu0
    %v463 = vpop.f32.mrf.mxu0
    %v464 = vadd.f32 %v418, %v463
    %v465 = vpop.f32.mrf.mxu0
    %466 = vmatprep.mubr.bf16.mxu0 0
    %467 = vmatmul.mubr.bf16.gmra.mxu0 %v147
    %v468 = vpop.f32.mrf.mxu0
    %v469 = vadd.f32 %v418, %v468
    %v470 = vpop.f32.mrf.mxu0
    %v471 = vpop.f32.mrf.mxu0
    %v472 = vadd.f32 %v418, %v471
    %v473 = vpop.f32.mrf.mxu0
    %474 = vmatprep.mubr.bf16.mxu0 0
    %475 = vmatmul.mubr.bf16.gmra.mxu0 %v150
    %v476 = vpop.f32.mrf.mxu0
    %v477 = vadd.f32 %v418, %v476
    %v478 = vpop.f32.mrf.mxu0
    %v479 = vpop.f32.mrf.mxu0
    %v480 = vadd.f32 %v418, %v479
    %v481 = vpop.f32.mrf.mxu0
    %482 = vmatprep.mubr.bf16.mxu0 0
    %483 = vmatmul.mubr.bf16.gmra.mxu0 %v153
    %v484 = vpop.f32.mrf.mxu0
    %v485 = vadd.f32 %v418, %v484
    %v486 = vpop.f32.mrf.mxu0
    %v487 = vpop.f32.mrf.mxu0
    %v488 = vadd.f32 %v418, %v487
    %v489 = vpop.f32.mrf.mxu0
    %490 = vdwg.mxu0
    %491 = vst.msk [vmem:[#allocation5] sm:$0xff] %vm220, %v461
    %492 = vst.msk [vmem:[#allocation5 + $0x8] sm:$0xff] %vm220, %v464
    %493 = vst.msk [vmem:[#allocation5 + $0x10] sm:$0xff] %vm220, %v469
    %494 = vst.msk [vmem:[#allocation5 + $0x18] sm:$0xff] %vm220, %v472
    %495 = vst.msk [vmem:[#allocation5 + $0x20] sm:$0xff] %vm220, %v477
    %496 = vst.msk [vmem:[#allocation5 + $0x28] sm:$0xff] %vm220, %v480
    %497 = vst.msk [vmem:[#allocation5 + $0x30] sm:$0xff] %vm220, %v485
    %498 = vst.msk [vmem:[#allocation5 + $0x38] sm:$0xff] %vm220, %v488
    %v499 = vld [vmem:[%s2] sm:$0xf]
    %v500 = vld [vmem:[%s2 + $0x4] sm:$0xf]
    %v501 = vld [vmem:[%s2 + $0x8] sm:$0xf]
    %v502 = vld [vmem:[%s2 + $0xc] sm:$0xf]
    %s503 = scalar_lea.vmem %s2, 16
    %v504 = vld [vmem:[%s503] sm:$0xf]
    %v505 = vld [vmem:[%s503 + $0x4] sm:$0xf]
    %v506 = vld [vmem:[%s503 + $0x8] sm:$0xf]
    %v507 = vld [vmem:[%s503 + $0xc] sm:$0xf]
    %s508 = scalar_lea.vmem %s2, 32
    %v509 = vld [vmem:[%s508] sm:$0xf]
    %v510 = vld [vmem:[%s508 + $0x4] sm:$0xf]
    %v511 = vld [vmem:[%s508 + $0x8] sm:$0xf]
    %v512 = vld [vmem:[%s508 + $0xc] sm:$0xf]
    %s513 = scalar_lea.vmem %s2, 48
    %v514 = vld [vmem:[%s513] sm:$0xf]
    %v515 = vld [vmem:[%s513 + $0x4] sm:$0xf]
    %v516 = vld [vmem:[%s513 + $0x8] sm:$0xf]
    %v517 = vld [vmem:[%s513 + $0xc] sm:$0xf]
    %v518 = vld [vmem:[#allocation2] sm:$0xff]
    %v523 = vunpack.c.l.b16 %v499
    %v524 = vunpack.c.l.b16 %v500
    %v525 = vunpack.c.l.b16 %v501
    %v526 = vunpack.c.l.b16 %v502
    %v527 = vpack.c.b16 %v524, %v523
    %v528 = vpack.c.b16 %v526, %v525
    %v532 = vsel %vm220, 0, 0
    %534 = vmatprep.subr.bf16.mxu0 0
    %535 = vmatpush1.bf16.msra.mxu0 0
    %536 = vmatprep.subr.bf16.mxu0 0
    %537 = vmatpush1.bf16.msra.mxu0 0
    %538 = vmatprep.subr.bf16.mxu0 0
    %539 = vmatpush1.bf16.msra.mxu0 0
    %540 = vmatprep.subr.bf16.mxu0 0
    %541 = vmatpush1.bf16.msra.mxu0 0
    %542 = vmatprep.subr.bf16.mxu0 0
    %543 = vmatpush1.bf16.msra.mxu0 0
    %544 = vmatprep.subr.bf16.mxu0 0
    %545 = vmatpush1.bf16.msra.mxu0 0
    %546 = vmatprep.subr.bf16.mxu0 0
    %547 = vmatpush1.bf16.msra.mxu0 %v528
    %548 = vmatprep.subr.bf16.mxu0 0
    %549 = vmatpush1.bf16.msra.mxu0 %v527
    %550 = vmatprep.subr.bf16.mxu0 0
    %551 = vmatpush2.bf16.msra.mxu0 0
    %552 = vmatprep.subr.bf16.mxu0 0
    %553 = vmatpush2.bf16.msra.mxu0 0
    %554 = vmatprep.subr.bf16.mxu0 0
    %555 = vmatpush2.bf16.msra.mxu0 0
    %556 = vmatprep.subr.bf16.mxu0 0
    %557 = vmatpush2.bf16.msra.mxu0 0
    %558 = vmatprep.subr.bf16.mxu0 0
    %559 = vmatpush2.bf16.msra.mxu0 0
    %560 = vmatprep.subr.bf16.mxu0 0
    %561 = vmatpush2.bf16.msra.mxu0 0
    %562 = vmatprep.subr.bf16.mxu0 0
    %563 = vmatpush2.bf16.msra.mxu0 0
    %564 = vmatprep.subr.bf16.mxu0 0
    %565 = vmatpush2.bf16.msra.mxu0 0
    %566 = vmatprep.mubr.bf16.mxu0 0
    %567 = vmatmul.mubr.bf16.gmra.mxu0 %v532
    %v568 = vpop.f32.mrf.mxu0
    %v569 = vadd.f32 0.0, %v568
    %v570 = vpop.f32.mrf.mxu0
    %v571 = vpop.f32.mrf.mxu0
    %v572 = vpop.f32.mrf.mxu0
    %573 = vdwg.mxu0
    %v574 = vadd.f32 %v518, %v569
    %v575 = vld [vmem:[#allocation3] sm:$0xff]
    %v580 = vunpack.c.l.b16 %v504
    %v581 = vunpack.c.l.b16 %v505
    %v582 = vunpack.c.l.b16 %v506
    %v583 = vunpack.c.l.b16 %v507
    %v584 = vpack.c.b16 %v581, %v580
    %v585 = vpack.c.b16 %v583, %v582
    %588 = vmatprep.subr.bf16.mxu0 0
    %589 = vmatpush1.bf16.msra.mxu0 0
    %590 = vmatprep.subr.bf16.mxu0 0
    %591 = vmatpush1.bf16.msra.mxu0 0
    %592 = vmatprep.subr.bf16.mxu0 0
    %593 = vmatpush1.bf16.msra.mxu0 0
    %594 = vmatprep.subr.bf16.mxu0 0
    %595 = vmatpush1.bf16.msra.mxu0 0
    %596 = vmatprep.subr.bf16.mxu0 0
    %597 = vmatpush1.bf16.msra.mxu0 0
    %598 = vmatprep.subr.bf16.mxu0 0
    %599 = vmatpush1.bf16.msra.mxu0 0
    %600 = vmatprep.subr.bf16.mxu0 0
    %601 = vmatpush1.bf16.msra.mxu0 %v585
    %602 = vmatprep.subr.bf16.mxu0 0
    %603 = vmatpush1.bf16.msra.mxu0 %v584
    %604 = vmatprep.subr.bf16.mxu0 0
    %605 = vmatpush2.bf16.msra.mxu0 0
    %606 = vmatprep.subr.bf16.mxu0 0
    %607 = vmatpush2.bf16.msra.mxu0 0
    %608 = vmatprep.subr.bf16.mxu0 0
    %609 = vmatpush2.bf16.msra.mxu0 0
    %610 = vmatprep.subr.bf16.mxu0 0
    %611 = vmatpush2.bf16.msra.mxu0 0
    %612 = vmatprep.subr.bf16.mxu0 0
    %613 = vmatpush2.bf16.msra.mxu0 0
    %614 = vmatprep.subr.bf16.mxu0 0
    %615 = vmatpush2.bf16.msra.mxu0 0
    %616 = vmatprep.subr.bf16.mxu0 0
    %617 = vmatpush2.bf16.msra.mxu0 0
    %618 = vmatprep.subr.bf16.mxu0 0
    %619 = vmatpush2.bf16.msra.mxu0 0
    %620 = vmatprep.mubr.bf16.mxu0 0
    %621 = vmatmul.mubr.bf16.gmra.mxu0 %v532
    %v622 = vpop.f32.mrf.mxu0
    %v623 = vadd.f32 0.0, %v622
    %v624 = vpop.f32.mrf.mxu0
    %v625 = vpop.f32.mrf.mxu0
    %v626 = vpop.f32.mrf.mxu0
    %627 = vdwg.mxu0
    %v628 = vadd.f32 %v575, %v623
    %v629 = vld [vmem:[#allocation4] sm:$0xff]
    %v634 = vunpack.c.l.b16 %v509
    %v635 = vunpack.c.l.b16 %v510
    %v636 = vunpack.c.l.b16 %v511
    %v637 = vunpack.c.l.b16 %v512
    %v638 = vpack.c.b16 %v635, %v634
    %v639 = vpack.c.b16 %v637, %v636
    %642 = vmatprep.subr.bf16.mxu0 0
    %643 = vmatpush1.bf16.msra.mxu0 0
    %644 = vmatprep.subr.bf16.mxu0 0
    %645 = vmatpush1.bf16.msra.mxu0 0
    %646 = vmatprep.subr.bf16.mxu0 0
    %647 = vmatpush1.bf16.msra.mxu0 0
    %648 = vmatprep.subr.bf16.mxu0 0
    %649 = vmatpush1.bf16.msra.mxu0 0
    %650 = vmatprep.subr.bf16.mxu0 0
    %651 = vmatpush1.bf16.msra.mxu0 0
    %652 = vmatprep.subr.bf16.mxu0 0
    %653 = vmatpush1.bf16.msra.mxu0 0
    %654 = vmatprep.subr.bf16.mxu0 0
    %655 = vmatpush1.bf16.msra.mxu0 %v639
    %656 = vmatprep.subr.bf16.mxu0 0
    %657 = vmatpush1.bf16.msra.mxu0 %v638
    %658 = vmatprep.subr.bf16.mxu0 0
    %659 = vmatpush2.bf16.msra.mxu0 0
    %660 = vmatprep.subr.bf16.mxu0 0
    %661 = vmatpush2.bf16.msra.mxu0 0
    %662 = vmatprep.subr.bf16.mxu0 0
    %663 = vmatpush2.bf16.msra.mxu0 0
    %664 = vmatprep.subr.bf16.mxu0 0
    %665 = vmatpush2.bf16.msra.mxu0 0
    %666 = vmatprep.subr.bf16.mxu0 0
    %667 = vmatpush2.bf16.msra.mxu0 0
    %668 = vmatprep.subr.bf16.mxu0 0
    %669 = vmatpush2.bf16.msra.mxu0 0
    %670 = vmatprep.subr.bf16.mxu0 0
    %671 = vmatpush2.bf16.msra.mxu0 0
    %672 = vmatprep.subr.bf16.mxu0 0
    %673 = vmatpush2.bf16.msra.mxu0 0
    %674 = vmatprep.mubr.bf16.mxu0 0
    %675 = vmatmul.mubr.bf16.gmra.mxu0 %v532
    %v676 = vpop.f32.mrf.mxu0
    %v677 = vadd.f32 0.0, %v676
    %v678 = vpop.f32.mrf.mxu0
    %v679 = vpop.f32.mrf.mxu0
    %v680 = vpop.f32.mrf.mxu0
    %681 = vdwg.mxu0
    %v682 = vadd.f32 %v629, %v677
    %v683 = vld [vmem:[#allocation5] sm:$0xff]
    %v688 = vunpack.c.l.b16 %v514
    %v689 = vunpack.c.l.b16 %v515
    %v690 = vunpack.c.l.b16 %v516
    %v691 = vunpack.c.l.b16 %v517
    %v692 = vpack.c.b16 %v689, %v688
    %v693 = vpack.c.b16 %v691, %v690
    %696 = vmatprep.subr.bf16.mxu0 0
    %697 = vmatpush1.bf16.msra.mxu0 0
    %698 = vmatprep.subr.bf16.mxu0 0
    %699 = vmatpush1.bf16.msra.mxu0 0
    %700 = vmatprep.subr.bf16.mxu0 0
    %701 = vmatpush1.bf16.msra.mxu0 0
    %702 = vmatprep.subr.bf16.mxu0 0
    %703 = vmatpush1.bf16.msra.mxu0 0
    %704 = vmatprep.subr.bf16.mxu0 0
    %705 = vmatpush1.bf16.msra.mxu0 0
    %706 = vmatprep.subr.bf16.mxu0 0
    %707 = vmatpush1.bf16.msra.mxu0 0
    %708 = vmatprep.subr.bf16.mxu0 0
    %709 = vmatpush1.bf16.msra.mxu0 %v693
    %710 = vmatprep.subr.bf16.mxu0 0
    %711 = vmatpush1.bf16.msra.mxu0 %v692
    %712 = vmatprep.subr.bf16.mxu0 0
    %713 = vmatpush2.bf16.msra.mxu0 0
    %714 = vmatprep.subr.bf16.mxu0 0
    %715 = vmatpush2.bf16.msra.mxu0 0
    %716 = vmatprep.subr.bf16.mxu0 0
    %717 = vmatpush2.bf16.msra.mxu0 0
    %718 = vmatprep.subr.bf16.mxu0 0
    %719 = vmatpush2.bf16.msra.mxu0 0
    %720 = vmatprep.subr.bf16.mxu0 0
    %721 = vmatpush2.bf16.msra.mxu0 0
    %722 = vmatprep.subr.bf16.mxu0 0
    %723 = vmatpush2.bf16.msra.mxu0 0
    %724 = vmatprep.subr.bf16.mxu0 0
    %725 = vmatpush2.bf16.msra.mxu0 0
    %726 = vmatprep.subr.bf16.mxu0 0
    %727 = vmatpush2.bf16.msra.mxu0 0
    %728 = vmatprep.mubr.bf16.mxu0 0
    %729 = vmatmul.mubr.bf16.gmra.mxu0 %v532
    %v730 = vpop.f32.mrf.mxu0
    %v731 = vadd.f32 0.0, %v730
    %v732 = vpop.f32.mrf.mxu0
    %v733 = vpop.f32.mrf.mxu0
    %v734 = vpop.f32.mrf.mxu0
    %735 = vdwg.mxu0
    %v736 = vadd.f32 %v683, %v731
    %v737 = vxor.u32 %v574, 2147483648
    %v738 = vmul.f32 %v737, 1.442695
    %v739 = vpow.pop %v738
    %v740 = vadd.f32 %v739, 1.0
    %v741 = vrcp.pop %v740
    %v742 = vmul.f32 1.0, %v741
    %v743 = vxor.u32 %v628, 2147483648
    %v744 = vmul.f32 %v743, 1.442695
    %v745 = vpow.pop %v744
    %v746 = vadd.f32 %v745, 1.0
    %v747 = vrcp.pop %v746
    %v748 = vmul.f32 1.0, %v747
    %v749 = vtanh.pop %v682
    %v750 = vxor.u32 %v736, 2147483648
    %v751 = vmul.f32 %v750, 1.442695
    %v752 = vpow.pop %v751
    %v753 = vadd.f32 %v752, 1.0
    %v754 = vrcp.pop %v753
    %v755 = vmul.f32 1.0, %v754
    %v756 = vmul.f32 %v748, 0.0
    %v757 = vmul.f32 %v742, %v749
    %v758 = vadd.f32 %v756, %v757
    %v759 = vtanh.pop %v758
    %v760 = vmul.f32 %v755, %v759
    %761 = vst.msk [vmem:[#allocation6] sm:$0xff] %vm220, %v760
    %v762 = vpack.c.bf16 %v760, %v760
    %v763 = vld [vmem:[#allocation2 + $0x8] sm:$0xff]
    %v765 = vsel %vm220, %v762, 0
    %767 = vmatprep.subr.bf16.mxu0 0
    %768 = vmatpush1.bf16.msra.mxu0 0
    %769 = vmatprep.subr.bf16.mxu0 0
    %770 = vmatpush1.bf16.msra.mxu0 0
    %771 = vmatprep.subr.bf16.mxu0 0
    %772 = vmatpush1.bf16.msra.mxu0 0
    %773 = vmatprep.subr.bf16.mxu0 0
    %774 = vmatpush1.bf16.msra.mxu0 0
    %775 = vmatprep.subr.bf16.mxu0 0
    %776 = vmatpush1.bf16.msra.mxu0 0
    %777 = vmatprep.subr.bf16.mxu0 0
    %778 = vmatpush1.bf16.msra.mxu0 0
    %779 = vmatprep.subr.bf16.mxu0 0
    %780 = vmatpush1.bf16.msra.mxu0 %v528
    %781 = vmatprep.subr.bf16.mxu0 0
    %782 = vmatpush1.bf16.msra.mxu0 %v527
    %783 = vmatprep.subr.bf16.mxu0 0
    %784 = vmatpush2.bf16.msra.mxu0 0
    %785 = vmatprep.subr.bf16.mxu0 0
    %786 = vmatpush2.bf16.msra.mxu0 0
    %787 = vmatprep.subr.bf16.mxu0 0
    %788 = vmatpush2.bf16.msra.mxu0 0
    %789 = vmatprep.subr.bf16.mxu0 0
    %790 = vmatpush2.bf16.msra.mxu0 0
    %791 = vmatprep.subr.bf16.mxu0 0
    %792 = vmatpush2.bf16.msra.mxu0 0
    %793 = vmatprep.subr.bf16.mxu0 0
    %794 = vmatpush2.bf16.msra.mxu0 0
    %795 = vmatprep.subr.bf16.mxu0 0
    %796 = vmatpush2.bf16.msra.mxu0 0
    %797 = vmatprep.subr.bf16.mxu0 0
    %798 = vmatpush2.bf16.msra.mxu0 0
    %799 = vmatprep.mubr.bf16.mxu0 0
    %800 = vmatmul.mubr.bf16.gmra.mxu0 %v765
    %v801 = vpop.f32.mrf.mxu0
    %v802 = vadd.f32 0.0, %v801
    %v803 = vpop.f32.mrf.mxu0
    %v804 = vpop.f32.mrf.mxu0
    %v805 = vpop.f32.mrf.mxu0
    %806 = vdwg.mxu0
    %v807 = vadd.f32 %v763, %v802
    %v808 = vld [vmem:[#allocation3 + $0x8] sm:$0xff]
    %809 = vmatprep.subr.bf16.mxu0 0
    %810 = vmatpush1.bf16.msra.mxu0 0
    %811 = vmatprep.subr.bf16.mxu0 0
    %812 = vmatpush1.bf16.msra.mxu0 0
    %813 = vmatprep.subr.bf16.mxu0 0
    %814 = vmatpush1.bf16.msra.mxu0 0
    %815 = vmatprep.subr.bf16.mxu0 0
    %816 = vmatpush1.bf16.msra.mxu0 0
    %817 = vmatprep.subr.bf16.mxu0 0
    %818 = vmatpush1.bf16.msra.mxu0 0
    %819 = vmatprep.subr.bf16.mxu0 0
    %820 = vmatpush1.bf16.msra.mxu0 0
    %821 = vmatprep.subr.bf16.mxu0 0
    %822 = vmatpush1.bf16.msra.mxu0 %v585
    %823 = vmatprep.subr.bf16.mxu0 0
    %824 = vmatpush1.bf16.msra.mxu0 %v584
    %825 = vmatprep.subr.bf16.mxu0 0
    %826 = vmatpush2.bf16.msra.mxu0 0
    %827 = vmatprep.subr.bf16.mxu0 0
    %828 = vmatpush2.bf16.msra.mxu0 0
    %829 = vmatprep.subr.bf16.mxu0 0
    %830 = vmatpush2.bf16.msra.mxu0 0
    %831 = vmatprep.subr.bf16.mxu0 0
    %832 = vmatpush2.bf16.msra.mxu0 0
    %833 = vmatprep.subr.bf16.mxu0 0
    %834 = vmatpush2.bf16.msra.mxu0 0
    %835 = vmatprep.subr.bf16.mxu0 0
    %836 = vmatpush2.bf16.msra.mxu0 0
    %837 = vmatprep.subr.bf16.mxu0 0
    %838 = vmatpush2.bf16.msra.mxu0 0
    %839 = vmatprep.subr.bf16.mxu0 0
    %840 = vmatpush2.bf16.msra.mxu0 0
    %841 = vmatprep.mubr.bf16.mxu0 0
    %842 = vmatmul.mubr.bf16.gmra.mxu0 %v765
    %v843 = vpop.f32.mrf.mxu0
    %v844 = vadd.f32 0.0, %v843
    %v845 = vpop.f32.mrf.mxu0
    %v846 = vpop.f32.mrf.mxu0
    %v847 = vpop.f32.mrf.mxu0
    %848 = vdwg.mxu0
    %v849 = vadd.f32 %v808, %v844
    %v850 = vld [vmem:[#allocation4 + $0x8] sm:$0xff]
    %851 = vmatprep.subr.bf16.mxu0 0
    %852 = vmatpush1.bf16.msra.mxu0 0
    %853 = vmatprep.subr.bf16.mxu0 0
    %854 = vmatpush1.bf16.msra.mxu0 0
    %855 = vmatprep.subr.bf16.mxu0 0
    %856 = vmatpush1.bf16.msra.mxu0 0
    %857 = vmatprep.subr.bf16.mxu0 0
    %858 = vmatpush1.bf16.msra.mxu0 0
    %859 = vmatprep.subr.bf16.mxu0 0
    %860 = vmatpush1.bf16.msra.mxu0 0
    %861 = vmatprep.subr.bf16.mxu0 0
    %862 = vmatpush1.bf16.msra.mxu0 0
    %863 = vmatprep.subr.bf16.mxu0 0
    %864 = vmatpush1.bf16.msra.mxu0 %v639
    %865 = vmatprep.subr.bf16.mxu0 0
    %866 = vmatpush1.bf16.msra.mxu0 %v638
    %867 = vmatprep.subr.bf16.mxu0 0
    %868 = vmatpush2.bf16.msra.mxu0 0
    %869 = vmatprep.subr.bf16.mxu0 0
    %870 = vmatpush2.bf16.msra.mxu0 0
    %871 = vmatprep.subr.bf16.mxu0 0
    %872 = vmatpush2.bf16.msra.mxu0 0
    %873 = vmatprep.subr.bf16.mxu0 0
    %874 = vmatpush2.bf16.msra.mxu0 0
    %875 = vmatprep.subr.bf16.mxu0 0
    %876 = vmatpush2.bf16.msra.mxu0 0
    %877 = vmatprep.subr.bf16.mxu0 0
    %878 = vmatpush2.bf16.msra.mxu0 0
    %879 = vmatprep.subr.bf16.mxu0 0
    %880 = vmatpush2.bf16.msra.mxu0 0
    %881 = vmatprep.subr.bf16.mxu0 0
    %882 = vmatpush2.bf16.msra.mxu0 0
    %883 = vmatprep.mubr.bf16.mxu0 0
    %884 = vmatmul.mubr.bf16.gmra.mxu0 %v765
    %v885 = vpop.f32.mrf.mxu0
    %v886 = vadd.f32 0.0, %v885
    %v887 = vpop.f32.mrf.mxu0
    %v888 = vpop.f32.mrf.mxu0
    %v889 = vpop.f32.mrf.mxu0
    %890 = vdwg.mxu0
    %v891 = vadd.f32 %v850, %v886
    %v892 = vld [vmem:[#allocation5 + $0x8] sm:$0xff]
    %893 = vmatprep.subr.bf16.mxu0 0
    %894 = vmatpush1.bf16.msra.mxu0 0
    %895 = vmatprep.subr.bf16.mxu0 0
    %896 = vmatpush1.bf16.msra.mxu0 0
    %897 = vmatprep.subr.bf16.mxu0 0
    %898 = vmatpush1.bf16.msra.mxu0 0
    %899 = vmatprep.subr.bf16.mxu0 0
    %900 = vmatpush1.bf16.msra.mxu0 0
    %901 = vmatprep.subr.bf16.mxu0 0
    %902 = vmatpush1.bf16.msra.mxu0 0
    %903 = vmatprep.subr.bf16.mxu0 0
    %904 = vmatpush1.bf16.msra.mxu0 0
    %905 = vmatprep.subr.bf16.mxu0 0
    %906 = vmatpush1.bf16.msra.mxu0 %v693
    %907 = vmatprep.subr.bf16.mxu0 0
    %908 = vmatpush1.bf16.msra.mxu0 %v692
    %909 = vmatprep.subr.bf16.mxu0 0
    %910 = vmatpush2.bf16.msra.mxu0 0
    %911 = vmatprep.subr.bf16.mxu0 0
    %912 = vmatpush2.bf16.msra.mxu0 0
    %913 = vmatprep.subr.bf16.mxu0 0
    %914 = vmatpush2.bf16.msra.mxu0 0
    %915 = vmatprep.subr.bf16.mxu0 0
    %916 = vmatpush2.bf16.msra.mxu0 0
    %917 = vmatprep.subr.bf16.mxu0 0
    %918 = vmatpush2.bf16.msra.mxu0 0
    %919 = vmatprep.subr.bf16.mxu0 0
    %920 = vmatpush2.bf16.msra.mxu0 0
    %921 = vmatprep.subr.bf16.mxu0 0
    %922 = vmatpush2.bf16.msra.mxu0 0
    %923 = vmatprep.subr.bf16.mxu0 0
    %924 = vmatpush2.bf16.msra.mxu0 0
    %925 = vmatprep.mubr.bf16.mxu0 0
    %926 = vmatmul.mubr.bf16.gmra.mxu0 %v765
    %v927 = vpop.f32.mrf.mxu0
    %v928 = vadd.f32 0.0, %v927
    %v929 = vpop.f32.mrf.mxu0
    %v930 = vpop.f32.mrf.mxu0
    %v931 = vpop.f32.mrf.mxu0
    %932 = vdwg.mxu0
    %v933 = vadd.f32 %v892, %v928
    %v934 = vxor.u32 %v807, 2147483648
    %v935 = vmul.f32 %v934, 1.442695
    %v936 = vpow.pop %v935
    %v937 = vadd.f32 %v936, 1.0
    %v938 = vrcp.pop %v937
    %v939 = vmul.f32 1.0, %v938
    %v940 = vxor.u32 %v849, 2147483648
    %v941 = vmul.f32 %v940, 1.442695
    %v942 = vpow.pop %v941
    %v943 = vadd.f32 %v942, 1.0
    %v944 = vrcp.pop %v943
    %v945 = vmul.f32 1.0, %v944
    %v946 = vtanh.pop %v891
    %v947 = vxor.u32 %v933, 2147483648
    %v948 = vmul.f32 %v947, 1.442695
    %v949 = vpow.pop %v948
    %v950 = vadd.f32 %v949, 1.0
    %v951 = vrcp.pop %v950
    %v952 = vmul.f32 1.0, %v951
    %v953 = vmul.f32 %v945, %v758
    %v954 = vmul.f32 %v939, %v946
    %v955 = vadd.f32 %v953, %v954
    %v956 = vtanh.pop %v955
    %v957 = vmul.f32 %v952, %v956
    %958 = vst.msk [vmem:[#allocation6 + $0x8] sm:$0xff] %vm220, %v957
    %v959 = vpack.c.bf16 %v957, %v957
    %v960 = vld [vmem:[#allocation2 + $0x10] sm:$0xff]
    %v962 = vsel %vm220, %v959, 0
    %964 = vmatprep.subr.bf16.mxu0 0
    %965 = vmatpush1.bf16.msra.mxu0 0
    %966 = vmatprep.subr.bf16.mxu0 0
    %967 = vmatpush1.bf16.msra.mxu0 0
    %968 = vmatprep.subr.bf16.mxu0 0
    %969 = vmatpush1.bf16.msra.mxu0 0
    %970 = vmatprep.subr.bf16.mxu0 0
    %971 = vmatpush1.bf16.msra.mxu0 0
    %972 = vmatprep.subr.bf16.mxu0 0
    %973 = vmatpush1.bf16.msra.mxu0 0
    %974 = vmatprep.subr.bf16.mxu0 0
    %975 = vmatpush1.bf16.msra.mxu0 0
    %976 = vmatprep.subr.bf16.mxu0 0
    %977 = vmatpush1.bf16.msra.mxu0 %v528
    %978 = vmatprep.subr.bf16.mxu0 0
    %979 = vmatpush1.bf16.msra.mxu0 %v527
    %980 = vmatprep.subr.bf16.mxu0 0
    %981 = vmatpush2.bf16.msra.mxu0 0
    %982 = vmatprep.subr.bf16.mxu0 0
    %983 = vmatpush2.bf16.msra.mxu0 0
    %984 = vmatprep.subr.bf16.mxu0 0
    %985 = vmatpush2.bf16.msra.mxu0 0
    %986 = vmatprep.subr.bf16.mxu0 0
    %987 = vmatpush2.bf16.msra.mxu0 0
    %988 = vmatprep.subr.bf16.mxu0 0
    %989 = vmatpush2.bf16.msra.mxu0 0
    %990 = vmatprep.subr.bf16.mxu0 0
    %991 = vmatpush2.bf16.msra.mxu0 0
    %992 = vmatprep.subr.bf16.mxu0 0
    %993 = vmatpush2.bf16.msra.mxu0 0
    %994 = vmatprep.subr.bf16.mxu0 0
    %995 = vmatpush2.bf16.msra.mxu0 0
    %996 = vmatprep.mubr.bf16.mxu0 0
    %997 = vmatmul.mubr.bf16.gmra.mxu0 %v962
    %v998 = vpop.f32.mrf.mxu0
    %v999 = vadd.f32 0.0, %v998
    %v1000 = vpop.f32.mrf.mxu0
    %v1001 = vpop.f32.mrf.mxu0
    %v1002 = vpop.f32.mrf.mxu0
    %1003 = vdwg.mxu0
    %v1004 = vadd.f32 %v960, %v999
    %v1005 = vld [vmem:[#allocation3 + $0x10] sm:$0xff]
    %1006 = vmatprep.subr.bf16.mxu0 0
    %1007 = vmatpush1.bf16.msra.mxu0 0
    %1008 = vmatprep.subr.bf16.mxu0 0
    %1009 = vmatpush1.bf16.msra.mxu0 0
    %1010 = vmatprep.subr.bf16.mxu0 0
    %1011 = vmatpush1.bf16.msra.mxu0 0
    %1012 = vmatprep.subr.bf16.mxu0 0
    %1013 = vmatpush1.bf16.msra.mxu0 0
    %1014 = vmatprep.subr.bf16.mxu0 0
    %1015 = vmatpush1.bf16.msra.mxu0 0
    %1016 = vmatprep.subr.bf16.mxu0 0
    %1017 = vmatpush1.bf16.msra.mxu0 0
    %1018 = vmatprep.subr.bf16.mxu0 0
    %1019 = vmatpush1.bf16.msra.mxu0 %v585
    %1020 = vmatprep.subr.bf16.mxu0 0
    %1021 = vmatpush1.bf16.msra.mxu0 %v584
    %1022 = vmatprep.subr.bf16.mxu0 0
    %1023 = vmatpush2.bf16.msra.mxu0 0
    %1024 = vmatprep.subr.bf16.mxu0 0
    %1025 = vmatpush2.bf16.msra.mxu0 0
    %1026 = vmatprep.subr.bf16.mxu0 0
    %1027 = vmatpush2.bf16.msra.mxu0 0
    %1028 = vmatprep.subr.bf16.mxu0 0
    %1029 = vmatpush2.bf16.msra.mxu0 0
    %1030 = vmatprep.subr.bf16.mxu0 0
    %1031 = vmatpush2.bf16.msra.mxu0 0
    %1032 = vmatprep.subr.bf16.mxu0 0
    %1033 = vmatpush2.bf16.msra.mxu0 0
    %1034 = vmatprep.subr.bf16.mxu0 0
    %1035 = vmatpush2.bf16.msra.mxu0 0
    %1036 = vmatprep.subr.bf16.mxu0 0
    %1037 = vmatpush2.bf16.msra.mxu0 0
    %1038 = vmatprep.mubr.bf16.mxu0 0
    %1039 = vmatmul.mubr.bf16.gmra.mxu0 %v962
    %v1040 = vpop.f32.mrf.mxu0
    %v1041 = vadd.f32 0.0, %v1040
    %v1042 = vpop.f32.mrf.mxu0
    %v1043 = vpop.f32.mrf.mxu0
    %v1044 = vpop.f32.mrf.mxu0
    %1045 = vdwg.mxu0
    %v1046 = vadd.f32 %v1005, %v1041
    %v1047 = vld [vmem:[#allocation4 + $0x10] sm:$0xff]
    %1048 = vmatprep.subr.bf16.mxu0 0
    %1049 = vmatpush1.bf16.msra.mxu0 0
    %1050 = vmatprep.subr.bf16.mxu0 0
    %1051 = vmatpush1.bf16.msra.mxu0 0
    %1052 = vmatprep.subr.bf16.mxu0 0
    %1053 = vmatpush1.bf16.msra.mxu0 0
    %1054 = vmatprep.subr.bf16.mxu0 0
    %1055 = vmatpush1.bf16.msra.mxu0 0
    %1056 = vmatprep.subr.bf16.mxu0 0
    %1057 = vmatpush1.bf16.msra.mxu0 0
    %1058 = vmatprep.subr.bf16.mxu0 0
    %1059 = vmatpush1.bf16.msra.mxu0 0
    %1060 = vmatprep.subr.bf16.mxu0 0
    %1061 = vmatpush1.bf16.msra.mxu0 %v639
    %1062 = vmatprep.subr.bf16.mxu0 0
    %1063 = vmatpush1.bf16.msra.mxu0 %v638
    %1064 = vmatprep.subr.bf16.mxu0 0
    %1065 = vmatpush2.bf16.msra.mxu0 0
    %1066 = vmatprep.subr.bf16.mxu0 0
    %1067 = vmatpush2.bf16.msra.mxu0 0
    %1068 = vmatprep.subr.bf16.mxu0 0
    %1069 = vmatpush2.bf16.msra.mxu0 0
    %1070 = vmatprep.subr.bf16.mxu0 0
    %1071 = vmatpush2.bf16.msra.mxu0 0
    %1072 = vmatprep.subr.bf16.mxu0 0
    %1073 = vmatpush2.bf16.msra.mxu0 0
    %1074 = vmatprep.subr.bf16.mxu0 0
    %1075 = vmatpush2.bf16.msra.mxu0 0
    %1076 = vmatprep.subr.bf16.mxu0 0
    %1077 = vmatpush2.bf16.msra.mxu0 0
    %1078 = vmatprep.subr.bf16.mxu0 0
    %1079 = vmatpush2.bf16.msra.mxu0 0
    %1080 = vmatprep.mubr.bf16.mxu0 0
    %1081 = vmatmul.mubr.bf16.gmra.mxu0 %v962
    %v1082 = vpop.f32.mrf.mxu0
    %v1083 = vadd.f32 0.0, %v1082
    %v1084 = vpop.f32.mrf.mxu0
    %v1085 = vpop.f32.mrf.mxu0
    %v1086 = vpop.f32.mrf.mxu0
    %1087 = vdwg.mxu0
    %v1088 = vadd.f32 %v1047, %v1083
    %v1089 = vld [vmem:[#allocation5 + $0x10] sm:$0xff]
    %1090 = vmatprep.subr.bf16.mxu0 0
    %1091 = vmatpush1.bf16.msra.mxu0 0
    %1092 = vmatprep.subr.bf16.mxu0 0
    %1093 = vmatpush1.bf16.msra.mxu0 0
    %1094 = vmatprep.subr.bf16.mxu0 0
    %1095 = vmatpush1.bf16.msra.mxu0 0
    %1096 = vmatprep.subr.bf16.mxu0 0
    %1097 = vmatpush1.bf16.msra.mxu0 0
    %1098 = vmatprep.subr.bf16.mxu0 0
    %1099 = vmatpush1.bf16.msra.mxu0 0
    %1100 = vmatprep.subr.bf16.mxu0 0
    %1101 = vmatpush1.bf16.msra.mxu0 0
    %1102 = vmatprep.subr.bf16.mxu0 0
    %1103 = vmatpush1.bf16.msra.mxu0 %v693
    %1104 = vmatprep.subr.bf16.mxu0 0
    %1105 = vmatpush1.bf16.msra.mxu0 %v692
    %1106 = vmatprep.subr.bf16.mxu0 0
    %1107 = vmatpush2.bf16.msra.mxu0 0
    %1108 = vmatprep.subr.bf16.mxu0 0
    %1109 = vmatpush2.bf16.msra.mxu0 0
    %1110 = vmatprep.subr.bf16.mxu0 0
    %1111 = vmatpush2.bf16.msra.mxu0 0
    %1112 = vmatprep.subr.bf16.mxu0 0
    %1113 = vmatpush2.bf16.msra.mxu0 0
    %1114 = vmatprep.subr.bf16.mxu0 0
    %1115 = vmatpush2.bf16.msra.mxu0 0
    %1116 = vmatprep.subr.bf16.mxu0 0
    %1117 = vmatpush2.bf16.msra.mxu0 0
    %1118 = vmatprep.subr.bf16.mxu0 0
    %1119 = vmatpush2.bf16.msra.mxu0 0
    %1120 = vmatprep.subr.bf16.mxu0 0
    %1121 = vmatpush2.bf16.msra.mxu0 0
    %1122 = vmatprep.mubr.bf16.mxu0 0
    %1123 = vmatmul.mubr.bf16.gmra.mxu0 %v962
    %v1124 = vpop.f32.mrf.mxu0
    %v1125 = vadd.f32 0.0, %v1124
    %v1126 = vpop.f32.mrf.mxu0
    %v1127 = vpop.f32.mrf.mxu0
    %v1128 = vpop.f32.mrf.mxu0
    %1129 = vdwg.mxu0
    %v1130 = vadd.f32 %v1089, %v1125
    %v1131 = vxor.u32 %v1004, 2147483648
    %v1132 = vmul.f32 %v1131, 1.442695
    %v1133 = vpow.pop %v1132
    %v1134 = vadd.f32 %v1133, 1.0
    %v1135 = vrcp.pop %v1134
    %v1136 = vmul.f32 1.0, %v1135
    %v1137 = vxor.u32 %v1046, 2147483648
    %v1138 = vmul.f32 %v1137, 1.442695
    %v1139 = vpow.pop %v1138
    %v1140 = vadd.f32 %v1139, 1.0
    %v1141 = vrcp.pop %v1140
    %v1142 = vmul.f32 1.0, %v1141
    %v1143 = vtanh.pop %v1088
    %v1144 = vxor.u32 %v1130, 2147483648
    %v1145 = vmul.f32 %v1144, 1.442695
    %v1146 = vpow.pop %v1145
    %v1147 = vadd.f32 %v1146, 1.0
    %v1148 = vrcp.pop %v1147
    %v1149 = vmul.f32 1.0, %v1148
    %v1150 = vmul.f32 %v1142, %v955
    %v1151 = vmul.f32 %v1136, %v1143
    %v1152 = vadd.f32 %v1150, %v1151
    %v1153 = vtanh.pop %v1152
    %v1154 = vmul.f32 %v1149, %v1153
    %1155 = vst.msk [vmem:[#allocation6 + $0x10] sm:$0xff] %vm220, %v1154
    %v1156 = vpack.c.bf16 %v1154, %v1154
    %v1157 = vld [vmem:[#allocation2 + $0x18] sm:$0xff]
    %v1159 = vsel %vm220, %v1156, 0
    %1161 = vmatprep.subr.bf16.mxu0 0
    %1162 = vmatpush1.bf16.msra.mxu0 0
    %1163 = vmatprep.subr.bf16.mxu0 0
    %1164 = vmatpush1.bf16.msra.mxu0 0
    %1165 = vmatprep.subr.bf16.mxu0 0
    %1166 = vmatpush1.bf16.msra.mxu0 0
    %1167 = vmatprep.subr.bf16.mxu0 0
    %1168 = vmatpush1.bf16.msra.mxu0 0
    %1169 = vmatprep.subr.bf16.mxu0 0
    %1170 = vmatpush1.bf16.msra.mxu0 0
    %1171 = vmatprep.subr.bf16.mxu0 0
    %1172 = vmatpush1.bf16.msra.mxu0 0
    %1173 = vmatprep.subr.bf16.mxu0 0
    %1174 = vmatpush1.bf16.msra.mxu0 %v528
    %1175 = vmatprep.subr.bf16.mxu0 0
    %1176 = vmatpush1.bf16.msra.mxu0 %v527
    %1177 = vmatprep.subr.bf16.mxu0 0
    %1178 = vmatpush2.bf16.msra.mxu0 0
    %1179 = vmatprep.subr.bf16.mxu0 0
    %1180 = vmatpush2.bf16.msra.mxu0 0
    %1181 = vmatprep.subr.bf16.mxu0 0
    %1182 = vmatpush2.bf16.msra.mxu0 0
    %1183 = vmatprep.subr.bf16.mxu0 0
    %1184 = vmatpush2.bf16.msra.mxu0 0
    %1185 = vmatprep.subr.bf16.mxu0 0
    %1186 = vmatpush2.bf16.msra.mxu0 0
    %1187 = vmatprep.subr.bf16.mxu0 0
    %1188 = vmatpush2.bf16.msra.mxu0 0
    %1189 = vmatprep.subr.bf16.mxu0 0
    %1190 = vmatpush2.bf16.msra.mxu0 0
    %1191 = vmatprep.subr.bf16.mxu0 0
    %1192 = vmatpush2.bf16.msra.mxu0 0
    %1193 = vmatprep.mubr.bf16.mxu0 0
    %1194 = vmatmul.mubr.bf16.gmra.mxu0 %v1159
    %v1195 = vpop.f32.mrf.mxu0
    %v1196 = vadd.f32 0.0, %v1195
    %v1197 = vpop.f32.mrf.mxu0
    %v1198 = vpop.f32.mrf.mxu0
    %v1199 = vpop.f32.mrf.mxu0
    %1200 = vdwg.mxu0
    %v1201 = vadd.f32 %v1157, %v1196
    %v1202 = vld [vmem:[#allocation3 + $0x18] sm:$0xff]
    %1203 = vmatprep.subr.bf16.mxu0 0
    %1204 = vmatpush1.bf16.msra.mxu0 0
    %1205 = vmatprep.subr.bf16.mxu0 0
    %1206 = vmatpush1.bf16.msra.mxu0 0
    %1207 = vmatprep.subr.bf16.mxu0 0
    %1208 = vmatpush1.bf16.msra.mxu0 0
    %1209 = vmatprep.subr.bf16.mxu0 0
    %1210 = vmatpush1.bf16.msra.mxu0 0
    %1211 = vmatprep.subr.bf16.mxu0 0
    %1212 = vmatpush1.bf16.msra.mxu0 0
    %1213 = vmatprep.subr.bf16.mxu0 0
    %1214 = vmatpush1.bf16.msra.mxu0 0
    %1215 = vmatprep.subr.bf16.mxu0 0
    %1216 = vmatpush1.bf16.msra.mxu0 %v585
    %1217 = vmatprep.subr.bf16.mxu0 0
    %1218 = vmatpush1.bf16.msra.mxu0 %v584
    %1219 = vmatprep.subr.bf16.mxu0 0
    %1220 = vmatpush2.bf16.msra.mxu0 0
    %1221 = vmatprep.subr.bf16.mxu0 0
    %1222 = vmatpush2.bf16.msra.mxu0 0
    %1223 = vmatprep.subr.bf16.mxu0 0
    %1224 = vmatpush2.bf16.msra.mxu0 0
    %1225 = vmatprep.subr.bf16.mxu0 0
    %1226 = vmatpush2.bf16.msra.mxu0 0
    %1227 = vmatprep.subr.bf16.mxu0 0
    %1228 = vmatpush2.bf16.msra.mxu0 0
    %1229 = vmatprep.subr.bf16.mxu0 0
    %1230 = vmatpush2.bf16.msra.mxu0 0
    %1231 = vmatprep.subr.bf16.mxu0 0
    %1232 = vmatpush2.bf16.msra.mxu0 0
    %1233 = vmatprep.subr.bf16.mxu0 0
    %1234 = vmatpush2.bf16.msra.mxu0 0
    %1235 = vmatprep.mubr.bf16.mxu0 0
    %1236 = vmatmul.mubr.bf16.gmra.mxu0 %v1159
    %v1237 = vpop.f32.mrf.mxu0
    %v1238 = vadd.f32 0.0, %v1237
    %v1239 = vpop.f32.mrf.mxu0
    %v1240 = vpop.f32.mrf.mxu0
    %v1241 = vpop.f32.mrf.mxu0
    %1242 = vdwg.mxu0
    %v1243 = vadd.f32 %v1202, %v1238
    %v1244 = vld [vmem:[#allocation4 + $0x18] sm:$0xff]
    %1245 = vmatprep.subr.bf16.mxu0 0
    %1246 = vmatpush1.bf16.msra.mxu0 0
    %1247 = vmatprep.subr.bf16.mxu0 0
    %1248 = vmatpush1.bf16.msra.mxu0 0
    %1249 = vmatprep.subr.bf16.mxu0 0
    %1250 = vmatpush1.bf16.msra.mxu0 0
    %1251 = vmatprep.subr.bf16.mxu0 0
    %1252 = vmatpush1.bf16.msra.mxu0 0
    %1253 = vmatprep.subr.bf16.mxu0 0
    %1254 = vmatpush1.bf16.msra.mxu0 0
    %1255 = vmatprep.subr.bf16.mxu0 0
    %1256 = vmatpush1.bf16.msra.mxu0 0
    %1257 = vmatprep.subr.bf16.mxu0 0
    %1258 = vmatpush1.bf16.msra.mxu0 %v639
    %1259 = vmatprep.subr.bf16.mxu0 0
    %1260 = vmatpush1.bf16.msra.mxu0 %v638
    %1261 = vmatprep.subr.bf16.mxu0 0
    %1262 = vmatpush2.bf16.msra.mxu0 0
    %1263 = vmatprep.subr.bf16.mxu0 0
    %1264 = vmatpush2.bf16.msra.mxu0 0
    %1265 = vmatprep.subr.bf16.mxu0 0
    %1266 = vmatpush2.bf16.msra.mxu0 0
    %1267 = vmatprep.subr.bf16.mxu0 0
    %1268 = vmatpush2.bf16.msra.mxu0 0
    %1269 = vmatprep.subr.bf16.mxu0 0
    %1270 = vmatpush2.bf16.msra.mxu0 0
    %1271 = vmatprep.subr.bf16.mxu0 0
    %1272 = vmatpush2.bf16.msra.mxu0 0
    %1273 = vmatprep.subr.bf16.mxu0 0
    %1274 = vmatpush2.bf16.msra.mxu0 0
    %1275 = vmatprep.subr.bf16.mxu0 0
    %1276 = vmatpush2.bf16.msra.mxu0 0
    %1277 = vmatprep.mubr.bf16.mxu0 0
    %1278 = vmatmul.mubr.bf16.gmra.mxu0 %v1159
    %v1279 = vpop.f32.mrf.mxu0
    %v1280 = vadd.f32 0.0, %v1279
    %v1281 = vpop.f32.mrf.mxu0
    %v1282 = vpop.f32.mrf.mxu0
    %v1283 = vpop.f32.mrf.mxu0
    %1284 = vdwg.mxu0
    %v1285 = vadd.f32 %v1244, %v1280
    %v1286 = vld [vmem:[#allocation5 + $0x18] sm:$0xff]
    %1287 = vmatprep.subr.bf16.mxu0 0
    %1288 = vmatpush1.bf16.msra.mxu0 0
    %1289 = vmatprep.subr.bf16.mxu0 0
    %1290 = vmatpush1.bf16.msra.mxu0 0
    %1291 = vmatprep.subr.bf16.mxu0 0
    %1292 = vmatpush1.bf16.msra.mxu0 0
    %1293 = vmatprep.subr.bf16.mxu0 0
    %1294 = vmatpush1.bf16.msra.mxu0 0
    %1295 = vmatprep.subr.bf16.mxu0 0
    %1296 = vmatpush1.bf16.msra.mxu0 0
    %1297 = vmatprep.subr.bf16.mxu0 0
    %1298 = vmatpush1.bf16.msra.mxu0 0
    %1299 = vmatprep.subr.bf16.mxu0 0
    %1300 = vmatpush1.bf16.msra.mxu0 %v693
    %1301 = vmatprep.subr.bf16.mxu0 0
    %1302 = vmatpush1.bf16.msra.mxu0 %v692
    %1303 = vmatprep.subr.bf16.mxu0 0
    %1304 = vmatpush2.bf16.msra.mxu0 0
    %1305 = vmatprep.subr.bf16.mxu0 0
    %1306 = vmatpush2.bf16.msra.mxu0 0
    %1307 = vmatprep.subr.bf16.mxu0 0
    %1308 = vmatpush2.bf16.msra.mxu0 0
    %1309 = vmatprep.subr.bf16.mxu0 0
    %1310 = vmatpush2.bf16.msra.mxu0 0
    %1311 = vmatprep.subr.bf16.mxu0 0
    %1312 = vmatpush2.bf16.msra.mxu0 0
    %1313 = vmatprep.subr.bf16.mxu0 0
    %1314 = vmatpush2.bf16.msra.mxu0 0
    %1315 = vmatprep.subr.bf16.mxu0 0
    %1316 = vmatpush2.bf16.msra.mxu0 0
    %1317 = vmatprep.subr.bf16.mxu0 0
    %1318 = vmatpush2.bf16.msra.mxu0 0
    %1319 = vmatprep.mubr.bf16.mxu0 0
    %1320 = vmatmul.mubr.bf16.gmra.mxu0 %v1159
    %v1321 = vpop.f32.mrf.mxu0
    %v1322 = vadd.f32 0.0, %v1321
    %v1323 = vpop.f32.mrf.mxu0
    %v1324 = vpop.f32.mrf.mxu0
    %v1325 = vpop.f32.mrf.mxu0
    %1326 = vdwg.mxu0
    %v1327 = vadd.f32 %v1286, %v1322
    %v1328 = vxor.u32 %v1201, 2147483648
    %v1329 = vmul.f32 %v1328, 1.442695
    %v1330 = vpow.pop %v1329
    %v1331 = vadd.f32 %v1330, 1.0
    %v1332 = vrcp.pop %v1331
    %v1333 = vmul.f32 1.0, %v1332
    %v1334 = vxor.u32 %v1243, 2147483648
    %v1335 = vmul.f32 %v1334, 1.442695
    %v1336 = vpow.pop %v1335
    %v1337 = vadd.f32 %v1336, 1.0
    %v1338 = vrcp.pop %v1337
    %v1339 = vmul.f32 1.0, %v1338
    %v1340 = vtanh.pop %v1285
    %v1341 = vxor.u32 %v1327, 2147483648
    %v1342 = vmul.f32 %v1341, 1.442695
    %v1343 = vpow.pop %v1342
    %v1344 = vadd.f32 %v1343, 1.0
    %v1345 = vrcp.pop %v1344
    %v1346 = vmul.f32 1.0, %v1345
    %v1347 = vmul.f32 %v1339, %v1152
    %v1348 = vmul.f32 %v1333, %v1340
    %v1349 = vadd.f32 %v1347, %v1348
    %v1350 = vtanh.pop %v1349
    %v1351 = vmul.f32 %v1346, %v1350
    %1352 = vst.msk [vmem:[#allocation6 + $0x18] sm:$0xff] %vm220, %v1351
    %v1353 = vpack.c.bf16 %v1351, %v1351
    %v1354 = vld [vmem:[#allocation2 + $0x20] sm:$0xff]
    %v1356 = vsel %vm220, %v1353, 0
    %1358 = vmatprep.subr.bf16.mxu0 0
    %1359 = vmatpush1.bf16.msra.mxu0 0
    %1360 = vmatprep.subr.bf16.mxu0 0
    %1361 = vmatpush1.bf16.msra.mxu0 0
    %1362 = vmatprep.subr.bf16.mxu0 0
    %1363 = vmatpush1.bf16.msra.mxu0 0
    %1364 = vmatprep.subr.bf16.mxu0 0
    %1365 = vmatpush1.bf16.msra.mxu0 0
    %1366 = vmatprep.subr.bf16.mxu0 0
    %1367 = vmatpush1.bf16.msra.mxu0 0
    %1368 = vmatprep.subr.bf16.mxu0 0
    %1369 = vmatpush1.bf16.msra.mxu0 0
    %1370 = vmatprep.subr.bf16.mxu0 0
    %1371 = vmatpush1.bf16.msra.mxu0 %v528
    %1372 = vmatprep.subr.bf16.mxu0 0
    %1373 = vmatpush1.bf16.msra.mxu0 %v527
    %1374 = vmatprep.subr.bf16.mxu0 0
    %1375 = vmatpush2.bf16.msra.mxu0 0
    %1376 = vmatprep.subr.bf16.mxu0 0
    %1377 = vmatpush2.bf16.msra.mxu0 0
    %1378 = vmatprep.subr.bf16.mxu0 0
    %1379 = vmatpush2.bf16.msra.mxu0 0
    %1380 = vmatprep.subr.bf16.mxu0 0
    %1381 = vmatpush2.bf16.msra.mxu0 0
    %1382 = vmatprep.subr.bf16.mxu0 0
    %1383 = vmatpush2.bf16.msra.mxu0 0
    %1384 = vmatprep.subr.bf16.mxu0 0
    %1385 = vmatpush2.bf16.msra.mxu0 0
    %1386 = vmatprep.subr.bf16.mxu0 0
    %1387 = vmatpush2.bf16.msra.mxu0 0
    %1388 = vmatprep.subr.bf16.mxu0 0
    %1389 = vmatpush2.bf16.msra.mxu0 0
    %1390 = vmatprep.mubr.bf16.mxu0 0
    %1391 = vmatmul.mubr.bf16.gmra.mxu0 %v1356
    %v1392 = vpop.f32.mrf.mxu0
    %v1393 = vadd.f32 0.0, %v1392
    %v1394 = vpop.f32.mrf.mxu0
    %v1395 = vpop.f32.mrf.mxu0
    %v1396 = vpop.f32.mrf.mxu0
    %1397 = vdwg.mxu0
    %v1398 = vadd.f32 %v1354, %v1393
    %v1399 = vld [vmem:[#allocation3 + $0x20] sm:$0xff]
    %1400 = vmatprep.subr.bf16.mxu0 0
    %1401 = vmatpush1.bf16.msra.mxu0 0
    %1402 = vmatprep.subr.bf16.mxu0 0
    %1403 = vmatpush1.bf16.msra.mxu0 0
    %1404 = vmatprep.subr.bf16.mxu0 0
    %1405 = vmatpush1.bf16.msra.mxu0 0
    %1406 = vmatprep.subr.bf16.mxu0 0
    %1407 = vmatpush1.bf16.msra.mxu0 0
    %1408 = vmatprep.subr.bf16.mxu0 0
    %1409 = vmatpush1.bf16.msra.mxu0 0
    %1410 = vmatprep.subr.bf16.mxu0 0
    %1411 = vmatpush1.bf16.msra.mxu0 0
    %1412 = vmatprep.subr.bf16.mxu0 0
    %1413 = vmatpush1.bf16.msra.mxu0 %v585
    %1414 = vmatprep.subr.bf16.mxu0 0
    %1415 = vmatpush1.bf16.msra.mxu0 %v584
    %1416 = vmatprep.subr.bf16.mxu0 0
    %1417 = vmatpush2.bf16.msra.mxu0 0
    %1418 = vmatprep.subr.bf16.mxu0 0
    %1419 = vmatpush2.bf16.msra.mxu0 0
    %1420 = vmatprep.subr.bf16.mxu0 0
    %1421 = vmatpush2.bf16.msra.mxu0 0
    %1422 = vmatprep.subr.bf16.mxu0 0
    %1423 = vmatpush2.bf16.msra.mxu0 0
    %1424 = vmatprep.subr.bf16.mxu0 0
    %1425 = vmatpush2.bf16.msra.mxu0 0
    %1426 = vmatprep.subr.bf16.mxu0 0
    %1427 = vmatpush2.bf16.msra.mxu0 0
    %1428 = vmatprep.subr.bf16.mxu0 0
    %1429 = vmatpush2.bf16.msra.mxu0 0
    %1430 = vmatprep.subr.bf16.mxu0 0
    %1431 = vmatpush2.bf16.msra.mxu0 0
    %1432 = vmatprep.mubr.bf16.mxu0 0
    %1433 = vmatmul.mubr.bf16.gmra.mxu0 %v1356
    %v1434 = vpop.f32.mrf.mxu0
    %v1435 = vadd.f32 0.0, %v1434
    %v1436 = vpop.f32.mrf.mxu0
    %v1437 = vpop.f32.mrf.mxu0
    %v1438 = vpop.f32.mrf.mxu0
    %1439 = vdwg.mxu0
    %v1440 = vadd.f32 %v1399, %v1435
    %v1441 = vld [vmem:[#allocation4 + $0x20] sm:$0xff]
    %1442 = vmatprep.subr.bf16.mxu0 0
    %1443 = vmatpush1.bf16.msra.mxu0 0
    %1444 = vmatprep.subr.bf16.mxu0 0
    %1445 = vmatpush1.bf16.msra.mxu0 0
    %1446 = vmatprep.subr.bf16.mxu0 0
    %1447 = vmatpush1.bf16.msra.mxu0 0
    %1448 = vmatprep.subr.bf16.mxu0 0
    %1449 = vmatpush1.bf16.msra.mxu0 0
    %1450 = vmatprep.subr.bf16.mxu0 0
    %1451 = vmatpush1.bf16.msra.mxu0 0
    %1452 = vmatprep.subr.bf16.mxu0 0
    %1453 = vmatpush1.bf16.msra.mxu0 0
    %1454 = vmatprep.subr.bf16.mxu0 0
    %1455 = vmatpush1.bf16.msra.mxu0 %v639
    %1456 = vmatprep.subr.bf16.mxu0 0
    %1457 = vmatpush1.bf16.msra.mxu0 %v638
    %1458 = vmatprep.subr.bf16.mxu0 0
    %1459 = vmatpush2.bf16.msra.mxu0 0
    %1460 = vmatprep.subr.bf16.mxu0 0
    %1461 = vmatpush2.bf16.msra.mxu0 0
    %1462 = vmatprep.subr.bf16.mxu0 0
    %1463 = vmatpush2.bf16.msra.mxu0 0
    %1464 = vmatprep.subr.bf16.mxu0 0
    %1465 = vmatpush2.bf16.msra.mxu0 0
    %1466 = vmatprep.subr.bf16.mxu0 0
    %1467 = vmatpush2.bf16.msra.mxu0 0
    %1468 = vmatprep.subr.bf16.mxu0 0
    %1469 = vmatpush2.bf16.msra.mxu0 0
    %1470 = vmatprep.subr.bf16.mxu0 0
    %1471 = vmatpush2.bf16.msra.mxu0 0
    %1472 = vmatprep.subr.bf16.mxu0 0
    %1473 = vmatpush2.bf16.msra.mxu0 0
    %1474 = vmatprep.mubr.bf16.mxu0 0
    %1475 = vmatmul.mubr.bf16.gmra.mxu0 %v1356
    %v1476 = vpop.f32.mrf.mxu0
    %v1477 = vadd.f32 0.0, %v1476
    %v1478 = vpop.f32.mrf.mxu0
    %v1479 = vpop.f32.mrf.mxu0
    %v1480 = vpop.f32.mrf.mxu0
    %1481 = vdwg.mxu0
    %v1482 = vadd.f32 %v1441, %v1477
    %v1483 = vld [vmem:[#allocation5 + $0x20] sm:$0xff]
    %1484 = vmatprep.subr.bf16.mxu0 0
    %1485 = vmatpush1.bf16.msra.mxu0 0
    %1486 = vmatprep.subr.bf16.mxu0 0
    %1487 = vmatpush1.bf16.msra.mxu0 0
    %1488 = vmatprep.subr.bf16.mxu0 0
    %1489 = vmatpush1.bf16.msra.mxu0 0
    %1490 = vmatprep.subr.bf16.mxu0 0
    %1491 = vmatpush1.bf16.msra.mxu0 0
    %1492 = vmatprep.subr.bf16.mxu0 0
    %1493 = vmatpush1.bf16.msra.mxu0 0
    %1494 = vmatprep.subr.bf16.mxu0 0
    %1495 = vmatpush1.bf16.msra.mxu0 0
    %1496 = vmatprep.subr.bf16.mxu0 0
    %1497 = vmatpush1.bf16.msra.mxu0 %v693
    %1498 = vmatprep.subr.bf16.mxu0 0
    %1499 = vmatpush1.bf16.msra.mxu0 %v692
    %1500 = vmatprep.subr.bf16.mxu0 0
    %1501 = vmatpush2.bf16.msra.mxu0 0
    %1502 = vmatprep.subr.bf16.mxu0 0
    %1503 = vmatpush2.bf16.msra.mxu0 0
    %1504 = vmatprep.subr.bf16.mxu0 0
    %1505 = vmatpush2.bf16.msra.mxu0 0
    %1506 = vmatprep.subr.bf16.mxu0 0
    %1507 = vmatpush2.bf16.msra.mxu0 0
    %1508 = vmatprep.subr.bf16.mxu0 0
    %1509 = vmatpush2.bf16.msra.mxu0 0
    %1510 = vmatprep.subr.bf16.mxu0 0
    %1511 = vmatpush2.bf16.msra.mxu0 0
    %1512 = vmatprep.subr.bf16.mxu0 0
    %1513 = vmatpush2.bf16.msra.mxu0 0
    %1514 = vmatprep.subr.bf16.mxu0 0
    %1515 = vmatpush2.bf16.msra.mxu0 0
    %1516 = vmatprep.mubr.bf16.mxu0 0
    %1517 = vmatmul.mubr.bf16.gmra.mxu0 %v1356
    %v1518 = vpop.f32.mrf.mxu0
    %v1519 = vadd.f32 0.0, %v1518
    %v1520 = vpop.f32.mrf.mxu0
    %v1521 = vpop.f32.mrf.mxu0
    %v1522 = vpop.f32.mrf.mxu0
    %1523 = vdwg.mxu0
    %v1524 = vadd.f32 %v1483, %v1519
    %v1525 = vxor.u32 %v1398, 2147483648
    %v1526 = vmul.f32 %v1525, 1.442695
    %v1527 = vpow.pop %v1526
    %v1528 = vadd.f32 %v1527, 1.0
    %v1529 = vrcp.pop %v1528
    %v1530 = vmul.f32 1.0, %v1529
    %v1531 = vxor.u32 %v1440, 2147483648
    %v1532 = vmul.f32 %v1531, 1.442695
    %v1533 = vpow.pop %v1532
    %v1534 = vadd.f32 %v1533, 1.0
    %v1535 = vrcp.pop %v1534
    %v1536 = vmul.f32 1.0, %v1535
    %v1537 = vtanh.pop %v1482
    %v1538 = vxor.u32 %v1524, 2147483648
    %v1539 = vmul.f32 %v1538, 1.442695
    %v1540 = vpow.pop %v1539
    %v1541 = vadd.f32 %v1540, 1.0
    %v1542 = vrcp.pop %v1541
    %v1543 = vmul.f32 1.0, %v1542
    %v1544 = vmul.f32 %v1536, %v1349
    %v1545 = vmul.f32 %v1530, %v1537
    %v1546 = vadd.f32 %v1544, %v1545
    %v1547 = vtanh.pop %v1546
    %v1548 = vmul.f32 %v1543, %v1547
    %1549 = vst.msk [vmem:[#allocation6 + $0x20] sm:$0xff] %vm220, %v1548
    %v1550 = vpack.c.bf16 %v1548, %v1548
    %v1551 = vld [vmem:[#allocation2 + $0x28] sm:$0xff]
    %v1553 = vsel %vm220, %v1550, 0
    %1555 = vmatprep.subr.bf16.mxu0 0
    %1556 = vmatpush1.bf16.msra.mxu0 0
    %1557 = vmatprep.subr.bf16.mxu0 0
    %1558 = vmatpush1.bf16.msra.mxu0 0
    %1559 = vmatprep.subr.bf16.mxu0 0
    %1560 = vmatpush1.bf16.msra.mxu0 0
    %1561 = vmatprep.subr.bf16.mxu0 0
    %1562 = vmatpush1.bf16.msra.mxu0 0
    %1563 = vmatprep.subr.bf16.mxu0 0
    %1564 = vmatpush1.bf16.msra.mxu0 0
    %1565 = vmatprep.subr.bf16.mxu0 0
    %1566 = vmatpush1.bf16.msra.mxu0 0
    %1567 = vmatprep.subr.bf16.mxu0 0
    %1568 = vmatpush1.bf16.msra.mxu0 %v528
    %1569 = vmatprep.subr.bf16.mxu0 0
    %1570 = vmatpush1.bf16.msra.mxu0 %v527
    %1571 = vmatprep.subr.bf16.mxu0 0
    %1572 = vmatpush2.bf16.msra.mxu0 0
    %1573 = vmatprep.subr.bf16.mxu0 0
    %1574 = vmatpush2.bf16.msra.mxu0 0
    %1575 = vmatprep.subr.bf16.mxu0 0
    %1576 = vmatpush2.bf16.msra.mxu0 0
    %1577 = vmatprep.subr.bf16.mxu0 0
    %1578 = vmatpush2.bf16.msra.mxu0 0
    %1579 = vmatprep.subr.bf16.mxu0 0
    %1580 = vmatpush2.bf16.msra.mxu0 0
    %1581 = vmatprep.subr.bf16.mxu0 0
    %1582 = vmatpush2.bf16.msra.mxu0 0
    %1583 = vmatprep.subr.bf16.mxu0 0
    %1584 = vmatpush2.bf16.msra.mxu0 0
    %1585 = vmatprep.subr.bf16.mxu0 0
    %1586 = vmatpush2.bf16.msra.mxu0 0
    %1587 = vmatprep.mubr.bf16.mxu0 0
    %1588 = vmatmul.mubr.bf16.gmra.mxu0 %v1553
    %v1589 = vpop.f32.mrf.mxu0
    %v1590 = vadd.f32 0.0, %v1589
    %v1591 = vpop.f32.mrf.mxu0
    %v1592 = vpop.f32.mrf.mxu0
    %v1593 = vpop.f32.mrf.mxu0
    %1594 = vdwg.mxu0
    %v1595 = vadd.f32 %v1551, %v1590
    %v1596 = vld [vmem:[#allocation3 + $0x28] sm:$0xff]
    %1597 = vmatprep.subr.bf16.mxu0 0
    %1598 = vmatpush1.bf16.msra.mxu0 0
    %1599 = vmatprep.subr.bf16.mxu0 0
    %1600 = vmatpush1.bf16.msra.mxu0 0
    %1601 = vmatprep.subr.bf16.mxu0 0
    %1602 = vmatpush1.bf16.msra.mxu0 0
    %1603 = vmatprep.subr.bf16.mxu0 0
    %1604 = vmatpush1.bf16.msra.mxu0 0
    %1605 = vmatprep.subr.bf16.mxu0 0
    %1606 = vmatpush1.bf16.msra.mxu0 0
    %1607 = vmatprep.subr.bf16.mxu0 0
    %1608 = vmatpush1.bf16.msra.mxu0 0
    %1609 = vmatprep.subr.bf16.mxu0 0
    %1610 = vmatpush1.bf16.msra.mxu0 %v585
    %1611 = vmatprep.subr.bf16.mxu0 0
    %1612 = vmatpush1.bf16.msra.mxu0 %v584
    %1613 = vmatprep.subr.bf16.mxu0 0
    %1614 = vmatpush2.bf16.msra.mxu0 0
    %1615 = vmatprep.subr.bf16.mxu0 0
    %1616 = vmatpush2.bf16.msra.mxu0 0
    %1617 = vmatprep.subr.bf16.mxu0 0
    %1618 = vmatpush2.bf16.msra.mxu0 0
    %1619 = vmatprep.subr.bf16.mxu0 0
    %1620 = vmatpush2.bf16.msra.mxu0 0
    %1621 = vmatprep.subr.bf16.mxu0 0
    %1622 = vmatpush2.bf16.msra.mxu0 0
    %1623 = vmatprep.subr.bf16.mxu0 0
    %1624 = vmatpush2.bf16.msra.mxu0 0
    %1625 = vmatprep.subr.bf16.mxu0 0
    %1626 = vmatpush2.bf16.msra.mxu0 0
    %1627 = vmatprep.subr.bf16.mxu0 0
    %1628 = vmatpush2.bf16.msra.mxu0 0
    %1629 = vmatprep.mubr.bf16.mxu0 0
    %1630 = vmatmul.mubr.bf16.gmra.mxu0 %v1553
    %v1631 = vpop.f32.mrf.mxu0
    %v1632 = vadd.f32 0.0, %v1631
    %v1633 = vpop.f32.mrf.mxu0
    %v1634 = vpop.f32.mrf.mxu0
    %v1635 = vpop.f32.mrf.mxu0
    %1636 = vdwg.mxu0
    %v1637 = vadd.f32 %v1596, %v1632
    %v1638 = vld [vmem:[#allocation4 + $0x28] sm:$0xff]
    %1639 = vmatprep.subr.bf16.mxu0 0
    %1640 = vmatpush1.bf16.msra.mxu0 0
    %1641 = vmatprep.subr.bf16.mxu0 0
    %1642 = vmatpush1.bf16.msra.mxu0 0
    %1643 = vmatprep.subr.bf16.mxu0 0
    %1644 = vmatpush1.bf16.msra.mxu0 0
    %1645 = vmatprep.subr.bf16.mxu0 0
    %1646 = vmatpush1.bf16.msra.mxu0 0
    %1647 = vmatprep.subr.bf16.mxu0 0
    %1648 = vmatpush1.bf16.msra.mxu0 0
    %1649 = vmatprep.subr.bf16.mxu0 0
    %1650 = vmatpush1.bf16.msra.mxu0 0
    %1651 = vmatprep.subr.bf16.mxu0 0
    %1652 = vmatpush1.bf16.msra.mxu0 %v639
    %1653 = vmatprep.subr.bf16.mxu0 0
    %1654 = vmatpush1.bf16.msra.mxu0 %v638
    %1655 = vmatprep.subr.bf16.mxu0 0
    %1656 = vmatpush2.bf16.msra.mxu0 0
    %1657 = vmatprep.subr.bf16.mxu0 0
    %1658 = vmatpush2.bf16.msra.mxu0 0
    %1659 = vmatprep.subr.bf16.mxu0 0
    %1660 = vmatpush2.bf16.msra.mxu0 0
    %1661 = vmatprep.subr.bf16.mxu0 0
    %1662 = vmatpush2.bf16.msra.mxu0 0
    %1663 = vmatprep.subr.bf16.mxu0 0
    %1664 = vmatpush2.bf16.msra.mxu0 0
    %1665 = vmatprep.subr.bf16.mxu0 0
    %1666 = vmatpush2.bf16.msra.mxu0 0
    %1667 = vmatprep.subr.bf16.mxu0 0
    %1668 = vmatpush2.bf16.msra.mxu0 0
    %1669 = vmatprep.subr.bf16.mxu0 0
    %1670 = vmatpush2.bf16.msra.mxu0 0
    %1671 = vmatprep.mubr.bf16.mxu0 0
    %1672 = vmatmul.mubr.bf16.gmra.mxu0 %v1553
    %v1673 = vpop.f32.mrf.mxu0
    %v1674 = vadd.f32 0.0, %v1673
    %v1675 = vpop.f32.mrf.mxu0
    %v1676 = vpop.f32.mrf.mxu0
    %v1677 = vpop.f32.mrf.mxu0
    %1678 = vdwg.mxu0
    %v1679 = vadd.f32 %v1638, %v1674
    %v1680 = vld [vmem:[#allocation5 + $0x28] sm:$0xff]
    %1681 = vmatprep.subr.bf16.mxu0 0
    %1682 = vmatpush1.bf16.msra.mxu0 0
    %1683 = vmatprep.subr.bf16.mxu0 0
    %1684 = vmatpush1.bf16.msra.mxu0 0
    %1685 = vmatprep.subr.bf16.mxu0 0
    %1686 = vmatpush1.bf16.msra.mxu0 0
    %1687 = vmatprep.subr.bf16.mxu0 0
    %1688 = vmatpush1.bf16.msra.mxu0 0
    %1689 = vmatprep.subr.bf16.mxu0 0
    %1690 = vmatpush1.bf16.msra.mxu0 0
    %1691 = vmatprep.subr.bf16.mxu0 0
    %1692 = vmatpush1.bf16.msra.mxu0 0
    %1693 = vmatprep.subr.bf16.mxu0 0
    %1694 = vmatpush1.bf16.msra.mxu0 %v693
    %1695 = vmatprep.subr.bf16.mxu0 0
    %1696 = vmatpush1.bf16.msra.mxu0 %v692
    %1697 = vmatprep.subr.bf16.mxu0 0
    %1698 = vmatpush2.bf16.msra.mxu0 0
    %1699 = vmatprep.subr.bf16.mxu0 0
    %1700 = vmatpush2.bf16.msra.mxu0 0
    %1701 = vmatprep.subr.bf16.mxu0 0
    %1702 = vmatpush2.bf16.msra.mxu0 0
    %1703 = vmatprep.subr.bf16.mxu0 0
    %1704 = vmatpush2.bf16.msra.mxu0 0
    %1705 = vmatprep.subr.bf16.mxu0 0
    %1706 = vmatpush2.bf16.msra.mxu0 0
    %1707 = vmatprep.subr.bf16.mxu0 0
    %1708 = vmatpush2.bf16.msra.mxu0 0
    %1709 = vmatprep.subr.bf16.mxu0 0
    %1710 = vmatpush2.bf16.msra.mxu0 0
    %1711 = vmatprep.subr.bf16.mxu0 0
    %1712 = vmatpush2.bf16.msra.mxu0 0
    %1713 = vmatprep.mubr.bf16.mxu0 0
    %1714 = vmatmul.mubr.bf16.gmra.mxu0 %v1553
    %v1715 = vpop.f32.mrf.mxu0
    %v1716 = vadd.f32 0.0, %v1715
    %v1717 = vpop.f32.mrf.mxu0
    %v1718 = vpop.f32.mrf.mxu0
    %v1719 = vpop.f32.mrf.mxu0
    %1720 = vdwg.mxu0
    %v1721 = vadd.f32 %v1680, %v1716
    %v1722 = vxor.u32 %v1595, 2147483648
    %v1723 = vmul.f32 %v1722, 1.442695
    %v1724 = vpow.pop %v1723
    %v1725 = vadd.f32 %v1724, 1.0
    %v1726 = vrcp.pop %v1725
    %v1727 = vmul.f32 1.0, %v1726
    %v1728 = vxor.u32 %v1637, 2147483648
    %v1729 = vmul.f32 %v1728, 1.442695
    %v1730 = vpow.pop %v1729
    %v1731 = vadd.f32 %v1730, 1.0
    %v1732 = vrcp.pop %v1731
    %v1733 = vmul.f32 1.0, %v1732
    %v1734 = vtanh.pop %v1679
    %v1735 = vxor.u32 %v1721, 2147483648
    %v1736 = vmul.f32 %v1735, 1.442695
    %v1737 = vpow.pop %v1736
    %v1738 = vadd.f32 %v1737, 1.0
    %v1739 = vrcp.pop %v1738
    %v1740 = vmul.f32 1.0, %v1739
    %v1741 = vmul.f32 %v1733, %v1546
    %v1742 = vmul.f32 %v1727, %v1734
    %v1743 = vadd.f32 %v1741, %v1742
    %v1744 = vtanh.pop %v1743
    %v1745 = vmul.f32 %v1740, %v1744
    %1746 = vst.msk [vmem:[#allocation6 + $0x28] sm:$0xff] %vm220, %v1745
    %v1747 = vpack.c.bf16 %v1745, %v1745
    %v1748 = vld [vmem:[#allocation2 + $0x30] sm:$0xff]
    %v1750 = vsel %vm220, %v1747, 0
    %1752 = vmatprep.subr.bf16.mxu0 0
    %1753 = vmatpush1.bf16.msra.mxu0 0
    %1754 = vmatprep.subr.bf16.mxu0 0
    %1755 = vmatpush1.bf16.msra.mxu0 0
    %1756 = vmatprep.subr.bf16.mxu0 0
    %1757 = vmatpush1.bf16.msra.mxu0 0
    %1758 = vmatprep.subr.bf16.mxu0 0
    %1759 = vmatpush1.bf16.msra.mxu0 0
    %1760 = vmatprep.subr.bf16.mxu0 0
    %1761 = vmatpush1.bf16.msra.mxu0 0
    %1762 = vmatprep.subr.bf16.mxu0 0
    %1763 = vmatpush1.bf16.msra.mxu0 0
    %1764 = vmatprep.subr.bf16.mxu0 0
    %1765 = vmatpush1.bf16.msra.mxu0 %v528
    %1766 = vmatprep.subr.bf16.mxu0 0
    %1767 = vmatpush1.bf16.msra.mxu0 %v527
    %1768 = vmatprep.subr.bf16.mxu0 0
    %1769 = vmatpush2.bf16.msra.mxu0 0
    %1770 = vmatprep.subr.bf16.mxu0 0
    %1771 = vmatpush2.bf16.msra.mxu0 0
    %1772 = vmatprep.subr.bf16.mxu0 0
    %1773 = vmatpush2.bf16.msra.mxu0 0
    %1774 = vmatprep.subr.bf16.mxu0 0
    %1775 = vmatpush2.bf16.msra.mxu0 0
    %1776 = vmatprep.subr.bf16.mxu0 0
    %1777 = vmatpush2.bf16.msra.mxu0 0
    %1778 = vmatprep.subr.bf16.mxu0 0
    %1779 = vmatpush2.bf16.msra.mxu0 0
    %1780 = vmatprep.subr.bf16.mxu0 0
    %1781 = vmatpush2.bf16.msra.mxu0 0
    %1782 = vmatprep.subr.bf16.mxu0 0
    %1783 = vmatpush2.bf16.msra.mxu0 0
    %1784 = vmatprep.mubr.bf16.mxu0 0
    %1785 = vmatmul.mubr.bf16.gmra.mxu0 %v1750
    %v1786 = vpop.f32.mrf.mxu0
    %v1787 = vadd.f32 0.0, %v1786
    %v1788 = vpop.f32.mrf.mxu0
    %v1789 = vpop.f32.mrf.mxu0
    %v1790 = vpop.f32.mrf.mxu0
    %1791 = vdwg.mxu0
    %v1792 = vadd.f32 %v1748, %v1787
    %v1793 = vld [vmem:[#allocation3 + $0x30] sm:$0xff]
    %1794 = vmatprep.subr.bf16.mxu0 0
    %1795 = vmatpush1.bf16.msra.mxu0 0
    %1796 = vmatprep.subr.bf16.mxu0 0
    %1797 = vmatpush1.bf16.msra.mxu0 0
    %1798 = vmatprep.subr.bf16.mxu0 0
    %1799 = vmatpush1.bf16.msra.mxu0 0
    %1800 = vmatprep.subr.bf16.mxu0 0
    %1801 = vmatpush1.bf16.msra.mxu0 0
    %1802 = vmatprep.subr.bf16.mxu0 0
    %1803 = vmatpush1.bf16.msra.mxu0 0
    %1804 = vmatprep.subr.bf16.mxu0 0
    %1805 = vmatpush1.bf16.msra.mxu0 0
    %1806 = vmatprep.subr.bf16.mxu0 0
    %1807 = vmatpush1.bf16.msra.mxu0 %v585
    %1808 = vmatprep.subr.bf16.mxu0 0
    %1809 = vmatpush1.bf16.msra.mxu0 %v584
    %1810 = vmatprep.subr.bf16.mxu0 0
    %1811 = vmatpush2.bf16.msra.mxu0 0
    %1812 = vmatprep.subr.bf16.mxu0 0
    %1813 = vmatpush2.bf16.msra.mxu0 0
    %1814 = vmatprep.subr.bf16.mxu0 0
    %1815 = vmatpush2.bf16.msra.mxu0 0
    %1816 = vmatprep.subr.bf16.mxu0 0
    %1817 = vmatpush2.bf16.msra.mxu0 0
    %1818 = vmatprep.subr.bf16.mxu0 0
    %1819 = vmatpush2.bf16.msra.mxu0 0
    %1820 = vmatprep.subr.bf16.mxu0 0
    %1821 = vmatpush2.bf16.msra.mxu0 0
    %1822 = vmatprep.subr.bf16.mxu0 0
    %1823 = vmatpush2.bf16.msra.mxu0 0
    %1824 = vmatprep.subr.bf16.mxu0 0
    %1825 = vmatpush2.bf16.msra.mxu0 0
    %1826 = vmatprep.mubr.bf16.mxu0 0
    %1827 = vmatmul.mubr.bf16.gmra.mxu0 %v1750
    %v1828 = vpop.f32.mrf.mxu0
    %v1829 = vadd.f32 0.0, %v1828
    %v1830 = vpop.f32.mrf.mxu0
    %v1831 = vpop.f32.mrf.mxu0
    %v1832 = vpop.f32.mrf.mxu0
    %1833 = vdwg.mxu0
    %v1834 = vadd.f32 %v1793, %v1829
    %v1835 = vld [vmem:[#allocation4 + $0x30] sm:$0xff]
    %1836 = vmatprep.subr.bf16.mxu0 0
    %1837 = vmatpush1.bf16.msra.mxu0 0
    %1838 = vmatprep.subr.bf16.mxu0 0
    %1839 = vmatpush1.bf16.msra.mxu0 0
    %1840 = vmatprep.subr.bf16.mxu0 0
    %1841 = vmatpush1.bf16.msra.mxu0 0
    %1842 = vmatprep.subr.bf16.mxu0 0
    %1843 = vmatpush1.bf16.msra.mxu0 0
    %1844 = vmatprep.subr.bf16.mxu0 0
    %1845 = vmatpush1.bf16.msra.mxu0 0
    %1846 = vmatprep.subr.bf16.mxu0 0
    %1847 = vmatpush1.bf16.msra.mxu0 0
    %1848 = vmatprep.subr.bf16.mxu0 0
    %1849 = vmatpush1.bf16.msra.mxu0 %v639
    %1850 = vmatprep.subr.bf16.mxu0 0
    %1851 = vmatpush1.bf16.msra.mxu0 %v638
    %1852 = vmatprep.subr.bf16.mxu0 0
    %1853 = vmatpush2.bf16.msra.mxu0 0
    %1854 = vmatprep.subr.bf16.mxu0 0
    %1855 = vmatpush2.bf16.msra.mxu0 0
    %1856 = vmatprep.subr.bf16.mxu0 0
    %1857 = vmatpush2.bf16.msra.mxu0 0
    %1858 = vmatprep.subr.bf16.mxu0 0
    %1859 = vmatpush2.bf16.msra.mxu0 0
    %1860 = vmatprep.subr.bf16.mxu0 0
    %1861 = vmatpush2.bf16.msra.mxu0 0
    %1862 = vmatprep.subr.bf16.mxu0 0
    %1863 = vmatpush2.bf16.msra.mxu0 0
    %1864 = vmatprep.subr.bf16.mxu0 0
    %1865 = vmatpush2.bf16.msra.mxu0 0
    %1866 = vmatprep.subr.bf16.mxu0 0
    %1867 = vmatpush2.bf16.msra.mxu0 0
    %1868 = vmatprep.mubr.bf16.mxu0 0
    %1869 = vmatmul.mubr.bf16.gmra.mxu0 %v1750
    %v1870 = vpop.f32.mrf.mxu0
    %v1871 = vadd.f32 0.0, %v1870
    %v1872 = vpop.f32.mrf.mxu0
    %v1873 = vpop.f32.mrf.mxu0
    %v1874 = vpop.f32.mrf.mxu0
    %1875 = vdwg.mxu0
    %v1876 = vadd.f32 %v1835, %v1871
    %v1877 = vld [vmem:[#allocation5 + $0x30] sm:$0xff]
    %1878 = vmatprep.subr.bf16.mxu0 0
    %1879 = vmatpush1.bf16.msra.mxu0 0
    %1880 = vmatprep.subr.bf16.mxu0 0
    %1881 = vmatpush1.bf16.msra.mxu0 0
    %1882 = vmatprep.subr.bf16.mxu0 0
    %1883 = vmatpush1.bf16.msra.mxu0 0
    %1884 = vmatprep.subr.bf16.mxu0 0
    %1885 = vmatpush1.bf16.msra.mxu0 0
    %1886 = vmatprep.subr.bf16.mxu0 0
    %1887 = vmatpush1.bf16.msra.mxu0 0
    %1888 = vmatprep.subr.bf16.mxu0 0
    %1889 = vmatpush1.bf16.msra.mxu0 0
    %1890 = vmatprep.subr.bf16.mxu0 0
    %1891 = vmatpush1.bf16.msra.mxu0 %v693
    %1892 = vmatprep.subr.bf16.mxu0 0
    %1893 = vmatpush1.bf16.msra.mxu0 %v692
    %1894 = vmatprep.subr.bf16.mxu0 0
    %1895 = vmatpush2.bf16.msra.mxu0 0
    %1896 = vmatprep.subr.bf16.mxu0 0
    %1897 = vmatpush2.bf16.msra.mxu0 0
    %1898 = vmatprep.subr.bf16.mxu0 0
    %1899 = vmatpush2.bf16.msra.mxu0 0
    %1900 = vmatprep.subr.bf16.mxu0 0
    %1901 = vmatpush2.bf16.msra.mxu0 0
    %1902 = vmatprep.subr.bf16.mxu0 0
    %1903 = vmatpush2.bf16.msra.mxu0 0
    %1904 = vmatprep.subr.bf16.mxu0 0
    %1905 = vmatpush2.bf16.msra.mxu0 0
    %1906 = vmatprep.subr.bf16.mxu0 0
    %1907 = vmatpush2.bf16.msra.mxu0 0
    %1908 = vmatprep.subr.bf16.mxu0 0
    %1909 = vmatpush2.bf16.msra.mxu0 0
    %1910 = vmatprep.mubr.bf16.mxu0 0
    %1911 = vmatmul.mubr.bf16.gmra.mxu0 %v1750
    %v1912 = vpop.f32.mrf.mxu0
    %v1913 = vadd.f32 0.0, %v1912
    %v1914 = vpop.f32.mrf.mxu0
    %v1915 = vpop.f32.mrf.mxu0
    %v1916 = vpop.f32.mrf.mxu0
    %1917 = vdwg.mxu0
    %v1918 = vadd.f32 %v1877, %v1913
    %v1919 = vxor.u32 %v1792, 2147483648
    %v1920 = vmul.f32 %v1919, 1.442695
    %v1921 = vpow.pop %v1920
    %v1922 = vadd.f32 %v1921, 1.0
    %v1923 = vrcp.pop %v1922
    %v1924 = vmul.f32 1.0, %v1923
    %v1925 = vxor.u32 %v1834, 2147483648
    %v1926 = vmul.f32 %v1925, 1.442695
    %v1927 = vpow.pop %v1926
    %v1928 = vadd.f32 %v1927, 1.0
    %v1929 = vrcp.pop %v1928
    %v1930 = vmul.f32 1.0, %v1929
    %v1931 = vtanh.pop %v1876
    %v1932 = vxor.u32 %v1918, 2147483648
    %v1933 = vmul.f32 %v1932, 1.442695
    %v1934 = vpow.pop %v1933
    %v1935 = vadd.f32 %v1934, 1.0
    %v1936 = vrcp.pop %v1935
    %v1937 = vmul.f32 1.0, %v1936
    %v1938 = vmul.f32 %v1930, %v1743
    %v1939 = vmul.f32 %v1924, %v1931
    %v1940 = vadd.f32 %v1938, %v1939
    %v1941 = vtanh.pop %v1940
    %v1942 = vmul.f32 %v1937, %v1941
    %1943 = vst.msk [vmem:[#allocation6 + $0x30] sm:$0xff] %vm220, %v1942
    %v1944 = vpack.c.bf16 %v1942, %v1942
    %v1945 = vld [vmem:[#allocation2 + $0x38] sm:$0xff]
    %v1947 = vsel %vm220, %v1944, 0
    %1949 = vmatprep.subr.bf16.mxu0 0
    %1950 = vmatpush1.bf16.msra.mxu0 0
    %1951 = vmatprep.subr.bf16.mxu0 0
    %1952 = vmatpush1.bf16.msra.mxu0 0
    %1953 = vmatprep.subr.bf16.mxu0 0
    %1954 = vmatpush1.bf16.msra.mxu0 0
    %1955 = vmatprep.subr.bf16.mxu0 0
    %1956 = vmatpush1.bf16.msra.mxu0 0
    %1957 = vmatprep.subr.bf16.mxu0 0
    %1958 = vmatpush1.bf16.msra.mxu0 0
    %1959 = vmatprep.subr.bf16.mxu0 0
    %1960 = vmatpush1.bf16.msra.mxu0 0
    %1961 = vmatprep.subr.bf16.mxu0 0
    %1962 = vmatpush1.bf16.msra.mxu0 %v528
    %1963 = vmatprep.subr.bf16.mxu0 0
    %1964 = vmatpush1.bf16.msra.mxu0 %v527
    %1965 = vmatprep.subr.bf16.mxu0 0
    %1966 = vmatpush2.bf16.msra.mxu0 0
    %1967 = vmatprep.subr.bf16.mxu0 0
    %1968 = vmatpush2.bf16.msra.mxu0 0
    %1969 = vmatprep.subr.bf16.mxu0 0
    %1970 = vmatpush2.bf16.msra.mxu0 0
    %1971 = vmatprep.subr.bf16.mxu0 0
    %1972 = vmatpush2.bf16.msra.mxu0 0
    %1973 = vmatprep.subr.bf16.mxu0 0
    %1974 = vmatpush2.bf16.msra.mxu0 0
    %1975 = vmatprep.subr.bf16.mxu0 0
    %1976 = vmatpush2.bf16.msra.mxu0 0
    %1977 = vmatprep.subr.bf16.mxu0 0
    %1978 = vmatpush2.bf16.msra.mxu0 0
    %1979 = vmatprep.subr.bf16.mxu0 0
    %1980 = vmatpush2.bf16.msra.mxu0 0
    %1981 = vmatprep.mubr.bf16.mxu0 0
    %1982 = vmatmul.mubr.bf16.gmra.mxu0 %v1947
    %v1983 = vpop.f32.mrf.mxu0
    %v1984 = vadd.f32 0.0, %v1983
    %v1985 = vpop.f32.mrf.mxu0
    %v1986 = vpop.f32.mrf.mxu0
    %v1987 = vpop.f32.mrf.mxu0
    %1988 = vdwg.mxu0
    %v1989 = vadd.f32 %v1945, %v1984
    %v1990 = vld [vmem:[#allocation3 + $0x38] sm:$0xff]
    %1991 = vmatprep.subr.bf16.mxu0 0
    %1992 = vmatpush1.bf16.msra.mxu0 0
    %1993 = vmatprep.subr.bf16.mxu0 0
    %1994 = vmatpush1.bf16.msra.mxu0 0
    %1995 = vmatprep.subr.bf16.mxu0 0
    %1996 = vmatpush1.bf16.msra.mxu0 0
    %1997 = vmatprep.subr.bf16.mxu0 0
    %1998 = vmatpush1.bf16.msra.mxu0 0
    %1999 = vmatprep.subr.bf16.mxu0 0
    %2000 = vmatpush1.bf16.msra.mxu0 0
    %2001 = vmatprep.subr.bf16.mxu0 0
    %2002 = vmatpush1.bf16.msra.mxu0 0
    %2003 = vmatprep.subr.bf16.mxu0 0
    %2004 = vmatpush1.bf16.msra.mxu0 %v585
    %2005 = vmatprep.subr.bf16.mxu0 0
    %2006 = vmatpush1.bf16.msra.mxu0 %v584
    %2007 = vmatprep.subr.bf16.mxu0 0
    %2008 = vmatpush2.bf16.msra.mxu0 0
    %2009 = vmatprep.subr.bf16.mxu0 0
    %2010 = vmatpush2.bf16.msra.mxu0 0
    %2011 = vmatprep.subr.bf16.mxu0 0
    %2012 = vmatpush2.bf16.msra.mxu0 0
    %2013 = vmatprep.subr.bf16.mxu0 0
    %2014 = vmatpush2.bf16.msra.mxu0 0
    %2015 = vmatprep.subr.bf16.mxu0 0
    %2016 = vmatpush2.bf16.msra.mxu0 0
    %2017 = vmatprep.subr.bf16.mxu0 0
    %2018 = vmatpush2.bf16.msra.mxu0 0
    %2019 = vmatprep.subr.bf16.mxu0 0
    %2020 = vmatpush2.bf16.msra.mxu0 0
    %2021 = vmatprep.subr.bf16.mxu0 0
    %2022 = vmatpush2.bf16.msra.mxu0 0
    %2023 = vmatprep.mubr.bf16.mxu0 0
    %2024 = vmatmul.mubr.bf16.gmra.mxu0 %v1947
    %v2025 = vpop.f32.mrf.mxu0
    %v2026 = vadd.f32 0.0, %v2025
    %v2027 = vpop.f32.mrf.mxu0
    %v2028 = vpop.f32.mrf.mxu0
    %v2029 = vpop.f32.mrf.mxu0
    %2030 = vdwg.mxu0
    %v2031 = vadd.f32 %v1990, %v2026
    %v2032 = vld [vmem:[#allocation4 + $0x38] sm:$0xff]
    %2033 = vmatprep.subr.bf16.mxu0 0
    %2034 = vmatpush1.bf16.msra.mxu0 0
    %2035 = vmatprep.subr.bf16.mxu0 0
    %2036 = vmatpush1.bf16.msra.mxu0 0
    %2037 = vmatprep.subr.bf16.mxu0 0
    %2038 = vmatpush1.bf16.msra.mxu0 0
    %2039 = vmatprep.subr.bf16.mxu0 0
    %2040 = vmatpush1.bf16.msra.mxu0 0
    %2041 = vmatprep.subr.bf16.mxu0 0
    %2042 = vmatpush1.bf16.msra.mxu0 0
    %2043 = vmatprep.subr.bf16.mxu0 0
    %2044 = vmatpush1.bf16.msra.mxu0 0
    %2045 = vmatprep.subr.bf16.mxu0 0
    %2046 = vmatpush1.bf16.msra.mxu0 %v639
    %2047 = vmatprep.subr.bf16.mxu0 0
    %2048 = vmatpush1.bf16.msra.mxu0 %v638
    %2049 = vmatprep.subr.bf16.mxu0 0
    %2050 = vmatpush2.bf16.msra.mxu0 0
    %2051 = vmatprep.subr.bf16.mxu0 0
    %2052 = vmatpush2.bf16.msra.mxu0 0
    %2053 = vmatprep.subr.bf16.mxu0 0
    %2054 = vmatpush2.bf16.msra.mxu0 0
    %2055 = vmatprep.subr.bf16.mxu0 0
    %2056 = vmatpush2.bf16.msra.mxu0 0
    %2057 = vmatprep.subr.bf16.mxu0 0
    %2058 = vmatpush2.bf16.msra.mxu0 0
    %2059 = vmatprep.subr.bf16.mxu0 0
    %2060 = vmatpush2.bf16.msra.mxu0 0
    %2061 = vmatprep.subr.bf16.mxu0 0
    %2062 = vmatpush2.bf16.msra.mxu0 0
    %2063 = vmatprep.subr.bf16.mxu0 0
    %2064 = vmatpush2.bf16.msra.mxu0 0
    %2065 = vmatprep.mubr.bf16.mxu0 0
    %2066 = vmatmul.mubr.bf16.gmra.mxu0 %v1947
    %v2067 = vpop.f32.mrf.mxu0
    %v2068 = vadd.f32 0.0, %v2067
    %v2069 = vpop.f32.mrf.mxu0
    %v2070 = vpop.f32.mrf.mxu0
    %v2071 = vpop.f32.mrf.mxu0
    %2072 = vdwg.mxu0
    %v2073 = vadd.f32 %v2032, %v2068
    %v2074 = vld [vmem:[#allocation5 + $0x38] sm:$0xff]
    %2075 = vmatprep.subr.bf16.mxu0 0
    %2076 = vmatpush1.bf16.msra.mxu0 0
    %2077 = vmatprep.subr.bf16.mxu0 0
    %2078 = vmatpush1.bf16.msra.mxu0 0
    %2079 = vmatprep.subr.bf16.mxu0 0
    %2080 = vmatpush1.bf16.msra.mxu0 0
    %2081 = vmatprep.subr.bf16.mxu0 0
    %2082 = vmatpush1.bf16.msra.mxu0 0
    %2083 = vmatprep.subr.bf16.mxu0 0
    %2084 = vmatpush1.bf16.msra.mxu0 0
    %2085 = vmatprep.subr.bf16.mxu0 0
    %2086 = vmatpush1.bf16.msra.mxu0 0
    %2087 = vmatprep.subr.bf16.mxu0 0
    %2088 = vmatpush1.bf16.msra.mxu0 %v693
    %2089 = vmatprep.subr.bf16.mxu0 0
    %2090 = vmatpush1.bf16.msra.mxu0 %v692
    %2091 = vmatprep.subr.bf16.mxu0 0
    %2092 = vmatpush2.bf16.msra.mxu0 0
    %2093 = vmatprep.subr.bf16.mxu0 0
    %2094 = vmatpush2.bf16.msra.mxu0 0
    %2095 = vmatprep.subr.bf16.mxu0 0
    %2096 = vmatpush2.bf16.msra.mxu0 0
    %2097 = vmatprep.subr.bf16.mxu0 0
    %2098 = vmatpush2.bf16.msra.mxu0 0
    %2099 = vmatprep.subr.bf16.mxu0 0
    %2100 = vmatpush2.bf16.msra.mxu0 0
    %2101 = vmatprep.subr.bf16.mxu0 0
    %2102 = vmatpush2.bf16.msra.mxu0 0
    %2103 = vmatprep.subr.bf16.mxu0 0
    %2104 = vmatpush2.bf16.msra.mxu0 0
    %2105 = vmatprep.subr.bf16.mxu0 0
    %2106 = vmatpush2.bf16.msra.mxu0 0
    %2107 = vmatprep.mubr.bf16.mxu0 0
    %2108 = vmatmul.mubr.bf16.gmra.mxu0 %v1947
    %v2109 = vpop.f32.mrf.mxu0
    %v2110 = vadd.f32 0.0, %v2109
    %v2111 = vpop.f32.mrf.mxu0
    %v2112 = vpop.f32.mrf.mxu0
    %v2113 = vpop.f32.mrf.mxu0
    %2114 = vdwg.mxu0
    %v2115 = vadd.f32 %v2074, %v2110
    %v2116 = vxor.u32 %v1989, 2147483648
    %v2117 = vmul.f32 %v2116, 1.442695
    %v2118 = vpow.pop %v2117
    %v2119 = vadd.f32 %v2118, 1.0
    %v2120 = vrcp.pop %v2119
    %v2121 = vmul.f32 1.0, %v2120
    %v2122 = vxor.u32 %v2031, 2147483648
    %v2123 = vmul.f32 %v2122, 1.442695
    %v2124 = vpow.pop %v2123
    %v2125 = vadd.f32 %v2124, 1.0
    %v2126 = vrcp.pop %v2125
    %v2127 = vmul.f32 1.0, %v2126
    %v2128 = vtanh.pop %v2073
    %v2129 = vxor.u32 %v2115, 2147483648
    %v2130 = vmul.f32 %v2129, 1.442695
    %v2131 = vpow.pop %v2130
    %v2132 = vadd.f32 %v2131, 1.0
    %v2133 = vrcp.pop %v2132
    %v2134 = vmul.f32 1.0, %v2133
    %v2135 = vmul.f32 %v2127, %v1940
    %v2136 = vmul.f32 %v2121, %v2128
    %v2137 = vadd.f32 %v2135, %v2136
    %v2138 = vtanh.pop %v2137
    %v2139 = vmul.f32 %v2134, %v2138
    %2140 = vst.msk [vmem:[#allocation6 + $0x38] sm:$0xff] %vm220, %v2139
    %v2141 = vld [vmem:[#allocation6] sm:$0xff]
    %v2142 = vld [vmem:[#allocation6 + $0x8] sm:$0xff]
    %v2143 = vld [vmem:[#allocation6 + $0x10] sm:$0xff]
    %v2144 = vld [vmem:[#allocation6 + $0x18] sm:$0xff]
    %v2145 = vld [vmem:[#allocation6 + $0x20] sm:$0xff]
    %v2146 = vld [vmem:[#allocation6 + $0x28] sm:$0xff]
    %v2147 = vld [vmem:[#allocation6 + $0x30] sm:$0xff]
    %v2148 = vld [vmem:[#allocation6 + $0x38] sm:$0xff]
    %v2149 = vpack.c.bf16 %v2142, %v2141
    %v2150 = vpack.c.bf16 %v2144, %v2143
    %v2151 = vpack.c.bf16 %v2146, %v2145
    %v2152 = vpack.c.bf16 %v2148, %v2147
    %v2153 = vld [vmem:[%s4] sm:$0xf]
    %v2154 = vld [vmem:[%s4 + $0x4] sm:$0xf]
    %v2155 = vld [vmem:[%s4 + $0x8] sm:$0xf]
    %v2156 = vld [vmem:[%s4 + $0xc] sm:$0xf]
    %v2157 = vld [vmem:[#allocation12] sm:$0x1]
    %v2159 = vlaneseq
    %v2160 = vshrl.u32 %v2159, 7
    %v2161 = vsub.s32 0, %v2160
    %v2162 = vrot.slane %v2157, %v2161
    %v2168 = vunpack.c.l.b16 %v2153
    %v2169 = vunpack.c.l.b16 %v2154
    %v2170 = vunpack.c.l.b16 %v2155
    %v2171 = vunpack.c.l.b16 %v2156
    %v2172 = vpack.c.b16 %v2169, %v2168
    %v2173 = vpack.c.b16 %v2171, %v2170
    %v2177 = vsel %vm220, %v2149, 0
    %v2180 = vsel %vm220, %v2150, 0
    %v2183 = vsel %vm220, %v2151, 0
    %v2186 = vsel %vm220, %v2152, 0
    %2188 = vmatprep.subr.bf16.mxu0 0
    %2189 = vmatpush1.bf16.msra.mxu0 0
    %2190 = vmatprep.subr.bf16.mxu0 0
    %2191 = vmatpush1.bf16.msra.mxu0 0
    %2192 = vmatprep.subr.bf16.mxu0 0
    %2193 = vmatpush1.bf16.msra.mxu0 0
    %2194 = vmatprep.subr.bf16.mxu0 0
    %2195 = vmatpush1.bf16.msra.mxu0 0
    %2196 = vmatprep.subr.bf16.mxu0 0
    %2197 = vmatpush1.bf16.msra.mxu0 0
    %2198 = vmatprep.subr.bf16.mxu0 0
    %2199 = vmatpush1.bf16.msra.mxu0 0
    %2200 = vmatprep.subr.bf16.mxu0 0
    %2201 = vmatpush1.bf16.msra.mxu0 %v2173
    %2202 = vmatprep.subr.bf16.mxu0 0
    %2203 = vmatpush1.bf16.msra.mxu0 %v2172
    %2204 = vmatprep.subr.bf16.mxu0 0
    %2205 = vmatpush2.bf16.msra.mxu0 0
    %2206 = vmatprep.subr.bf16.mxu0 0
    %2207 = vmatpush2.bf16.msra.mxu0 0
    %2208 = vmatprep.subr.bf16.mxu0 0
    %2209 = vmatpush2.bf16.msra.mxu0 0
    %2210 = vmatprep.subr.bf16.mxu0 0
    %2211 = vmatpush2.bf16.msra.mxu0 0
    %2212 = vmatprep.subr.bf16.mxu0 0
    %2213 = vmatpush2.bf16.msra.mxu0 0
    %2214 = vmatprep.subr.bf16.mxu0 0
    %2215 = vmatpush2.bf16.msra.mxu0 0
    %2216 = vmatprep.subr.bf16.mxu0 0
    %2217 = vmatpush2.bf16.msra.mxu0 0
    %2218 = vmatprep.subr.bf16.mxu0 0
    %2219 = vmatpush2.bf16.msra.mxu0 0
    %2220 = vmatprep.mubr.bf16.mxu0 0
    %2221 = vmatmul.mubr.bf16.gmra.mxu0 %v2177
    %v2222 = vpop.f32.mrf.mxu0
    %v2223 = vadd.f32 %v2162, %v2222
    %v2224 = vpop.f32.mrf.mxu0
    %v2225 = vpop.f32.mrf.mxu0
    %v2226 = vadd.f32 %v2162, %v2225
    %v2227 = vpop.f32.mrf.mxu0
    %2228 = vmatprep.mubr.bf16.mxu0 0
    %2229 = vmatmul.mubr.bf16.gmra.mxu0 %v2180
    %v2230 = vpop.f32.mrf.mxu0
    %v2231 = vadd.f32 %v2162, %v2230
    %v2232 = vpop.f32.mrf.mxu0
    %v2233 = vpop.f32.mrf.mxu0
    %v2234 = vadd.f32 %v2162, %v2233
    %v2235 = vpop.f32.mrf.mxu0
    %2236 = vmatprep.mubr.bf16.mxu0 0
    %2237 = vmatmul.mubr.bf16.gmra.mxu0 %v2183
    %v2238 = vpop.f32.mrf.mxu0
    %v2239 = vadd.f32 %v2162, %v2238
    %v2240 = vpop.f32.mrf.mxu0
    %v2241 = vpop.f32.mrf.mxu0
    %v2242 = vadd.f32 %v2162, %v2241
    %v2243 = vpop.f32.mrf.mxu0
    %2244 = vmatprep.mubr.bf16.mxu0 0
    %2245 = vmatmul.mubr.bf16.gmra.mxu0 %v2186
    %v2246 = vpop.f32.mrf.mxu0
    %v2247 = vadd.f32 %v2162, %v2246
    %v2248 = vpop.f32.mrf.mxu0
    %v2249 = vpop.f32.mrf.mxu0
    %v2250 = vadd.f32 %v2162, %v2249
    %v2251 = vpop.f32.mrf.mxu0
    %2252 = vdwg.mxu0
    %2253 = vst.msk [vmem:[#allocation2] sm:$0xff] %vm220, %v2223
    %2254 = vst.msk [vmem:[#allocation2 + $0x8] sm:$0xff] %vm220, %v2226
    %2255 = vst.msk [vmem:[#allocation2 + $0x10] sm:$0xff] %vm220, %v2231
    %2256 = vst.msk [vmem:[#allocation2 + $0x18] sm:$0xff] %vm220, %v2234
    %2257 = vst.msk [vmem:[#allocation2 + $0x20] sm:$0xff] %vm220, %v2239
    %2258 = vst.msk [vmem:[#allocation2 + $0x28] sm:$0xff] %vm220, %v2242
    %2259 = vst.msk [vmem:[#allocation2 + $0x30] sm:$0xff] %vm220, %v2247
    %2260 = vst.msk [vmem:[#allocation2 + $0x38] sm:$0xff] %vm220, %v2250
    %s2261 = scalar_lea.vmem %s4, 16
    %v2262 = vld [vmem:[%s2261] sm:$0xf]
    %v2263 = vld [vmem:[%s2261 + $0x4] sm:$0xf]
    %v2264 = vld [vmem:[%s2261 + $0x8] sm:$0xf]
    %v2265 = vld [vmem:[%s2261 + $0xc] sm:$0xf]
    %s2266 = scalar_lea.vmem [#allocation12], 1
    %v2267 = vld [vmem:[%s2266] sm:$0x1]
    %v2269 = vlaneseq
    %v2270 = vshrl.u32 %v2269, 7
    %v2271 = vsub.s32 0, %v2270
    %v2272 = vrot.slane %v2267, %v2271
    %v2278 = vunpack.c.l.b16 %v2262
    %v2279 = vunpack.c.l.b16 %v2263
    %v2280 = vunpack.c.l.b16 %v2264
    %v2281 = vunpack.c.l.b16 %v2265
    %v2282 = vpack.c.b16 %v2279, %v2278
    %v2283 = vpack.c.b16 %v2281, %v2280
    %2286 = vmatprep.subr.bf16.mxu0 0
    %2287 = vmatpush1.bf16.msra.mxu0 0
    %2288 = vmatprep.subr.bf16.mxu0 0
    %2289 = vmatpush1.bf16.msra.mxu0 0
    %2290 = vmatprep.subr.bf16.mxu0 0
    %2291 = vmatpush1.bf16.msra.mxu0 0
    %2292 = vmatprep.subr.bf16.mxu0 0
    %2293 = vmatpush1.bf16.msra.mxu0 0
    %2294 = vmatprep.subr.bf16.mxu0 0
    %2295 = vmatpush1.bf16.msra.mxu0 0
    %2296 = vmatprep.subr.bf16.mxu0 0
    %2297 = vmatpush1.bf16.msra.mxu0 0
    %2298 = vmatprep.subr.bf16.mxu0 0
    %2299 = vmatpush1.bf16.msra.mxu0 %v2283
    %2300 = vmatprep.subr.bf16.mxu0 0
    %2301 = vmatpush1.bf16.msra.mxu0 %v2282
    %2302 = vmatprep.subr.bf16.mxu0 0
    %2303 = vmatpush2.bf16.msra.mxu0 0
    %2304 = vmatprep.subr.bf16.mxu0 0
    %2305 = vmatpush2.bf16.msra.mxu0 0
    %2306 = vmatprep.subr.bf16.mxu0 0
    %2307 = vmatpush2.bf16.msra.mxu0 0
    %2308 = vmatprep.subr.bf16.mxu0 0
    %2309 = vmatpush2.bf16.msra.mxu0 0
    %2310 = vmatprep.subr.bf16.mxu0 0
    %2311 = vmatpush2.bf16.msra.mxu0 0
    %2312 = vmatprep.subr.bf16.mxu0 0
    %2313 = vmatpush2.bf16.msra.mxu0 0
    %2314 = vmatprep.subr.bf16.mxu0 0
    %2315 = vmatpush2.bf16.msra.mxu0 0
    %2316 = vmatprep.subr.bf16.mxu0 0
    %2317 = vmatpush2.bf16.msra.mxu0 0
    %2318 = vmatprep.mubr.bf16.mxu0 0
    %2319 = vmatmul.mubr.bf16.gmra.mxu0 %v2177
    %v2320 = vpop.f32.mrf.mxu0
    %v2321 = vadd.f32 %v2272, %v2320
    %v2322 = vpop.f32.mrf.mxu0
    %v2323 = vpop.f32.mrf.mxu0
    %v2324 = vadd.f32 %v2272, %v2323
    %v2325 = vpop.f32.mrf.mxu0
    %2326 = vmatprep.mubr.bf16.mxu0 0
    %2327 = vmatmul.mubr.bf16.gmra.mxu0 %v2180
    %v2328 = vpop.f32.mrf.mxu0
    %v2329 = vadd.f32 %v2272, %v2328
    %v2330 = vpop.f32.mrf.mxu0
    %v2331 = vpop.f32.mrf.mxu0
    %v2332 = vadd.f32 %v2272, %v2331
    %v2333 = vpop.f32.mrf.mxu0
    %2334 = vmatprep.mubr.bf16.mxu0 0
    %2335 = vmatmul.mubr.bf16.gmra.mxu0 %v2183
    %v2336 = vpop.f32.mrf.mxu0
    %v2337 = vadd.f32 %v2272, %v2336
    %v2338 = vpop.f32.mrf.mxu0
    %v2339 = vpop.f32.mrf.mxu0
    %v2340 = vadd.f32 %v2272, %v2339
    %v2341 = vpop.f32.mrf.mxu0
    %2342 = vmatprep.mubr.bf16.mxu0 0
    %2343 = vmatmul.mubr.bf16.gmra.mxu0 %v2186
    %v2344 = vpop.f32.mrf.mxu0
    %v2345 = vadd.f32 %v2272, %v2344
    %v2346 = vpop.f32.mrf.mxu0
    %v2347 = vpop.f32.mrf.mxu0
    %v2348 = vadd.f32 %v2272, %v2347
    %v2349 = vpop.f32.mrf.mxu0
    %2350 = vdwg.mxu0
    %2351 = vst.msk [vmem:[#allocation3] sm:$0xff] %vm220, %v2321
    %2352 = vst.msk [vmem:[#allocation3 + $0x8] sm:$0xff] %vm220, %v2324
    %2353 = vst.msk [vmem:[#allocation3 + $0x10] sm:$0xff] %vm220, %v2329
    %2354 = vst.msk [vmem:[#allocation3 + $0x18] sm:$0xff] %vm220, %v2332
    %2355 = vst.msk [vmem:[#allocation3 + $0x20] sm:$0xff] %vm220, %v2337
    %2356 = vst.msk [vmem:[#allocation3 + $0x28] sm:$0xff] %vm220, %v2340
    %2357 = vst.msk [vmem:[#allocation3 + $0x30] sm:$0xff] %vm220, %v2345
    %2358 = vst.msk [vmem:[#allocation3 + $0x38] sm:$0xff] %vm220, %v2348
    %s2359 = scalar_lea.vmem %s4, 32
    %v2360 = vld [vmem:[%s2359] sm:$0xf]
    %v2361 = vld [vmem:[%s2359 + $0x4] sm:$0xf]
    %v2362 = vld [vmem:[%s2359 + $0x8] sm:$0xf]
    %v2363 = vld [vmem:[%s2359 + $0xc] sm:$0xf]
    %s2364 = scalar_lea.vmem [#allocation12], 2
    %v2365 = vld [vmem:[%s2364] sm:$0x1]
    %v2367 = vlaneseq
    %v2368 = vshrl.u32 %v2367, 7
    %v2369 = vsub.s32 0, %v2368
    %v2370 = vrot.slane %v2365, %v2369
    %v2376 = vunpack.c.l.b16 %v2360
    %v2377 = vunpack.c.l.b16 %v2361
    %v2378 = vunpack.c.l.b16 %v2362
    %v2379 = vunpack.c.l.b16 %v2363
    %v2380 = vpack.c.b16 %v2377, %v2376
    %v2381 = vpack.c.b16 %v2379, %v2378
    %2384 = vmatprep.subr.bf16.mxu0 0
    %2385 = vmatpush1.bf16.msra.mxu0 0
    %2386 = vmatprep.subr.bf16.mxu0 0
    %2387 = vmatpush1.bf16.msra.mxu0 0
    %2388 = vmatprep.subr.bf16.mxu0 0
    %2389 = vmatpush1.bf16.msra.mxu0 0
    %2390 = vmatprep.subr.bf16.mxu0 0
    %2391 = vmatpush1.bf16.msra.mxu0 0
    %2392 = vmatprep.subr.bf16.mxu0 0
    %2393 = vmatpush1.bf16.msra.mxu0 0
    %2394 = vmatprep.subr.bf16.mxu0 0
    %2395 = vmatpush1.bf16.msra.mxu0 0
    %2396 = vmatprep.subr.bf16.mxu0 0
    %2397 = vmatpush1.bf16.msra.mxu0 %v2381
    %2398 = vmatprep.subr.bf16.mxu0 0
    %2399 = vmatpush1.bf16.msra.mxu0 %v2380
    %2400 = vmatprep.subr.bf16.mxu0 0
    %2401 = vmatpush2.bf16.msra.mxu0 0
    %2402 = vmatprep.subr.bf16.mxu0 0
    %2403 = vmatpush2.bf16.msra.mxu0 0
    %2404 = vmatprep.subr.bf16.mxu0 0
    %2405 = vmatpush2.bf16.msra.mxu0 0
    %2406 = vmatprep.subr.bf16.mxu0 0
    %2407 = vmatpush2.bf16.msra.mxu0 0
    %2408 = vmatprep.subr.bf16.mxu0 0
    %2409 = vmatpush2.bf16.msra.mxu0 0
    %2410 = vmatprep.subr.bf16.mxu0 0
    %2411 = vmatpush2.bf16.msra.mxu0 0
    %2412 = vmatprep.subr.bf16.mxu0 0
    %2413 = vmatpush2.bf16.msra.mxu0 0
    %2414 = vmatprep.subr.bf16.mxu0 0
    %2415 = vmatpush2.bf16.msra.mxu0 0
    %2416 = vmatprep.mubr.bf16.mxu0 0
    %2417 = vmatmul.mubr.bf16.gmra.mxu0 %v2177
    %v2418 = vpop.f32.mrf.mxu0
    %v2419 = vadd.f32 %v2370, %v2418
    %v2420 = vpop.f32.mrf.mxu0
    %v2421 = vpop.f32.mrf.mxu0
    %v2422 = vadd.f32 %v2370, %v2421
    %v2423 = vpop.f32.mrf.mxu0
    %2424 = vmatprep.mubr.bf16.mxu0 0
    %2425 = vmatmul.mubr.bf16.gmra.mxu0 %v2180
    %v2426 = vpop.f32.mrf.mxu0
    %v2427 = vadd.f32 %v2370, %v2426
    %v2428 = vpop.f32.mrf.mxu0
    %v2429 = vpop.f32.mrf.mxu0
    %v2430 = vadd.f32 %v2370, %v2429
    %v2431 = vpop.f32.mrf.mxu0
    %2432 = vmatprep.mubr.bf16.mxu0 0
    %2433 = vmatmul.mubr.bf16.gmra.mxu0 %v2183
    %v2434 = vpop.f32.mrf.mxu0
    %v2435 = vadd.f32 %v2370, %v2434
    %v2436 = vpop.f32.mrf.mxu0
    %v2437 = vpop.f32.mrf.mxu0
    %v2438 = vadd.f32 %v2370, %v2437
    %v2439 = vpop.f32.mrf.mxu0
    %2440 = vmatprep.mubr.bf16.mxu0 0
    %2441 = vmatmul.mubr.bf16.gmra.mxu0 %v2186
    %v2442 = vpop.f32.mrf.mxu0
    %v2443 = vadd.f32 %v2370, %v2442
    %v2444 = vpop.f32.mrf.mxu0
    %v2445 = vpop.f32.mrf.mxu0
    %v2446 = vadd.f32 %v2370, %v2445
    %v2447 = vpop.f32.mrf.mxu0
    %2448 = vdwg.mxu0
    %2449 = vst.msk [vmem:[#allocation4] sm:$0xff] %vm220, %v2419
    %2450 = vst.msk [vmem:[#allocation4 + $0x8] sm:$0xff] %vm220, %v2422
    %2451 = vst.msk [vmem:[#allocation4 + $0x10] sm:$0xff] %vm220, %v2427
    %2452 = vst.msk [vmem:[#allocation4 + $0x18] sm:$0xff] %vm220, %v2430
    %2453 = vst.msk [vmem:[#allocation4 + $0x20] sm:$0xff] %vm220, %v2435
    %2454 = vst.msk [vmem:[#allocation4 + $0x28] sm:$0xff] %vm220, %v2438
    %2455 = vst.msk [vmem:[#allocation4 + $0x30] sm:$0xff] %vm220, %v2443
    %2456 = vst.msk [vmem:[#allocation4 + $0x38] sm:$0xff] %vm220, %v2446
    %s2457 = scalar_lea.vmem %s4, 48
    %v2458 = vld [vmem:[%s2457] sm:$0xf]
    %v2459 = vld [vmem:[%s2457 + $0x4] sm:$0xf]
    %v2460 = vld [vmem:[%s2457 + $0x8] sm:$0xf]
    %v2461 = vld [vmem:[%s2457 + $0xc] sm:$0xf]
    %s2462 = scalar_lea.vmem [#allocation12], 3
    %v2463 = vld [vmem:[%s2462] sm:$0x1]
    %v2465 = vlaneseq
    %v2466 = vshrl.u32 %v2465, 7
    %v2467 = vsub.s32 0, %v2466
    %v2468 = vrot.slane %v2463, %v2467
    %v2474 = vunpack.c.l.b16 %v2458
    %v2475 = vunpack.c.l.b16 %v2459
    %v2476 = vunpack.c.l.b16 %v2460
    %v2477 = vunpack.c.l.b16 %v2461
    %v2478 = vpack.c.b16 %v2475, %v2474
    %v2479 = vpack.c.b16 %v2477, %v2476
    %2482 = vmatprep.subr.bf16.mxu0 0
    %2483 = vmatpush1.bf16.msra.mxu0 0
    %2484 = vmatprep.subr.bf16.mxu0 0
    %2485 = vmatpush1.bf16.msra.mxu0 0
    %2486 = vmatprep.subr.bf16.mxu0 0
    %2487 = vmatpush1.bf16.msra.mxu0 0
    %2488 = vmatprep.subr.bf16.mxu0 0
    %2489 = vmatpush1.bf16.msra.mxu0 0
    %2490 = vmatprep.subr.bf16.mxu0 0
    %2491 = vmatpush1.bf16.msra.mxu0 0
    %2492 = vmatprep.subr.bf16.mxu0 0
    %2493 = vmatpush1.bf16.msra.mxu0 0
    %2494 = vmatprep.subr.bf16.mxu0 0
    %2495 = vmatpush1.bf16.msra.mxu0 %v2479
    %2496 = vmatprep.subr.bf16.mxu0 0
    %2497 = vmatpush1.bf16.msra.mxu0 %v2478
    %2498 = vmatprep.subr.bf16.mxu0 0
    %2499 = vmatpush2.bf16.msra.mxu0 0
    %2500 = vmatprep.subr.bf16.mxu0 0
    %2501 = vmatpush2.bf16.msra.mxu0 0
    %2502 = vmatprep.subr.bf16.mxu0 0
    %2503 = vmatpush2.bf16.msra.mxu0 0
    %2504 = vmatprep.subr.bf16.mxu0 0
    %2505 = vmatpush2.bf16.msra.mxu0 0
    %2506 = vmatprep.subr.bf16.mxu0 0
    %2507 = vmatpush2.bf16.msra.mxu0 0
    %2508 = vmatprep.subr.bf16.mxu0 0
    %2509 = vmatpush2.bf16.msra.mxu0 0
    %2510 = vmatprep.subr.bf16.mxu0 0
    %2511 = vmatpush2.bf16.msra.mxu0 0
    %2512 = vmatprep.subr.bf16.mxu0 0
    %2513 = vmatpush2.bf16.msra.mxu0 0
    %2514 = vmatprep.mubr.bf16.mxu0 0
    %2515 = vmatmul.mubr.bf16.gmra.mxu0 %v2177
    %v2516 = vpop.f32.mrf.mxu0
    %v2517 = vadd.f32 %v2468, %v2516
    %v2518 = vpop.f32.mrf.mxu0
    %v2519 = vpop.f32.mrf.mxu0
    %v2520 = vadd.f32 %v2468, %v2519
    %v2521 = vpop.f32.mrf.mxu0
    %2522 = vmatprep.mubr.bf16.mxu0 0
    %2523 = vmatmul.mubr.bf16.gmra.mxu0 %v2180
    %v2524 = vpop.f32.mrf.mxu0
    %v2525 = vadd.f32 %v2468, %v2524
    %v2526 = vpop.f32.mrf.mxu0
    %v2527 = vpop.f32.mrf.mxu0
    %v2528 = vadd.f32 %v2468, %v2527
    %v2529 = vpop.f32.mrf.mxu0
    %2530 = vmatprep.mubr.bf16.mxu0 0
    %2531 = vmatmul.mubr.bf16.gmra.mxu0 %v2183
    %v2532 = vpop.f32.mrf.mxu0
    %v2533 = vadd.f32 %v2468, %v2532
    %v2534 = vpop.f32.mrf.mxu0
    %v2535 = vpop.f32.mrf.mxu0
    %v2536 = vadd.f32 %v2468, %v2535
    %v2537 = vpop.f32.mrf.mxu0
    %2538 = vmatprep.mubr.bf16.mxu0 0
    %2539 = vmatmul.mubr.bf16.gmra.mxu0 %v2186
    %v2540 = vpop.f32.mrf.mxu0
    %v2541 = vadd.f32 %v2468, %v2540
    %v2542 = vpop.f32.mrf.mxu0
    %v2543 = vpop.f32.mrf.mxu0
    %v2544 = vadd.f32 %v2468, %v2543
    %v2545 = vpop.f32.mrf.mxu0
    %2546 = vdwg.mxu0
    %2547 = vst.msk [vmem:[#allocation5] sm:$0xff] %vm220, %v2517
    %2548 = vst.msk [vmem:[#allocation5 + $0x8] sm:$0xff] %vm220, %v2520
    %2549 = vst.msk [vmem:[#allocation5 + $0x10] sm:$0xff] %vm220, %v2525
    %2550 = vst.msk [vmem:[#allocation5 + $0x18] sm:$0xff] %vm220, %v2528
    %2551 = vst.msk [vmem:[#allocation5 + $0x20] sm:$0xff] %vm220, %v2533
    %2552 = vst.msk [vmem:[#allocation5 + $0x28] sm:$0xff] %vm220, %v2536
    %2553 = vst.msk [vmem:[#allocation5 + $0x30] sm:$0xff] %vm220, %v2541
    %2554 = vst.msk [vmem:[#allocation5 + $0x38] sm:$0xff] %vm220, %v2544
    %v2555 = vld [vmem:[#allocation11] sm:$0xf]
    %v2556 = vld [vmem:[#allocation11 + $0x4] sm:$0xf]
    %v2557 = vld [vmem:[#allocation11 + $0x8] sm:$0xf]
    %v2558 = vld [vmem:[#allocation11 + $0xc] sm:$0xf]
    %s2559 = scalar_lea.vmem [#allocation11], 16
    %v2560 = vld [vmem:[%s2559] sm:$0xf]
    %v2561 = vld [vmem:[%s2559 + $0x4] sm:$0xf]
    %v2562 = vld [vmem:[%s2559 + $0x8] sm:$0xf]
    %v2563 = vld [vmem:[%s2559 + $0xc] sm:$0xf]
    %s2564 = scalar_lea.vmem [#allocation11], 32
    %v2565 = vld [vmem:[%s2564] sm:$0xf]
    %v2566 = vld [vmem:[%s2564 + $0x4] sm:$0xf]
    %v2567 = vld [vmem:[%s2564 + $0x8] sm:$0xf]
    %v2568 = vld [vmem:[%s2564 + $0xc] sm:$0xf]
    %s2569 = scalar_lea.vmem [#allocation11], 48
    %v2570 = vld [vmem:[%s2569] sm:$0xf]
    %v2571 = vld [vmem:[%s2569 + $0x4] sm:$0xf]
    %v2572 = vld [vmem:[%s2569 + $0x8] sm:$0xf]
    %v2573 = vld [vmem:[%s2569 + $0xc] sm:$0xf]
    %v2574 = vld [vmem:[#allocation2] sm:$0xff]
    %v2579 = vunpack.c.l.b16 %v2555
    %v2580 = vunpack.c.l.b16 %v2556
    %v2581 = vunpack.c.l.b16 %v2557
    %v2582 = vunpack.c.l.b16 %v2558
    %v2583 = vpack.c.b16 %v2580, %v2579
    %v2584 = vpack.c.b16 %v2582, %v2581
    %2587 = vmatprep.subr.bf16.mxu0 0
    %2588 = vmatpush1.bf16.msra.mxu0 0
    %2589 = vmatprep.subr.bf16.mxu0 0
    %2590 = vmatpush1.bf16.msra.mxu0 0
    %2591 = vmatprep.subr.bf16.mxu0 0
    %2592 = vmatpush1.bf16.msra.mxu0 0
    %2593 = vmatprep.subr.bf16.mxu0 0
    %2594 = vmatpush1.bf16.msra.mxu0 0
    %2595 = vmatprep.subr.bf16.mxu0 0
    %2596 = vmatpush1.bf16.msra.mxu0 0
    %2597 = vmatprep.subr.bf16.mxu0 0
    %2598 = vmatpush1.bf16.msra.mxu0 0
    %2599 = vmatprep.subr.bf16.mxu0 0
    %2600 = vmatpush1.bf16.msra.mxu0 %v2584
    %2601 = vmatprep.subr.bf16.mxu0 0
    %2602 = vmatpush1.bf16.msra.mxu0 %v2583
    %2603 = vmatprep.subr.bf16.mxu0 0
    %2604 = vmatpush2.bf16.msra.mxu0 0
    %2605 = vmatprep.subr.bf16.mxu0 0
    %2606 = vmatpush2.bf16.msra.mxu0 0
    %2607 = vmatprep.subr.bf16.mxu0 0
    %2608 = vmatpush2.bf16.msra.mxu0 0
    %2609 = vmatprep.subr.bf16.mxu0 0
    %2610 = vmatpush2.bf16.msra.mxu0 0
    %2611 = vmatprep.subr.bf16.mxu0 0
    %2612 = vmatpush2.bf16.msra.mxu0 0
    %2613 = vmatprep.subr.bf16.mxu0 0
    %2614 = vmatpush2.bf16.msra.mxu0 0
    %2615 = vmatprep.subr.bf16.mxu0 0
    %2616 = vmatpush2.bf16.msra.mxu0 0
    %2617 = vmatprep.subr.bf16.mxu0 0
    %2618 = vmatpush2.bf16.msra.mxu0 0
    %2619 = vmatprep.mubr.bf16.mxu0 0
    %2620 = vmatmul.mubr.bf16.gmra.mxu0 %v532
    %v2621 = vpop.f32.mrf.mxu0
    %v2622 = vadd.f32 0.0, %v2621
    %v2623 = vpop.f32.mrf.mxu0
    %v2624 = vpop.f32.mrf.mxu0
    %v2625 = vpop.f32.mrf.mxu0
    %2626 = vdwg.mxu0
    %v2627 = vadd.f32 %v2574, %v2622
    %v2628 = vld [vmem:[#allocation3] sm:$0xff]
    %v2633 = vunpack.c.l.b16 %v2560
    %v2634 = vunpack.c.l.b16 %v2561
    %v2635 = vunpack.c.l.b16 %v2562
    %v2636 = vunpack.c.l.b16 %v2563
    %v2637 = vpack.c.b16 %v2634, %v2633
    %v2638 = vpack.c.b16 %v2636, %v2635
    %2641 = vmatprep.subr.bf16.mxu0 0
    %2642 = vmatpush1.bf16.msra.mxu0 0
    %2643 = vmatprep.subr.bf16.mxu0 0
    %2644 = vmatpush1.bf16.msra.mxu0 0
    %2645 = vmatprep.subr.bf16.mxu0 0
    %2646 = vmatpush1.bf16.msra.mxu0 0
    %2647 = vmatprep.subr.bf16.mxu0 0
    %2648 = vmatpush1.bf16.msra.mxu0 0
    %2649 = vmatprep.subr.bf16.mxu0 0
    %2650 = vmatpush1.bf16.msra.mxu0 0
    %2651 = vmatprep.subr.bf16.mxu0 0
    %2652 = vmatpush1.bf16.msra.mxu0 0
    %2653 = vmatprep.subr.bf16.mxu0 0
    %2654 = vmatpush1.bf16.msra.mxu0 %v2638
    %2655 = vmatprep.subr.bf16.mxu0 0
    %2656 = vmatpush1.bf16.msra.mxu0 %v2637
    %2657 = vmatprep.subr.bf16.mxu0 0
    %2658 = vmatpush2.bf16.msra.mxu0 0
    %2659 = vmatprep.subr.bf16.mxu0 0
    %2660 = vmatpush2.bf16.msra.mxu0 0
    %2661 = vmatprep.subr.bf16.mxu0 0
    %2662 = vmatpush2.bf16.msra.mxu0 0
    %2663 = vmatprep.subr.bf16.mxu0 0
    %2664 = vmatpush2.bf16.msra.mxu0 0
    %2665 = vmatprep.subr.bf16.mxu0 0
    %2666 = vmatpush2.bf16.msra.mxu0 0
    %2667 = vmatprep.subr.bf16.mxu0 0
    %2668 = vmatpush2.bf16.msra.mxu0 0
    %2669 = vmatprep.subr.bf16.mxu0 0
    %2670 = vmatpush2.bf16.msra.mxu0 0
    %2671 = vmatprep.subr.bf16.mxu0 0
    %2672 = vmatpush2.bf16.msra.mxu0 0
    %2673 = vmatprep.mubr.bf16.mxu0 0
    %2674 = vmatmul.mubr.bf16.gmra.mxu0 %v532
    %v2675 = vpop.f32.mrf.mxu0
    %v2676 = vadd.f32 0.0, %v2675
    %v2677 = vpop.f32.mrf.mxu0
    %v2678 = vpop.f32.mrf.mxu0
    %v2679 = vpop.f32.mrf.mxu0
    %2680 = vdwg.mxu0
    %v2681 = vadd.f32 %v2628, %v2676
    %v2682 = vld [vmem:[#allocation4] sm:$0xff]
    %v2687 = vunpack.c.l.b16 %v2565
    %v2688 = vunpack.c.l.b16 %v2566
    %v2689 = vunpack.c.l.b16 %v2567
    %v2690 = vunpack.c.l.b16 %v2568
    %v2691 = vpack.c.b16 %v2688, %v2687
    %v2692 = vpack.c.b16 %v2690, %v2689
    %2695 = vmatprep.subr.bf16.mxu0 0
    %2696 = vmatpush1.bf16.msra.mxu0 0
    %2697 = vmatprep.subr.bf16.mxu0 0
    %2698 = vmatpush1.bf16.msra.mxu0 0
    %2699 = vmatprep.subr.bf16.mxu0 0
    %2700 = vmatpush1.bf16.msra.mxu0 0
    %2701 = vmatprep.subr.bf16.mxu0 0
    %2702 = vmatpush1.bf16.msra.mxu0 0
    %2703 = vmatprep.subr.bf16.mxu0 0
    %2704 = vmatpush1.bf16.msra.mxu0 0
    %2705 = vmatprep.subr.bf16.mxu0 0
    %2706 = vmatpush1.bf16.msra.mxu0 0
    %2707 = vmatprep.subr.bf16.mxu0 0
    %2708 = vmatpush1.bf16.msra.mxu0 %v2692
    %2709 = vmatprep.subr.bf16.mxu0 0
    %2710 = vmatpush1.bf16.msra.mxu0 %v2691
    %2711 = vmatprep.subr.bf16.mxu0 0
    %2712 = vmatpush2.bf16.msra.mxu0 0
    %2713 = vmatprep.subr.bf16.mxu0 0
    %2714 = vmatpush2.bf16.msra.mxu0 0
    %2715 = vmatprep.subr.bf16.mxu0 0
    %2716 = vmatpush2.bf16.msra.mxu0 0
    %2717 = vmatprep.subr.bf16.mxu0 0
    %2718 = vmatpush2.bf16.msra.mxu0 0
    %2719 = vmatprep.subr.bf16.mxu0 0
    %2720 = vmatpush2.bf16.msra.mxu0 0
    %2721 = vmatprep.subr.bf16.mxu0 0
    %2722 = vmatpush2.bf16.msra.mxu0 0
    %2723 = vmatprep.subr.bf16.mxu0 0
    %2724 = vmatpush2.bf16.msra.mxu0 0
    %2725 = vmatprep.subr.bf16.mxu0 0
    %2726 = vmatpush2.bf16.msra.mxu0 0
    %2727 = vmatprep.mubr.bf16.mxu0 0
    %2728 = vmatmul.mubr.bf16.gmra.mxu0 %v532
    %v2729 = vpop.f32.mrf.mxu0
    %v2730 = vadd.f32 0.0, %v2729
    %v2731 = vpop.f32.mrf.mxu0
    %v2732 = vpop.f32.mrf.mxu0
    %v2733 = vpop.f32.mrf.mxu0
    %2734 = vdwg.mxu0
    %v2735 = vadd.f32 %v2682, %v2730
    %v2736 = vld [vmem:[#allocation5] sm:$0xff]
    %v2741 = vunpack.c.l.b16 %v2570
    %v2742 = vunpack.c.l.b16 %v2571
    %v2743 = vunpack.c.l.b16 %v2572
    %v2744 = vunpack.c.l.b16 %v2573
    %v2745 = vpack.c.b16 %v2742, %v2741
    %v2746 = vpack.c.b16 %v2744, %v2743
    %2749 = vmatprep.subr.bf16.mxu0 0
    %2750 = vmatpush1.bf16.msra.mxu0 0
    %2751 = vmatprep.subr.bf16.mxu0 0
    %2752 = vmatpush1.bf16.msra.mxu0 0
    %2753 = vmatprep.subr.bf16.mxu0 0
    %2754 = vmatpush1.bf16.msra.mxu0 0
    %2755 = vmatprep.subr.bf16.mxu0 0
    %2756 = vmatpush1.bf16.msra.mxu0 0
    %2757 = vmatprep.subr.bf16.mxu0 0
    %2758 = vmatpush1.bf16.msra.mxu0 0
    %2759 = vmatprep.subr.bf16.mxu0 0
    %2760 = vmatpush1.bf16.msra.mxu0 0
    %2761 = vmatprep.subr.bf16.mxu0 0
    %2762 = vmatpush1.bf16.msra.mxu0 %v2746
    %2763 = vmatprep.subr.bf16.mxu0 0
    %2764 = vmatpush1.bf16.msra.mxu0 %v2745
    %2765 = vmatprep.subr.bf16.mxu0 0
    %2766 = vmatpush2.bf16.msra.mxu0 0
    %2767 = vmatprep.subr.bf16.mxu0 0
    %2768 = vmatpush2.bf16.msra.mxu0 0
    %2769 = vmatprep.subr.bf16.mxu0 0
    %2770 = vmatpush2.bf16.msra.mxu0 0
    %2771 = vmatprep.subr.bf16.mxu0 0
    %2772 = vmatpush2.bf16.msra.mxu0 0
    %2773 = vmatprep.subr.bf16.mxu0 0
    %2774 = vmatpush2.bf16.msra.mxu0 0
    %2775 = vmatprep.subr.bf16.mxu0 0
    %2776 = vmatpush2.bf16.msra.mxu0 0
    %2777 = vmatprep.subr.bf16.mxu0 0
    %2778 = vmatpush2.bf16.msra.mxu0 0
    %2779 = vmatprep.subr.bf16.mxu0 0
    %2780 = vmatpush2.bf16.msra.mxu0 0
    %2781 = vmatprep.mubr.bf16.mxu0 0
    %2782 = vmatmul.mubr.bf16.gmra.mxu0 %v532
    %v2783 = vpop.f32.mrf.mxu0
    %v2784 = vadd.f32 0.0, %v2783
    %v2785 = vpop.f32.mrf.mxu0
    %v2786 = vpop.f32.mrf.mxu0
    %v2787 = vpop.f32.mrf.mxu0
    %2788 = vdwg.mxu0
    %v2789 = vadd.f32 %v2736, %v2784
    %v2790 = vxor.u32 %v2627, 2147483648
    %v2791 = vmul.f32 %v2790, 1.442695
    %v2792 = vpow.pop %v2791
    %v2793 = vadd.f32 %v2792, 1.0
    %v2794 = vrcp.pop %v2793
    %v2795 = vmul.f32 1.0, %v2794
    %v2796 = vxor.u32 %v2681, 2147483648
    %v2797 = vmul.f32 %v2796, 1.442695
    %v2798 = vpow.pop %v2797
    %v2799 = vadd.f32 %v2798, 1.0
    %v2800 = vrcp.pop %v2799
    %v2801 = vmul.f32 1.0, %v2800
    %v2802 = vtanh.pop %v2735
    %v2803 = vxor.u32 %v2789, 2147483648
    %v2804 = vmul.f32 %v2803, 1.442695
    %v2805 = vpow.pop %v2804
    %v2806 = vadd.f32 %v2805, 1.0
    %v2807 = vrcp.pop %v2806
    %v2808 = vmul.f32 1.0, %v2807
    %v2809 = vmul.f32 %v2801, 0.0
    %v2810 = vmul.f32 %v2795, %v2802
    %v2811 = vadd.f32 %v2809, %v2810
    %v2812 = vtanh.pop %v2811
    %v2813 = vmul.f32 %v2808, %v2812
    %v2814 = vpack.c.bf16 %v2813, %v2813
    %v2815 = vld [vmem:[#allocation2 + $0x8] sm:$0xff]
    %v2817 = vsel %vm220, %v2814, 0
    %2819 = vmatprep.subr.bf16.mxu0 0
    %2820 = vmatpush1.bf16.msra.mxu0 0
    %2821 = vmatprep.subr.bf16.mxu0 0
    %2822 = vmatpush1.bf16.msra.mxu0 0
    %2823 = vmatprep.subr.bf16.mxu0 0
    %2824 = vmatpush1.bf16.msra.mxu0 0
    %2825 = vmatprep.subr.bf16.mxu0 0
    %2826 = vmatpush1.bf16.msra.mxu0 0
    %2827 = vmatprep.subr.bf16.mxu0 0
    %2828 = vmatpush1.bf16.msra.mxu0 0
    %2829 = vmatprep.subr.bf16.mxu0 0
    %2830 = vmatpush1.bf16.msra.mxu0 0
    %2831 = vmatprep.subr.bf16.mxu0 0
    %2832 = vmatpush1.bf16.msra.mxu0 %v2584
    %2833 = vmatprep.subr.bf16.mxu0 0
    %2834 = vmatpush1.bf16.msra.mxu0 %v2583
    %2835 = vmatprep.subr.bf16.mxu0 0
    %2836 = vmatpush2.bf16.msra.mxu0 0
    %2837 = vmatprep.subr.bf16.mxu0 0
    %2838 = vmatpush2.bf16.msra.mxu0 0
    %2839 = vmatprep.subr.bf16.mxu0 0
    %2840 = vmatpush2.bf16.msra.mxu0 0
    %2841 = vmatprep.subr.bf16.mxu0 0
    %2842 = vmatpush2.bf16.msra.mxu0 0
    %2843 = vmatprep.subr.bf16.mxu0 0
    %2844 = vmatpush2.bf16.msra.mxu0 0
    %2845 = vmatprep.subr.bf16.mxu0 0
    %2846 = vmatpush2.bf16.msra.mxu0 0
    %2847 = vmatprep.subr.bf16.mxu0 0
    %2848 = vmatpush2.bf16.msra.mxu0 0
    %2849 = vmatprep.subr.bf16.mxu0 0
    %2850 = vmatpush2.bf16.msra.mxu0 0
    %2851 = vmatprep.mubr.bf16.mxu0 0
    %2852 = vmatmul.mubr.bf16.gmra.mxu0 %v2817
    %v2853 = vpop.f32.mrf.mxu0
    %v2854 = vadd.f32 0.0, %v2853
    %v2855 = vpop.f32.mrf.mxu0
    %v2856 = vpop.f32.mrf.mxu0
    %v2857 = vpop.f32.mrf.mxu0
    %2858 = vdwg.mxu0
    %v2859 = vadd.f32 %v2815, %v2854
    %v2860 = vld [vmem:[#allocation3 + $0x8] sm:$0xff]
    %2861 = vmatprep.subr.bf16.mxu0 0
    %2862 = vmatpush1.bf16.msra.mxu0 0
    %2863 = vmatprep.subr.bf16.mxu0 0
    %2864 = vmatpush1.bf16.msra.mxu0 0
    %2865 = vmatprep.subr.bf16.mxu0 0
    %2866 = vmatpush1.bf16.msra.mxu0 0
    %2867 = vmatprep.subr.bf16.mxu0 0
    %2868 = vmatpush1.bf16.msra.mxu0 0
    %2869 = vmatprep.subr.bf16.mxu0 0
    %2870 = vmatpush1.bf16.msra.mxu0 0
    %2871 = vmatprep.subr.bf16.mxu0 0
    %2872 = vmatpush1.bf16.msra.mxu0 0
    %2873 = vmatprep.subr.bf16.mxu0 0
    %2874 = vmatpush1.bf16.msra.mxu0 %v2638
    %2875 = vmatprep.subr.bf16.mxu0 0
    %2876 = vmatpush1.bf16.msra.mxu0 %v2637
    %2877 = vmatprep.subr.bf16.mxu0 0
    %2878 = vmatpush2.bf16.msra.mxu0 0
    %2879 = vmatprep.subr.bf16.mxu0 0
    %2880 = vmatpush2.bf16.msra.mxu0 0
    %2881 = vmatprep.subr.bf16.mxu0 0
    %2882 = vmatpush2.bf16.msra.mxu0 0
    %2883 = vmatprep.subr.bf16.mxu0 0
    %2884 = vmatpush2.bf16.msra.mxu0 0
    %2885 = vmatprep.subr.bf16.mxu0 0
    %2886 = vmatpush2.bf16.msra.mxu0 0
    %2887 = vmatprep.subr.bf16.mxu0 0
    %2888 = vmatpush2.bf16.msra.mxu0 0
    %2889 = vmatprep.subr.bf16.mxu0 0
    %2890 = vmatpush2.bf16.msra.mxu0 0
    %2891 = vmatprep.subr.bf16.mxu0 0
    %2892 = vmatpush2.bf16.msra.mxu0 0
    %2893 = vmatprep.mubr.bf16.mxu0 0
    %2894 = vmatmul.mubr.bf16.gmra.mxu0 %v2817
    %v2895 = vpop.f32.mrf.mxu0
    %v2896 = vadd.f32 0.0, %v2895
    %v2897 = vpop.f32.mrf.mxu0
    %v2898 = vpop.f32.mrf.mxu0
    %v2899 = vpop.f32.mrf.mxu0
    %2900 = vdwg.mxu0
    %v2901 = vadd.f32 %v2860, %v2896
    %v2902 = vld [vmem:[#allocation4 + $0x8] sm:$0xff]
    %2903 = vmatprep.subr.bf16.mxu0 0
    %2904 = vmatpush1.bf16.msra.mxu0 0
    %2905 = vmatprep.subr.bf16.mxu0 0
    %2906 = vmatpush1.bf16.msra.mxu0 0
    %2907 = vmatprep.subr.bf16.mxu0 0
    %2908 = vmatpush1.bf16.msra.mxu0 0
    %2909 = vmatprep.subr.bf16.mxu0 0
    %2910 = vmatpush1.bf16.msra.mxu0 0
    %2911 = vmatprep.subr.bf16.mxu0 0
    %2912 = vmatpush1.bf16.msra.mxu0 0
    %2913 = vmatprep.subr.bf16.mxu0 0
    %2914 = vmatpush1.bf16.msra.mxu0 0
    %2915 = vmatprep.subr.bf16.mxu0 0
    %2916 = vmatpush1.bf16.msra.mxu0 %v2692
    %2917 = vmatprep.subr.bf16.mxu0 0
    %2918 = vmatpush1.bf16.msra.mxu0 %v2691
    %2919 = vmatprep.subr.bf16.mxu0 0
    %2920 = vmatpush2.bf16.msra.mxu0 0
    %2921 = vmatprep.subr.bf16.mxu0 0
    %2922 = vmatpush2.bf16.msra.mxu0 0
    %2923 = vmatprep.subr.bf16.mxu0 0
    %2924 = vmatpush2.bf16.msra.mxu0 0
    %2925 = vmatprep.subr.bf16.mxu0 0
    %2926 = vmatpush2.bf16.msra.mxu0 0
    %2927 = vmatprep.subr.bf16.mxu0 0
    %2928 = vmatpush2.bf16.msra.mxu0 0
    %2929 = vmatprep.subr.bf16.mxu0 0
    %2930 = vmatpush2.bf16.msra.mxu0 0
    %2931 = vmatprep.subr.bf16.mxu0 0
    %2932 = vmatpush2.bf16.msra.mxu0 0
    %2933 = vmatprep.subr.bf16.mxu0 0
    %2934 = vmatpush2.bf16.msra.mxu0 0
    %2935 = vmatprep.mubr.bf16.mxu0 0
    %2936 = vmatmul.mubr.bf16.gmra.mxu0 %v2817
    %v2937 = vpop.f32.mrf.mxu0
    %v2938 = vadd.f32 0.0, %v2937
    %v2939 = vpop.f32.mrf.mxu0
    %v2940 = vpop.f32.mrf.mxu0
    %v2941 = vpop.f32.mrf.mxu0
    %2942 = vdwg.mxu0
    %v2943 = vadd.f32 %v2902, %v2938
    %v2944 = vld [vmem:[#allocation5 + $0x8] sm:$0xff]
    %2945 = vmatprep.subr.bf16.mxu0 0
    %2946 = vmatpush1.bf16.msra.mxu0 0
    %2947 = vmatprep.subr.bf16.mxu0 0
    %2948 = vmatpush1.bf16.msra.mxu0 0
    %2949 = vmatprep.subr.bf16.mxu0 0
    %2950 = vmatpush1.bf16.msra.mxu0 0
    %2951 = vmatprep.subr.bf16.mxu0 0
    %2952 = vmatpush1.bf16.msra.mxu0 0
    %2953 = vmatprep.subr.bf16.mxu0 0
    %2954 = vmatpush1.bf16.msra.mxu0 0
    %2955 = vmatprep.subr.bf16.mxu0 0
    %2956 = vmatpush1.bf16.msra.mxu0 0
    %2957 = vmatprep.subr.bf16.mxu0 0
    %2958 = vmatpush1.bf16.msra.mxu0 %v2746
    %2959 = vmatprep.subr.bf16.mxu0 0
    %2960 = vmatpush1.bf16.msra.mxu0 %v2745
    %2961 = vmatprep.subr.bf16.mxu0 0
    %2962 = vmatpush2.bf16.msra.mxu0 0
    %2963 = vmatprep.subr.bf16.mxu0 0
    %2964 = vmatpush2.bf16.msra.mxu0 0
    %2965 = vmatprep.subr.bf16.mxu0 0
    %2966 = vmatpush2.bf16.msra.mxu0 0
    %2967 = vmatprep.subr.bf16.mxu0 0
    %2968 = vmatpush2.bf16.msra.mxu0 0
    %2969 = vmatprep.subr.bf16.mxu0 0
    %2970 = vmatpush2.bf16.msra.mxu0 0
    %2971 = vmatprep.subr.bf16.mxu0 0
    %2972 = vmatpush2.bf16.msra.mxu0 0
    %2973 = vmatprep.subr.bf16.mxu0 0
    %2974 = vmatpush2.bf16.msra.mxu0 0
    %2975 = vmatprep.subr.bf16.mxu0 0
    %2976 = vmatpush2.bf16.msra.mxu0 0
    %2977 = vmatprep.mubr.bf16.mxu0 0
    %2978 = vmatmul.mubr.bf16.gmra.mxu0 %v2817
    %v2979 = vpop.f32.mrf.mxu0
    %v2980 = vadd.f32 0.0, %v2979
    %v2981 = vpop.f32.mrf.mxu0
    %v2982 = vpop.f32.mrf.mxu0
    %v2983 = vpop.f32.mrf.mxu0
    %2984 = vdwg.mxu0
    %v2985 = vadd.f32 %v2944, %v2980
    %v2986 = vxor.u32 %v2859, 2147483648
    %v2987 = vmul.f32 %v2986, 1.442695
    %v2988 = vpow.pop %v2987
    %v2989 = vadd.f32 %v2988, 1.0
    %v2990 = vrcp.pop %v2989
    %v2991 = vmul.f32 1.0, %v2990
    %v2992 = vxor.u32 %v2901, 2147483648
    %v2993 = vmul.f32 %v2992, 1.442695
    %v2994 = vpow.pop %v2993
    %v2995 = vadd.f32 %v2994, 1.0
    %v2996 = vrcp.pop %v2995
    %v2997 = vmul.f32 1.0, %v2996
    %v2998 = vtanh.pop %v2943
    %v2999 = vxor.u32 %v2985, 2147483648
    %v3000 = vmul.f32 %v2999, 1.442695
    %v3001 = vpow.pop %v3000
    %v3002 = vadd.f32 %v3001, 1.0
    %v3003 = vrcp.pop %v3002
    %v3004 = vmul.f32 1.0, %v3003
    %v3005 = vmul.f32 %v2997, %v2811
    %v3006 = vmul.f32 %v2991, %v2998
    %v3007 = vadd.f32 %v3005, %v3006
    %v3008 = vtanh.pop %v3007
    %v3009 = vmul.f32 %v3004, %v3008
    %v3010 = vpack.c.bf16 %v3009, %v3009
    %v3011 = vld [vmem:[#allocation2 + $0x10] sm:$0xff]
    %v3013 = vsel %vm220, %v3010, 0
    %3015 = vmatprep.subr.bf16.mxu0 0
    %3016 = vmatpush1.bf16.msra.mxu0 0
    %3017 = vmatprep.subr.bf16.mxu0 0
    %3018 = vmatpush1.bf16.msra.mxu0 0
    %3019 = vmatprep.subr.bf16.mxu0 0
    %3020 = vmatpush1.bf16.msra.mxu0 0
    %3021 = vmatprep.subr.bf16.mxu0 0
    %3022 = vmatpush1.bf16.msra.mxu0 0
    %3023 = vmatprep.subr.bf16.mxu0 0
    %3024 = vmatpush1.bf16.msra.mxu0 0
    %3025 = vmatprep.subr.bf16.mxu0 0
    %3026 = vmatpush1.bf16.msra.mxu0 0
    %3027 = vmatprep.subr.bf16.mxu0 0
    %3028 = vmatpush1.bf16.msra.mxu0 %v2584
    %3029 = vmatprep.subr.bf16.mxu0 0
    %3030 = vmatpush1.bf16.msra.mxu0 %v2583
    %3031 = vmatprep.subr.bf16.mxu0 0
    %3032 = vmatpush2.bf16.msra.mxu0 0
    %3033 = vmatprep.subr.bf16.mxu0 0
    %3034 = vmatpush2.bf16.msra.mxu0 0
    %3035 = vmatprep.subr.bf16.mxu0 0
    %3036 = vmatpush2.bf16.msra.mxu0 0
    %3037 = vmatprep.subr.bf16.mxu0 0
    %3038 = vmatpush2.bf16.msra.mxu0 0
    %3039 = vmatprep.subr.bf16.mxu0 0
    %3040 = vmatpush2.bf16.msra.mxu0 0
    %3041 = vmatprep.subr.bf16.mxu0 0
    %3042 = vmatpush2.bf16.msra.mxu0 0
    %3043 = vmatprep.subr.bf16.mxu0 0
    %3044 = vmatpush2.bf16.msra.mxu0 0
    %3045 = vmatprep.subr.bf16.mxu0 0
    %3046 = vmatpush2.bf16.msra.mxu0 0
    %3047 = vmatprep.mubr.bf16.mxu0 0
    %3048 = vmatmul.mubr.bf16.gmra.mxu0 %v3013
    %v3049 = vpop.f32.mrf.mxu0
    %v3050 = vadd.f32 0.0, %v3049
    %v3051 = vpop.f32.mrf.mxu0
    %v3052 = vpop.f32.mrf.mxu0
    %v3053 = vpop.f32.mrf.mxu0
    %3054 = vdwg.mxu0
    %v3055 = vadd.f32 %v3011, %v3050
    %v3056 = vld [vmem:[#allocation3 + $0x10] sm:$0xff]
    %3057 = vmatprep.subr.bf16.mxu0 0
    %3058 = vmatpush1.bf16.msra.mxu0 0
    %3059 = vmatprep.subr.bf16.mxu0 0
    %3060 = vmatpush1.bf16.msra.mxu0 0
    %3061 = vmatprep.subr.bf16.mxu0 0
    %3062 = vmatpush1.bf16.msra.mxu0 0
    %3063 = vmatprep.subr.bf16.mxu0 0
    %3064 = vmatpush1.bf16.msra.mxu0 0
    %3065 = vmatprep.subr.bf16.mxu0 0
    %3066 = vmatpush1.bf16.msra.mxu0 0
    %3067 = vmatprep.subr.bf16.mxu0 0
    %3068 = vmatpush1.bf16.msra.mxu0 0
    %3069 = vmatprep.subr.bf16.mxu0 0
    %3070 = vmatpush1.bf16.msra.mxu0 %v2638
    %3071 = vmatprep.subr.bf16.mxu0 0
    %3072 = vmatpush1.bf16.msra.mxu0 %v2637
    %3073 = vmatprep.subr.bf16.mxu0 0
    %3074 = vmatpush2.bf16.msra.mxu0 0
    %3075 = vmatprep.subr.bf16.mxu0 0
    %3076 = vmatpush2.bf16.msra.mxu0 0
    %3077 = vmatprep.subr.bf16.mxu0 0
    %3078 = vmatpush2.bf16.msra.mxu0 0
    %3079 = vmatprep.subr.bf16.mxu0 0
    %3080 = vmatpush2.bf16.msra.mxu0 0
    %3081 = vmatprep.subr.bf16.mxu0 0
    %3082 = vmatpush2.bf16.msra.mxu0 0
    %3083 = vmatprep.subr.bf16.mxu0 0
    %3084 = vmatpush2.bf16.msra.mxu0 0
    %3085 = vmatprep.subr.bf16.mxu0 0
    %3086 = vmatpush2.bf16.msra.mxu0 0
    %3087 = vmatprep.subr.bf16.mxu0 0
    %3088 = vmatpush2.bf16.msra.mxu0 0
    %3089 = vmatprep.mubr.bf16.mxu0 0
    %3090 = vmatmul.mubr.bf16.gmra.mxu0 %v3013
    %v3091 = vpop.f32.mrf.mxu0
    %v3092 = vadd.f32 0.0, %v3091
    %v3093 = vpop.f32.mrf.mxu0
    %v3094 = vpop.f32.mrf.mxu0
    %v3095 = vpop.f32.mrf.mxu0
    %3096 = vdwg.mxu0
    %v3097 = vadd.f32 %v3056, %v3092
    %v3098 = vld [vmem:[#allocation4 + $0x10] sm:$0xff]
    %3099 = vmatprep.subr.bf16.mxu0 0
    %3100 = vmatpush1.bf16.msra.mxu0 0
    %3101 = vmatprep.subr.bf16.mxu0 0
    %3102 = vmatpush1.bf16.msra.mxu0 0
    %3103 = vmatprep.subr.bf16.mxu0 0
    %3104 = vmatpush1.bf16.msra.mxu0 0
    %3105 = vmatprep.subr.bf16.mxu0 0
    %3106 = vmatpush1.bf16.msra.mxu0 0
    %3107 = vmatprep.subr.bf16.mxu0 0
    %3108 = vmatpush1.bf16.msra.mxu0 0
    %3109 = vmatprep.subr.bf16.mxu0 0
    %3110 = vmatpush1.bf16.msra.mxu0 0
    %3111 = vmatprep.subr.bf16.mxu0 0
    %3112 = vmatpush1.bf16.msra.mxu0 %v2692
    %3113 = vmatprep.subr.bf16.mxu0 0
    %3114 = vmatpush1.bf16.msra.mxu0 %v2691
    %3115 = vmatprep.subr.bf16.mxu0 0
    %3116 = vmatpush2.bf16.msra.mxu0 0
    %3117 = vmatprep.subr.bf16.mxu0 0
    %3118 = vmatpush2.bf16.msra.mxu0 0
    %3119 = vmatprep.subr.bf16.mxu0 0
    %3120 = vmatpush2.bf16.msra.mxu0 0
    %3121 = vmatprep.subr.bf16.mxu0 0
    %3122 = vmatpush2.bf16.msra.mxu0 0
    %3123 = vmatprep.subr.bf16.mxu0 0
    %3124 = vmatpush2.bf16.msra.mxu0 0
    %3125 = vmatprep.subr.bf16.mxu0 0
    %3126 = vmatpush2.bf16.msra.mxu0 0
    %3127 = vmatprep.subr.bf16.mxu0 0
    %3128 = vmatpush2.bf16.msra.mxu0 0
    %3129 = vmatprep.subr.bf16.mxu0 0
    %3130 = vmatpush2.bf16.msra.mxu0 0
    %3131 = vmatprep.mubr.bf16.mxu0 0
    %3132 = vmatmul.mubr.bf16.gmra.mxu0 %v3013
    %v3133 = vpop.f32.mrf.mxu0
    %v3134 = vadd.f32 0.0, %v3133
    %v3135 = vpop.f32.mrf.mxu0
    %v3136 = vpop.f32.mrf.mxu0
    %v3137 = vpop.f32.mrf.mxu0
    %3138 = vdwg.mxu0
    %v3139 = vadd.f32 %v3098, %v3134
    %v3140 = vld [vmem:[#allocation5 + $0x10] sm:$0xff]
    %3141 = vmatprep.subr.bf16.mxu0 0
    %3142 = vmatpush1.bf16.msra.mxu0 0
    %3143 = vmatprep.subr.bf16.mxu0 0
    %3144 = vmatpush1.bf16.msra.mxu0 0
    %3145 = vmatprep.subr.bf16.mxu0 0
    %3146 = vmatpush1.bf16.msra.mxu0 0
    %3147 = vmatprep.subr.bf16.mxu0 0
    %3148 = vmatpush1.bf16.msra.mxu0 0
    %3149 = vmatprep.subr.bf16.mxu0 0
    %3150 = vmatpush1.bf16.msra.mxu0 0
    %3151 = vmatprep.subr.bf16.mxu0 0
    %3152 = vmatpush1.bf16.msra.mxu0 0
    %3153 = vmatprep.subr.bf16.mxu0 0
    %3154 = vmatpush1.bf16.msra.mxu0 %v2746
    %3155 = vmatprep.subr.bf16.mxu0 0
    %3156 = vmatpush1.bf16.msra.mxu0 %v2745
    %3157 = vmatprep.subr.bf16.mxu0 0
    %3158 = vmatpush2.bf16.msra.mxu0 0
    %3159 = vmatprep.subr.bf16.mxu0 0
    %3160 = vmatpush2.bf16.msra.mxu0 0
    %3161 = vmatprep.subr.bf16.mxu0 0
    %3162 = vmatpush2.bf16.msra.mxu0 0
    %3163 = vmatprep.subr.bf16.mxu0 0
    %3164 = vmatpush2.bf16.msra.mxu0 0
    %3165 = vmatprep.subr.bf16.mxu0 0
    %3166 = vmatpush2.bf16.msra.mxu0 0
    %3167 = vmatprep.subr.bf16.mxu0 0
    %3168 = vmatpush2.bf16.msra.mxu0 0
    %3169 = vmatprep.subr.bf16.mxu0 0
    %3170 = vmatpush2.bf16.msra.mxu0 0
    %3171 = vmatprep.subr.bf16.mxu0 0
    %3172 = vmatpush2.bf16.msra.mxu0 0
    %3173 = vmatprep.mubr.bf16.mxu0 0
    %3174 = vmatmul.mubr.bf16.gmra.mxu0 %v3013
    %v3175 = vpop.f32.mrf.mxu0
    %v3176 = vadd.f32 0.0, %v3175
    %v3177 = vpop.f32.mrf.mxu0
    %v3178 = vpop.f32.mrf.mxu0
    %v3179 = vpop.f32.mrf.mxu0
    %3180 = vdwg.mxu0
    %v3181 = vadd.f32 %v3140, %v3176
    %v3182 = vxor.u32 %v3055, 2147483648
    %v3183 = vmul.f32 %v3182, 1.442695
    %v3184 = vpow.pop %v3183
    %v3185 = vadd.f32 %v3184, 1.0
    %v3186 = vrcp.pop %v3185
    %v3187 = vmul.f32 1.0, %v3186
    %v3188 = vxor.u32 %v3097, 2147483648
    %v3189 = vmul.f32 %v3188, 1.442695
    %v3190 = vpow.pop %v3189
    %v3191 = vadd.f32 %v3190, 1.0
    %v3192 = vrcp.pop %v3191
    %v3193 = vmul.f32 1.0, %v3192
    %v3194 = vtanh.pop %v3139
    %v3195 = vxor.u32 %v3181, 2147483648
    %v3196 = vmul.f32 %v3195, 1.442695
    %v3197 = vpow.pop %v3196
    %v3198 = vadd.f32 %v3197, 1.0
    %v3199 = vrcp.pop %v3198
    %v3200 = vmul.f32 1.0, %v3199
    %v3201 = vmul.f32 %v3193, %v3007
    %v3202 = vmul.f32 %v3187, %v3194
    %v3203 = vadd.f32 %v3201, %v3202
    %v3204 = vtanh.pop %v3203
    %v3205 = vmul.f32 %v3200, %v3204
    %v3206 = vpack.c.bf16 %v3205, %v3205
    %v3207 = vld [vmem:[#allocation2 + $0x18] sm:$0xff]
    %v3209 = vsel %vm220, %v3206, 0
    %3211 = vmatprep.subr.bf16.mxu0 0
    %3212 = vmatpush1.bf16.msra.mxu0 0
    %3213 = vmatprep.subr.bf16.mxu0 0
    %3214 = vmatpush1.bf16.msra.mxu0 0
    %3215 = vmatprep.subr.bf16.mxu0 0
    %3216 = vmatpush1.bf16.msra.mxu0 0
    %3217 = vmatprep.subr.bf16.mxu0 0
    %3218 = vmatpush1.bf16.msra.mxu0 0
    %3219 = vmatprep.subr.bf16.mxu0 0
    %3220 = vmatpush1.bf16.msra.mxu0 0
    %3221 = vmatprep.subr.bf16.mxu0 0
    %3222 = vmatpush1.bf16.msra.mxu0 0
    %3223 = vmatprep.subr.bf16.mxu0 0
    %3224 = vmatpush1.bf16.msra.mxu0 %v2584
    %3225 = vmatprep.subr.bf16.mxu0 0
    %3226 = vmatpush1.bf16.msra.mxu0 %v2583
    %3227 = vmatprep.subr.bf16.mxu0 0
    %3228 = vmatpush2.bf16.msra.mxu0 0
    %3229 = vmatprep.subr.bf16.mxu0 0
    %3230 = vmatpush2.bf16.msra.mxu0 0
    %3231 = vmatprep.subr.bf16.mxu0 0
    %3232 = vmatpush2.bf16.msra.mxu0 0
    %3233 = vmatprep.subr.bf16.mxu0 0
    %3234 = vmatpush2.bf16.msra.mxu0 0
    %3235 = vmatprep.subr.bf16.mxu0 0
    %3236 = vmatpush2.bf16.msra.mxu0 0
    %3237 = vmatprep.subr.bf16.mxu0 0
    %3238 = vmatpush2.bf16.msra.mxu0 0
    %3239 = vmatprep.subr.bf16.mxu0 0
    %3240 = vmatpush2.bf16.msra.mxu0 0
    %3241 = vmatprep.subr.bf16.mxu0 0
    %3242 = vmatpush2.bf16.msra.mxu0 0
    %3243 = vmatprep.mubr.bf16.mxu0 0
    %3244 = vmatmul.mubr.bf16.gmra.mxu0 %v3209
    %v3245 = vpop.f32.mrf.mxu0
    %v3246 = vadd.f32 0.0, %v3245
    %v3247 = vpop.f32.mrf.mxu0
    %v3248 = vpop.f32.mrf.mxu0
    %v3249 = vpop.f32.mrf.mxu0
    %3250 = vdwg.mxu0
    %v3251 = vadd.f32 %v3207, %v3246
    %v3252 = vld [vmem:[#allocation3 + $0x18] sm:$0xff]
    %3253 = vmatprep.subr.bf16.mxu0 0
    %3254 = vmatpush1.bf16.msra.mxu0 0
    %3255 = vmatprep.subr.bf16.mxu0 0
    %3256 = vmatpush1.bf16.msra.mxu0 0
    %3257 = vmatprep.subr.bf16.mxu0 0
    %3258 = vmatpush1.bf16.msra.mxu0 0
    %3259 = vmatprep.subr.bf16.mxu0 0
    %3260 = vmatpush1.bf16.msra.mxu0 0
    %3261 = vmatprep.subr.bf16.mxu0 0
    %3262 = vmatpush1.bf16.msra.mxu0 0
    %3263 = vmatprep.subr.bf16.mxu0 0
    %3264 = vmatpush1.bf16.msra.mxu0 0
    %3265 = vmatprep.subr.bf16.mxu0 0
    %3266 = vmatpush1.bf16.msra.mxu0 %v2638
    %3267 = vmatprep.subr.bf16.mxu0 0
    %3268 = vmatpush1.bf16.msra.mxu0 %v2637
    %3269 = vmatprep.subr.bf16.mxu0 0
    %3270 = vmatpush2.bf16.msra.mxu0 0
    %3271 = vmatprep.subr.bf16.mxu0 0
    %3272 = vmatpush2.bf16.msra.mxu0 0
    %3273 = vmatprep.subr.bf16.mxu0 0
    %3274 = vmatpush2.bf16.msra.mxu0 0
    %3275 = vmatprep.subr.bf16.mxu0 0
    %3276 = vmatpush2.bf16.msra.mxu0 0
    %3277 = vmatprep.subr.bf16.mxu0 0
    %3278 = vmatpush2.bf16.msra.mxu0 0
    %3279 = vmatprep.subr.bf16.mxu0 0
    %3280 = vmatpush2.bf16.msra.mxu0 0
    %3281 = vmatprep.subr.bf16.mxu0 0
    %3282 = vmatpush2.bf16.msra.mxu0 0
    %3283 = vmatprep.subr.bf16.mxu0 0
    %3284 = vmatpush2.bf16.msra.mxu0 0
    %3285 = vmatprep.mubr.bf16.mxu0 0
    %3286 = vmatmul.mubr.bf16.gmra.mxu0 %v3209
    %v3287 = vpop.f32.mrf.mxu0
    %v3288 = vadd.f32 0.0, %v3287
    %v3289 = vpop.f32.mrf.mxu0
    %v3290 = vpop.f32.mrf.mxu0
    %v3291 = vpop.f32.mrf.mxu0
    %3292 = vdwg.mxu0
    %v3293 = vadd.f32 %v3252, %v3288
    %v3294 = vld [vmem:[#allocation4 + $0x18] sm:$0xff]
    %3295 = vmatprep.subr.bf16.mxu0 0
    %3296 = vmatpush1.bf16.msra.mxu0 0
    %3297 = vmatprep.subr.bf16.mxu0 0
    %3298 = vmatpush1.bf16.msra.mxu0 0
    %3299 = vmatprep.subr.bf16.mxu0 0
    %3300 = vmatpush1.bf16.msra.mxu0 0
    %3301 = vmatprep.subr.bf16.mxu0 0
    %3302 = vmatpush1.bf16.msra.mxu0 0
    %3303 = vmatprep.subr.bf16.mxu0 0
    %3304 = vmatpush1.bf16.msra.mxu0 0
    %3305 = vmatprep.subr.bf16.mxu0 0
    %3306 = vmatpush1.bf16.msra.mxu0 0
    %3307 = vmatprep.subr.bf16.mxu0 0
    %3308 = vmatpush1.bf16.msra.mxu0 %v2692
    %3309 = vmatprep.subr.bf16.mxu0 0
    %3310 = vmatpush1.bf16.msra.mxu0 %v2691
    %3311 = vmatprep.subr.bf16.mxu0 0
    %3312 = vmatpush2.bf16.msra.mxu0 0
    %3313 = vmatprep.subr.bf16.mxu0 0
    %3314 = vmatpush2.bf16.msra.mxu0 0
    %3315 = vmatprep.subr.bf16.mxu0 0
    %3316 = vmatpush2.bf16.msra.mxu0 0
    %3317 = vmatprep.subr.bf16.mxu0 0
    %3318 = vmatpush2.bf16.msra.mxu0 0
    %3319 = vmatprep.subr.bf16.mxu0 0
    %3320 = vmatpush2.bf16.msra.mxu0 0
    %3321 = vmatprep.subr.bf16.mxu0 0
    %3322 = vmatpush2.bf16.msra.mxu0 0
    %3323 = vmatprep.subr.bf16.mxu0 0
    %3324 = vmatpush2.bf16.msra.mxu0 0
    %3325 = vmatprep.subr.bf16.mxu0 0
    %3326 = vmatpush2.bf16.msra.mxu0 0
    %3327 = vmatprep.mubr.bf16.mxu0 0
    %3328 = vmatmul.mubr.bf16.gmra.mxu0 %v3209
    %v3329 = vpop.f32.mrf.mxu0
    %v3330 = vadd.f32 0.0, %v3329
    %v3331 = vpop.f32.mrf.mxu0
    %v3332 = vpop.f32.mrf.mxu0
    %v3333 = vpop.f32.mrf.mxu0
    %3334 = vdwg.mxu0
    %v3335 = vadd.f32 %v3294, %v3330
    %v3336 = vld [vmem:[#allocation5 + $0x18] sm:$0xff]
    %3337 = vmatprep.subr.bf16.mxu0 0
    %3338 = vmatpush1.bf16.msra.mxu0 0
    %3339 = vmatprep.subr.bf16.mxu0 0
    %3340 = vmatpush1.bf16.msra.mxu0 0
    %3341 = vmatprep.subr.bf16.mxu0 0
    %3342 = vmatpush1.bf16.msra.mxu0 0
    %3343 = vmatprep.subr.bf16.mxu0 0
    %3344 = vmatpush1.bf16.msra.mxu0 0
    %3345 = vmatprep.subr.bf16.mxu0 0
    %3346 = vmatpush1.bf16.msra.mxu0 0
    %3347 = vmatprep.subr.bf16.mxu0 0
    %3348 = vmatpush1.bf16.msra.mxu0 0
    %3349 = vmatprep.subr.bf16.mxu0 0
    %3350 = vmatpush1.bf16.msra.mxu0 %v2746
    %3351 = vmatprep.subr.bf16.mxu0 0
    %3352 = vmatpush1.bf16.msra.mxu0 %v2745
    %3353 = vmatprep.subr.bf16.mxu0 0
    %3354 = vmatpush2.bf16.msra.mxu0 0
    %3355 = vmatprep.subr.bf16.mxu0 0
    %3356 = vmatpush2.bf16.msra.mxu0 0
    %3357 = vmatprep.subr.bf16.mxu0 0
    %3358 = vmatpush2.bf16.msra.mxu0 0
    %3359 = vmatprep.subr.bf16.mxu0 0
    %3360 = vmatpush2.bf16.msra.mxu0 0
    %3361 = vmatprep.subr.bf16.mxu0 0
    %3362 = vmatpush2.bf16.msra.mxu0 0
    %3363 = vmatprep.subr.bf16.mxu0 0
    %3364 = vmatpush2.bf16.msra.mxu0 0
    %3365 = vmatprep.subr.bf16.mxu0 0
    %3366 = vmatpush2.bf16.msra.mxu0 0
    %3367 = vmatprep.subr.bf16.mxu0 0
    %3368 = vmatpush2.bf16.msra.mxu0 0
    %3369 = vmatprep.mubr.bf16.mxu0 0
    %3370 = vmatmul.mubr.bf16.gmra.mxu0 %v3209
    %v3371 = vpop.f32.mrf.mxu0
    %v3372 = vadd.f32 0.0, %v3371
    %v3373 = vpop.f32.mrf.mxu0
    %v3374 = vpop.f32.mrf.mxu0
    %v3375 = vpop.f32.mrf.mxu0
    %3376 = vdwg.mxu0
    %v3377 = vadd.f32 %v3336, %v3372
    %v3378 = vxor.u32 %v3251, 2147483648
    %v3379 = vmul.f32 %v3378, 1.442695
    %v3380 = vpow.pop %v3379
    %v3381 = vadd.f32 %v3380, 1.0
    %v3382 = vrcp.pop %v3381
    %v3383 = vmul.f32 1.0, %v3382
    %v3384 = vxor.u32 %v3293, 2147483648
    %v3385 = vmul.f32 %v3384, 1.442695
    %v3386 = vpow.pop %v3385
    %v3387 = vadd.f32 %v3386, 1.0
    %v3388 = vrcp.pop %v3387
    %v3389 = vmul.f32 1.0, %v3388
    %v3390 = vtanh.pop %v3335
    %v3391 = vxor.u32 %v3377, 2147483648
    %v3392 = vmul.f32 %v3391, 1.442695
    %v3393 = vpow.pop %v3392
    %v3394 = vadd.f32 %v3393, 1.0
    %v3395 = vrcp.pop %v3394
    %v3396 = vmul.f32 1.0, %v3395
    %v3397 = vmul.f32 %v3389, %v3203
    %v3398 = vmul.f32 %v3383, %v3390
    %v3399 = vadd.f32 %v3397, %v3398
    %v3400 = vtanh.pop %v3399
    %v3401 = vmul.f32 %v3396, %v3400
    %v3402 = vpack.c.bf16 %v3401, %v3401
    %v3403 = vld [vmem:[#allocation2 + $0x20] sm:$0xff]
    %v3405 = vsel %vm220, %v3402, 0
    %3407 = vmatprep.subr.bf16.mxu0 0
    %3408 = vmatpush1.bf16.msra.mxu0 0
    %3409 = vmatprep.subr.bf16.mxu0 0
    %3410 = vmatpush1.bf16.msra.mxu0 0
    %3411 = vmatprep.subr.bf16.mxu0 0
    %3412 = vmatpush1.bf16.msra.mxu0 0
    %3413 = vmatprep.subr.bf16.mxu0 0
    %3414 = vmatpush1.bf16.msra.mxu0 0
    %3415 = vmatprep.subr.bf16.mxu0 0
    %3416 = vmatpush1.bf16.msra.mxu0 0
    %3417 = vmatprep.subr.bf16.mxu0 0
    %3418 = vmatpush1.bf16.msra.mxu0 0
    %3419 = vmatprep.subr.bf16.mxu0 0
    %3420 = vmatpush1.bf16.msra.mxu0 %v2584
    %3421 = vmatprep.subr.bf16.mxu0 0
    %3422 = vmatpush1.bf16.msra.mxu0 %v2583
    %3423 = vmatprep.subr.bf16.mxu0 0
    %3424 = vmatpush2.bf16.msra.mxu0 0
    %3425 = vmatprep.subr.bf16.mxu0 0
    %3426 = vmatpush2.bf16.msra.mxu0 0
    %3427 = vmatprep.subr.bf16.mxu0 0
    %3428 = vmatpush2.bf16.msra.mxu0 0
    %3429 = vmatprep.subr.bf16.mxu0 0
    %3430 = vmatpush2.bf16.msra.mxu0 0
    %3431 = vmatprep.subr.bf16.mxu0 0
    %3432 = vmatpush2.bf16.msra.mxu0 0
    %3433 = vmatprep.subr.bf16.mxu0 0
    %3434 = vmatpush2.bf16.msra.mxu0 0
    %3435 = vmatprep.subr.bf16.mxu0 0
    %3436 = vmatpush2.bf16.msra.mxu0 0
    %3437 = vmatprep.subr.bf16.mxu0 0
    %3438 = vmatpush2.bf16.msra.mxu0 0
    %3439 = vmatprep.mubr.bf16.mxu0 0
    %3440 = vmatmul.mubr.bf16.gmra.mxu0 %v3405
    %v3441 = vpop.f32.mrf.mxu0
    %v3442 = vadd.f32 0.0, %v3441
    %v3443 = vpop.f32.mrf.mxu0
    %v3444 = vpop.f32.mrf.mxu0
    %v3445 = vpop.f32.mrf.mxu0
    %3446 = vdwg.mxu0
    %v3447 = vadd.f32 %v3403, %v3442
    %v3448 = vld [vmem:[#allocation3 + $0x20] sm:$0xff]
    %3449 = vmatprep.subr.bf16.mxu0 0
    %3450 = vmatpush1.bf16.msra.mxu0 0
    %3451 = vmatprep.subr.bf16.mxu0 0
    %3452 = vmatpush1.bf16.msra.mxu0 0
    %3453 = vmatprep.subr.bf16.mxu0 0
    %3454 = vmatpush1.bf16.msra.mxu0 0
    %3455 = vmatprep.subr.bf16.mxu0 0
    %3456 = vmatpush1.bf16.msra.mxu0 0
    %3457 = vmatprep.subr.bf16.mxu0 0
    %3458 = vmatpush1.bf16.msra.mxu0 0
    %3459 = vmatprep.subr.bf16.mxu0 0
    %3460 = vmatpush1.bf16.msra.mxu0 0
    %3461 = vmatprep.subr.bf16.mxu0 0
    %3462 = vmatpush1.bf16.msra.mxu0 %v2638
    %3463 = vmatprep.subr.bf16.mxu0 0
    %3464 = vmatpush1.bf16.msra.mxu0 %v2637
    %3465 = vmatprep.subr.bf16.mxu0 0
    %3466 = vmatpush2.bf16.msra.mxu0 0
    %3467 = vmatprep.subr.bf16.mxu0 0
    %3468 = vmatpush2.bf16.msra.mxu0 0
    %3469 = vmatprep.subr.bf16.mxu0 0
    %3470 = vmatpush2.bf16.msra.mxu0 0
    %3471 = vmatprep.subr.bf16.mxu0 0
    %3472 = vmatpush2.bf16.msra.mxu0 0
    %3473 = vmatprep.subr.bf16.mxu0 0
    %3474 = vmatpush2.bf16.msra.mxu0 0
    %3475 = vmatprep.subr.bf16.mxu0 0
    %3476 = vmatpush2.bf16.msra.mxu0 0
    %3477 = vmatprep.subr.bf16.mxu0 0
    %3478 = vmatpush2.bf16.msra.mxu0 0
    %3479 = vmatprep.subr.bf16.mxu0 0
    %3480 = vmatpush2.bf16.msra.mxu0 0
    %3481 = vmatprep.mubr.bf16.mxu0 0
    %3482 = vmatmul.mubr.bf16.gmra.mxu0 %v3405
    %v3483 = vpop.f32.mrf.mxu0
    %v3484 = vadd.f32 0.0, %v3483
    %v3485 = vpop.f32.mrf.mxu0
    %v3486 = vpop.f32.mrf.mxu0
    %v3487 = vpop.f32.mrf.mxu0
    %3488 = vdwg.mxu0
    %v3489 = vadd.f32 %v3448, %v3484
    %v3490 = vld [vmem:[#allocation4 + $0x20] sm:$0xff]
    %3491 = vmatprep.subr.bf16.mxu0 0
    %3492 = vmatpush1.bf16.msra.mxu0 0
    %3493 = vmatprep.subr.bf16.mxu0 0
    %3494 = vmatpush1.bf16.msra.mxu0 0
    %3495 = vmatprep.subr.bf16.mxu0 0
    %3496 = vmatpush1.bf16.msra.mxu0 0
    %3497 = vmatprep.subr.bf16.mxu0 0
    %3498 = vmatpush1.bf16.msra.mxu0 0
    %3499 = vmatprep.subr.bf16.mxu0 0
    %3500 = vmatpush1.bf16.msra.mxu0 0
    %3501 = vmatprep.subr.bf16.mxu0 0
    %3502 = vmatpush1.bf16.msra.mxu0 0
    %3503 = vmatprep.subr.bf16.mxu0 0
    %3504 = vmatpush1.bf16.msra.mxu0 %v2692
    %3505 = vmatprep.subr.bf16.mxu0 0
    %3506 = vmatpush1.bf16.msra.mxu0 %v2691
    %3507 = vmatprep.subr.bf16.mxu0 0
    %3508 = vmatpush2.bf16.msra.mxu0 0
    %3509 = vmatprep.subr.bf16.mxu0 0
    %3510 = vmatpush2.bf16.msra.mxu0 0
    %3511 = vmatprep.subr.bf16.mxu0 0
    %3512 = vmatpush2.bf16.msra.mxu0 0
    %3513 = vmatprep.subr.bf16.mxu0 0
    %3514 = vmatpush2.bf16.msra.mxu0 0
    %3515 = vmatprep.subr.bf16.mxu0 0
    %3516 = vmatpush2.bf16.msra.mxu0 0
    %3517 = vmatprep.subr.bf16.mxu0 0
    %3518 = vmatpush2.bf16.msra.mxu0 0
    %3519 = vmatprep.subr.bf16.mxu0 0
    %3520 = vmatpush2.bf16.msra.mxu0 0
    %3521 = vmatprep.subr.bf16.mxu0 0
    %3522 = vmatpush2.bf16.msra.mxu0 0
    %3523 = vmatprep.mubr.bf16.mxu0 0
    %3524 = vmatmul.mubr.bf16.gmra.mxu0 %v3405
    %v3525 = vpop.f32.mrf.mxu0
    %v3526 = vadd.f32 0.0, %v3525
    %v3527 = vpop.f32.mrf.mxu0
    %v3528 = vpop.f32.mrf.mxu0
    %v3529 = vpop.f32.mrf.mxu0
    %3530 = vdwg.mxu0
    %v3531 = vadd.f32 %v3490, %v3526
    %v3532 = vld [vmem:[#allocation5 + $0x20] sm:$0xff]
    %3533 = vmatprep.subr.bf16.mxu0 0
    %3534 = vmatpush1.bf16.msra.mxu0 0
    %3535 = vmatprep.subr.bf16.mxu0 0
    %3536 = vmatpush1.bf16.msra.mxu0 0
    %3537 = vmatprep.subr.bf16.mxu0 0
    %3538 = vmatpush1.bf16.msra.mxu0 0
    %3539 = vmatprep.subr.bf16.mxu0 0
    %3540 = vmatpush1.bf16.msra.mxu0 0
    %3541 = vmatprep.subr.bf16.mxu0 0
    %3542 = vmatpush1.bf16.msra.mxu0 0
    %3543 = vmatprep.subr.bf16.mxu0 0
    %3544 = vmatpush1.bf16.msra.mxu0 0
    %3545 = vmatprep.subr.bf16.mxu0 0
    %3546 = vmatpush1.bf16.msra.mxu0 %v2746
    %3547 = vmatprep.subr.bf16.mxu0 0
    %3548 = vmatpush1.bf16.msra.mxu0 %v2745
    %3549 = vmatprep.subr.bf16.mxu0 0
    %3550 = vmatpush2.bf16.msra.mxu0 0
    %3551 = vmatprep.subr.bf16.mxu0 0
    %3552 = vmatpush2.bf16.msra.mxu0 0
    %3553 = vmatprep.subr.bf16.mxu0 0
    %3554 = vmatpush2.bf16.msra.mxu0 0
    %3555 = vmatprep.subr.bf16.mxu0 0
    %3556 = vmatpush2.bf16.msra.mxu0 0
    %3557 = vmatprep.subr.bf16.mxu0 0
    %3558 = vmatpush2.bf16.msra.mxu0 0
    %3559 = vmatprep.subr.bf16.mxu0 0
    %3560 = vmatpush2.bf16.msra.mxu0 0
    %3561 = vmatprep.subr.bf16.mxu0 0
    %3562 = vmatpush2.bf16.msra.mxu0 0
    %3563 = vmatprep.subr.bf16.mxu0 0
    %3564 = vmatpush2.bf16.msra.mxu0 0
    %3565 = vmatprep.mubr.bf16.mxu0 0
    %3566 = vmatmul.mubr.bf16.gmra.mxu0 %v3405
    %v3567 = vpop.f32.mrf.mxu0
    %v3568 = vadd.f32 0.0, %v3567
    %v3569 = vpop.f32.mrf.mxu0
    %v3570 = vpop.f32.mrf.mxu0
    %v3571 = vpop.f32.mrf.mxu0
    %3572 = vdwg.mxu0
    %v3573 = vadd.f32 %v3532, %v3568
    %v3574 = vxor.u32 %v3447, 2147483648
    %v3575 = vmul.f32 %v3574, 1.442695
    %v3576 = vpow.pop %v3575
    %v3577 = vadd.f32 %v3576, 1.0
    %v3578 = vrcp.pop %v3577
    %v3579 = vmul.f32 1.0, %v3578
    %v3580 = vxor.u32 %v3489, 2147483648
    %v3581 = vmul.f32 %v3580, 1.442695
    %v3582 = vpow.pop %v3581
    %v3583 = vadd.f32 %v3582, 1.0
    %v3584 = vrcp.pop %v3583
    %v3585 = vmul.f32 1.0, %v3584
    %v3586 = vtanh.pop %v3531
    %v3587 = vxor.u32 %v3573, 2147483648
    %v3588 = vmul.f32 %v3587, 1.442695
    %v3589 = vpow.pop %v3588
    %v3590 = vadd.f32 %v3589, 1.0
    %v3591 = vrcp.pop %v3590
    %v3592 = vmul.f32 1.0, %v3591
    %v3593 = vmul.f32 %v3585, %v3399
    %v3594 = vmul.f32 %v3579, %v3586
    %v3595 = vadd.f32 %v3593, %v3594
    %v3596 = vtanh.pop %v3595
    %v3597 = vmul.f32 %v3592, %v3596
    %v3598 = vpack.c.bf16 %v3597, %v3597
    %v3599 = vld [vmem:[#allocation2 + $0x28] sm:$0xff]
    %v3601 = vsel %vm220, %v3598, 0
    %3603 = vmatprep.subr.bf16.mxu0 0
    %3604 = vmatpush1.bf16.msra.mxu0 0
    %3605 = vmatprep.subr.bf16.mxu0 0
    %3606 = vmatpush1.bf16.msra.mxu0 0
    %3607 = vmatprep.subr.bf16.mxu0 0
    %3608 = vmatpush1.bf16.msra.mxu0 0
    %3609 = vmatprep.subr.bf16.mxu0 0
    %3610 = vmatpush1.bf16.msra.mxu0 0
    %3611 = vmatprep.subr.bf16.mxu0 0
    %3612 = vmatpush1.bf16.msra.mxu0 0
    %3613 = vmatprep.subr.bf16.mxu0 0
    %3614 = vmatpush1.bf16.msra.mxu0 0
    %3615 = vmatprep.subr.bf16.mxu0 0
    %3616 = vmatpush1.bf16.msra.mxu0 %v2584
    %3617 = vmatprep.subr.bf16.mxu0 0
    %3618 = vmatpush1.bf16.msra.mxu0 %v2583
    %3619 = vmatprep.subr.bf16.mxu0 0
    %3620 = vmatpush2.bf16.msra.mxu0 0
    %3621 = vmatprep.subr.bf16.mxu0 0
    %3622 = vmatpush2.bf16.msra.mxu0 0
    %3623 = vmatprep.subr.bf16.mxu0 0
    %3624 = vmatpush2.bf16.msra.mxu0 0
    %3625 = vmatprep.subr.bf16.mxu0 0
    %3626 = vmatpush2.bf16.msra.mxu0 0
    %3627 = vmatprep.subr.bf16.mxu0 0
    %3628 = vmatpush2.bf16.msra.mxu0 0
    %3629 = vmatprep.subr.bf16.mxu0 0
    %3630 = vmatpush2.bf16.msra.mxu0 0
    %3631 = vmatprep.subr.bf16.mxu0 0
    %3632 = vmatpush2.bf16.msra.mxu0 0
    %3633 = vmatprep.subr.bf16.mxu0 0
    %3634 = vmatpush2.bf16.msra.mxu0 0
    %3635 = vmatprep.mubr.bf16.mxu0 0
    %3636 = vmatmul.mubr.bf16.gmra.mxu0 %v3601
    %v3637 = vpop.f32.mrf.mxu0
    %v3638 = vadd.f32 0.0, %v3637
    %v3639 = vpop.f32.mrf.mxu0
    %v3640 = vpop.f32.mrf.mxu0
    %v3641 = vpop.f32.mrf.mxu0
    %3642 = vdwg.mxu0
    %v3643 = vadd.f32 %v3599, %v3638
    %v3644 = vld [vmem:[#allocation3 + $0x28] sm:$0xff]
    %3645 = vmatprep.subr.bf16.mxu0 0
    %3646 = vmatpush1.bf16.msra.mxu0 0
    %3647 = vmatprep.subr.bf16.mxu0 0
    %3648 = vmatpush1.bf16.msra.mxu0 0
    %3649 = vmatprep.subr.bf16.mxu0 0
    %3650 = vmatpush1.bf16.msra.mxu0 0
    %3651 = vmatprep.subr.bf16.mxu0 0
    %3652 = vmatpush1.bf16.msra.mxu0 0
    %3653 = vmatprep.subr.bf16.mxu0 0
    %3654 = vmatpush1.bf16.msra.mxu0 0
    %3655 = vmatprep.subr.bf16.mxu0 0
    %3656 = vmatpush1.bf16.msra.mxu0 0
    %3657 = vmatprep.subr.bf16.mxu0 0
    %3658 = vmatpush1.bf16.msra.mxu0 %v2638
    %3659 = vmatprep.subr.bf16.mxu0 0
    %3660 = vmatpush1.bf16.msra.mxu0 %v2637
    %3661 = vmatprep.subr.bf16.mxu0 0
    %3662 = vmatpush2.bf16.msra.mxu0 0
    %3663 = vmatprep.subr.bf16.mxu0 0
    %3664 = vmatpush2.bf16.msra.mxu0 0
    %3665 = vmatprep.subr.bf16.mxu0 0
    %3666 = vmatpush2.bf16.msra.mxu0 0
    %3667 = vmatprep.subr.bf16.mxu0 0
    %3668 = vmatpush2.bf16.msra.mxu0 0
    %3669 = vmatprep.subr.bf16.mxu0 0
    %3670 = vmatpush2.bf16.msra.mxu0 0
    %3671 = vmatprep.subr.bf16.mxu0 0
    %3672 = vmatpush2.bf16.msra.mxu0 0
    %3673 = vmatprep.subr.bf16.mxu0 0
    %3674 = vmatpush2.bf16.msra.mxu0 0
    %3675 = vmatprep.subr.bf16.mxu0 0
    %3676 = vmatpush2.bf16.msra.mxu0 0
    %3677 = vmatprep.mubr.bf16.mxu0 0
    %3678 = vmatmul.mubr.bf16.gmra.mxu0 %v3601
    %v3679 = vpop.f32.mrf.mxu0
    %v3680 = vadd.f32 0.0, %v3679
    %v3681 = vpop.f32.mrf.mxu0
    %v3682 = vpop.f32.mrf.mxu0
    %v3683 = vpop.f32.mrf.mxu0
    %3684 = vdwg.mxu0
    %v3685 = vadd.f32 %v3644, %v3680
    %v3686 = vld [vmem:[#allocation4 + $0x28] sm:$0xff]
    %3687 = vmatprep.subr.bf16.mxu0 0
    %3688 = vmatpush1.bf16.msra.mxu0 0
    %3689 = vmatprep.subr.bf16.mxu0 0
    %3690 = vmatpush1.bf16.msra.mxu0 0
    %3691 = vmatprep.subr.bf16.mxu0 0
    %3692 = vmatpush1.bf16.msra.mxu0 0
    %3693 = vmatprep.subr.bf16.mxu0 0
    %3694 = vmatpush1.bf16.msra.mxu0 0
    %3695 = vmatprep.subr.bf16.mxu0 0
    %3696 = vmatpush1.bf16.msra.mxu0 0
    %3697 = vmatprep.subr.bf16.mxu0 0
    %3698 = vmatpush1.bf16.msra.mxu0 0
    %3699 = vmatprep.subr.bf16.mxu0 0
    %3700 = vmatpush1.bf16.msra.mxu0 %v2692
    %3701 = vmatprep.subr.bf16.mxu0 0
    %3702 = vmatpush1.bf16.msra.mxu0 %v2691
    %3703 = vmatprep.subr.bf16.mxu0 0
    %3704 = vmatpush2.bf16.msra.mxu0 0
    %3705 = vmatprep.subr.bf16.mxu0 0
    %3706 = vmatpush2.bf16.msra.mxu0 0
    %3707 = vmatprep.subr.bf16.mxu0 0
    %3708 = vmatpush2.bf16.msra.mxu0 0
    %3709 = vmatprep.subr.bf16.mxu0 0
    %3710 = vmatpush2.bf16.msra.mxu0 0
    %3711 = vmatprep.subr.bf16.mxu0 0
    %3712 = vmatpush2.bf16.msra.mxu0 0
    %3713 = vmatprep.subr.bf16.mxu0 0
    %3714 = vmatpush2.bf16.msra.mxu0 0
    %3715 = vmatprep.subr.bf16.mxu0 0
    %3716 = vmatpush2.bf16.msra.mxu0 0
    %3717 = vmatprep.subr.bf16.mxu0 0
    %3718 = vmatpush2.bf16.msra.mxu0 0
    %3719 = vmatprep.mubr.bf16.mxu0 0
    %3720 = vmatmul.mubr.bf16.gmra.mxu0 %v3601
    %v3721 = vpop.f32.mrf.mxu0
    %v3722 = vadd.f32 0.0, %v3721
    %v3723 = vpop.f32.mrf.mxu0
    %v3724 = vpop.f32.mrf.mxu0
    %v3725 = vpop.f32.mrf.mxu0
    %3726 = vdwg.mxu0
    %v3727 = vadd.f32 %v3686, %v3722
    %v3728 = vld [vmem:[#allocation5 + $0x28] sm:$0xff]
    %3729 = vmatprep.subr.bf16.mxu0 0
    %3730 = vmatpush1.bf16.msra.mxu0 0
    %3731 = vmatprep.subr.bf16.mxu0 0
    %3732 = vmatpush1.bf16.msra.mxu0 0
    %3733 = vmatprep.subr.bf16.mxu0 0
    %3734 = vmatpush1.bf16.msra.mxu0 0
    %3735 = vmatprep.subr.bf16.mxu0 0
    %3736 = vmatpush1.bf16.msra.mxu0 0
    %3737 = vmatprep.subr.bf16.mxu0 0
    %3738 = vmatpush1.bf16.msra.mxu0 0
    %3739 = vmatprep.subr.bf16.mxu0 0
    %3740 = vmatpush1.bf16.msra.mxu0 0
    %3741 = vmatprep.subr.bf16.mxu0 0
    %3742 = vmatpush1.bf16.msra.mxu0 %v2746
    %3743 = vmatprep.subr.bf16.mxu0 0
    %3744 = vmatpush1.bf16.msra.mxu0 %v2745
    %3745 = vmatprep.subr.bf16.mxu0 0
    %3746 = vmatpush2.bf16.msra.mxu0 0
    %3747 = vmatprep.subr.bf16.mxu0 0
    %3748 = vmatpush2.bf16.msra.mxu0 0
    %3749 = vmatprep.subr.bf16.mxu0 0
    %3750 = vmatpush2.bf16.msra.mxu0 0
    %3751 = vmatprep.subr.bf16.mxu0 0
    %3752 = vmatpush2.bf16.msra.mxu0 0
    %3753 = vmatprep.subr.bf16.mxu0 0
    %3754 = vmatpush2.bf16.msra.mxu0 0
    %3755 = vmatprep.subr.bf16.mxu0 0
    %3756 = vmatpush2.bf16.msra.mxu0 0
    %3757 = vmatprep.subr.bf16.mxu0 0
    %3758 = vmatpush2.bf16.msra.mxu0 0
    %3759 = vmatprep.subr.bf16.mxu0 0
    %3760 = vmatpush2.bf16.msra.mxu0 0
    %3761 = vmatprep.mubr.bf16.mxu0 0
    %3762 = vmatmul.mubr.bf16.gmra.mxu0 %v3601
    %v3763 = vpop.f32.mrf.mxu0
    %v3764 = vadd.f32 0.0, %v3763
    %v3765 = vpop.f32.mrf.mxu0
    %v3766 = vpop.f32.mrf.mxu0
    %v3767 = vpop.f32.mrf.mxu0
    %3768 = vdwg.mxu0
    %v3769 = vadd.f32 %v3728, %v3764
    %v3770 = vxor.u32 %v3643, 2147483648
    %v3771 = vmul.f32 %v3770, 1.442695
    %v3772 = vpow.pop %v3771
    %v3773 = vadd.f32 %v3772, 1.0
    %v3774 = vrcp.pop %v3773
    %v3775 = vmul.f32 1.0, %v3774
    %v3776 = vxor.u32 %v3685, 2147483648
    %v3777 = vmul.f32 %v3776, 1.442695
    %v3778 = vpow.pop %v3777
    %v3779 = vadd.f32 %v3778, 1.0
    %v3780 = vrcp.pop %v3779
    %v3781 = vmul.f32 1.0, %v3780
    %v3782 = vtanh.pop %v3727
    %v3783 = vxor.u32 %v3769, 2147483648
    %v3784 = vmul.f32 %v3783, 1.442695
    %v3785 = vpow.pop %v3784
    %v3786 = vadd.f32 %v3785, 1.0
    %v3787 = vrcp.pop %v3786
    %v3788 = vmul.f32 1.0, %v3787
    %v3789 = vmul.f32 %v3781, %v3595
    %v3790 = vmul.f32 %v3775, %v3782
    %v3791 = vadd.f32 %v3789, %v3790
    %v3792 = vtanh.pop %v3791
    %v3793 = vmul.f32 %v3788, %v3792
    %v3794 = vpack.c.bf16 %v3793, %v3793
    %v3795 = vld [vmem:[#allocation2 + $0x30] sm:$0xff]
    %v3797 = vsel %vm220, %v3794, 0
    %3799 = vmatprep.subr.bf16.mxu0 0
    %3800 = vmatpush1.bf16.msra.mxu0 0
    %3801 = vmatprep.subr.bf16.mxu0 0
    %3802 = vmatpush1.bf16.msra.mxu0 0
    %3803 = vmatprep.subr.bf16.mxu0 0
    %3804 = vmatpush1.bf16.msra.mxu0 0
    %3805 = vmatprep.subr.bf16.mxu0 0
    %3806 = vmatpush1.bf16.msra.mxu0 0
    %3807 = vmatprep.subr.bf16.mxu0 0
    %3808 = vmatpush1.bf16.msra.mxu0 0
    %3809 = vmatprep.subr.bf16.mxu0 0
    %3810 = vmatpush1.bf16.msra.mxu0 0
    %3811 = vmatprep.subr.bf16.mxu0 0
    %3812 = vmatpush1.bf16.msra.mxu0 %v2584
    %3813 = vmatprep.subr.bf16.mxu0 0
    %3814 = vmatpush1.bf16.msra.mxu0 %v2583
    %3815 = vmatprep.subr.bf16.mxu0 0
    %3816 = vmatpush2.bf16.msra.mxu0 0
    %3817 = vmatprep.subr.bf16.mxu0 0
    %3818 = vmatpush2.bf16.msra.mxu0 0
    %3819 = vmatprep.subr.bf16.mxu0 0
    %3820 = vmatpush2.bf16.msra.mxu0 0
    %3821 = vmatprep.subr.bf16.mxu0 0
    %3822 = vmatpush2.bf16.msra.mxu0 0
    %3823 = vmatprep.subr.bf16.mxu0 0
    %3824 = vmatpush2.bf16.msra.mxu0 0
    %3825 = vmatprep.subr.bf16.mxu0 0
    %3826 = vmatpush2.bf16.msra.mxu0 0
    %3827 = vmatprep.subr.bf16.mxu0 0
    %3828 = vmatpush2.bf16.msra.mxu0 0
    %3829 = vmatprep.subr.bf16.mxu0 0
    %3830 = vmatpush2.bf16.msra.mxu0 0
    %3831 = vmatprep.mubr.bf16.mxu0 0
    %3832 = vmatmul.mubr.bf16.gmra.mxu0 %v3797
    %v3833 = vpop.f32.mrf.mxu0
    %v3834 = vadd.f32 0.0, %v3833
    %v3835 = vpop.f32.mrf.mxu0
    %v3836 = vpop.f32.mrf.mxu0
    %v3837 = vpop.f32.mrf.mxu0
    %3838 = vdwg.mxu0
    %v3839 = vadd.f32 %v3795, %v3834
    %v3840 = vld [vmem:[#allocation3 + $0x30] sm:$0xff]
    %3841 = vmatprep.subr.bf16.mxu0 0
    %3842 = vmatpush1.bf16.msra.mxu0 0
    %3843 = vmatprep.subr.bf16.mxu0 0
    %3844 = vmatpush1.bf16.msra.mxu0 0
    %3845 = vmatprep.subr.bf16.mxu0 0
    %3846 = vmatpush1.bf16.msra.mxu0 0
    %3847 = vmatprep.subr.bf16.mxu0 0
    %3848 = vmatpush1.bf16.msra.mxu0 0
    %3849 = vmatprep.subr.bf16.mxu0 0
    %3850 = vmatpush1.bf16.msra.mxu0 0
    %3851 = vmatprep.subr.bf16.mxu0 0
    %3852 = vmatpush1.bf16.msra.mxu0 0
    %3853 = vmatprep.subr.bf16.mxu0 0
    %3854 = vmatpush1.bf16.msra.mxu0 %v2638
    %3855 = vmatprep.subr.bf16.mxu0 0
    %3856 = vmatpush1.bf16.msra.mxu0 %v2637
    %3857 = vmatprep.subr.bf16.mxu0 0
    %3858 = vmatpush2.bf16.msra.mxu0 0
    %3859 = vmatprep.subr.bf16.mxu0 0
    %3860 = vmatpush2.bf16.msra.mxu0 0
    %3861 = vmatprep.subr.bf16.mxu0 0
    %3862 = vmatpush2.bf16.msra.mxu0 0
    %3863 = vmatprep.subr.bf16.mxu0 0
    %3864 = vmatpush2.bf16.msra.mxu0 0
    %3865 = vmatprep.subr.bf16.mxu0 0
    %3866 = vmatpush2.bf16.msra.mxu0 0
    %3867 = vmatprep.subr.bf16.mxu0 0
    %3868 = vmatpush2.bf16.msra.mxu0 0
    %3869 = vmatprep.subr.bf16.mxu0 0
    %3870 = vmatpush2.bf16.msra.mxu0 0
    %3871 = vmatprep.subr.bf16.mxu0 0
    %3872 = vmatpush2.bf16.msra.mxu0 0
    %3873 = vmatprep.mubr.bf16.mxu0 0
    %3874 = vmatmul.mubr.bf16.gmra.mxu0 %v3797
    %v3875 = vpop.f32.mrf.mxu0
    %v3876 = vadd.f32 0.0, %v3875
    %v3877 = vpop.f32.mrf.mxu0
    %v3878 = vpop.f32.mrf.mxu0
    %v3879 = vpop.f32.mrf.mxu0
    %3880 = vdwg.mxu0
    %v3881 = vadd.f32 %v3840, %v3876
    %v3882 = vld [vmem:[#allocation4 + $0x30] sm:$0xff]
    %3883 = vmatprep.subr.bf16.mxu0 0
    %3884 = vmatpush1.bf16.msra.mxu0 0
    %3885 = vmatprep.subr.bf16.mxu0 0
    %3886 = vmatpush1.bf16.msra.mxu0 0
    %3887 = vmatprep.subr.bf16.mxu0 0
    %3888 = vmatpush1.bf16.msra.mxu0 0
    %3889 = vmatprep.subr.bf16.mxu0 0
    %3890 = vmatpush1.bf16.msra.mxu0 0
    %3891 = vmatprep.subr.bf16.mxu0 0
    %3892 = vmatpush1.bf16.msra.mxu0 0
    %3893 = vmatprep.subr.bf16.mxu0 0
    %3894 = vmatpush1.bf16.msra.mxu0 0
    %3895 = vmatprep.subr.bf16.mxu0 0
    %3896 = vmatpush1.bf16.msra.mxu0 %v2692
    %3897 = vmatprep.subr.bf16.mxu0 0
    %3898 = vmatpush1.bf16.msra.mxu0 %v2691
    %3899 = vmatprep.subr.bf16.mxu0 0
    %3900 = vmatpush2.bf16.msra.mxu0 0
    %3901 = vmatprep.subr.bf16.mxu0 0
    %3902 = vmatpush2.bf16.msra.mxu0 0
    %3903 = vmatprep.subr.bf16.mxu0 0
    %3904 = vmatpush2.bf16.msra.mxu0 0
    %3905 = vmatprep.subr.bf16.mxu0 0
    %3906 = vmatpush2.bf16.msra.mxu0 0
    %3907 = vmatprep.subr.bf16.mxu0 0
    %3908 = vmatpush2.bf16.msra.mxu0 0
    %3909 = vmatprep.subr.bf16.mxu0 0
    %3910 = vmatpush2.bf16.msra.mxu0 0
    %3911 = vmatprep.subr.bf16.mxu0 0
    %3912 = vmatpush2.bf16.msra.mxu0 0
    %3913 = vmatprep.subr.bf16.mxu0 0
    %3914 = vmatpush2.bf16.msra.mxu0 0
    %3915 = vmatprep.mubr.bf16.mxu0 0
    %3916 = vmatmul.mubr.bf16.gmra.mxu0 %v3797
    %v3917 = vpop.f32.mrf.mxu0
    %v3918 = vadd.f32 0.0, %v3917
    %v3919 = vpop.f32.mrf.mxu0
    %v3920 = vpop.f32.mrf.mxu0
    %v3921 = vpop.f32.mrf.mxu0
    %3922 = vdwg.mxu0
    %v3923 = vadd.f32 %v3882, %v3918
    %v3924 = vld [vmem:[#allocation5 + $0x30] sm:$0xff]
    %3925 = vmatprep.subr.bf16.mxu0 0
    %3926 = vmatpush1.bf16.msra.mxu0 0
    %3927 = vmatprep.subr.bf16.mxu0 0
    %3928 = vmatpush1.bf16.msra.mxu0 0
    %3929 = vmatprep.subr.bf16.mxu0 0
    %3930 = vmatpush1.bf16.msra.mxu0 0
    %3931 = vmatprep.subr.bf16.mxu0 0
    %3932 = vmatpush1.bf16.msra.mxu0 0
    %3933 = vmatprep.subr.bf16.mxu0 0
    %3934 = vmatpush1.bf16.msra.mxu0 0
    %3935 = vmatprep.subr.bf16.mxu0 0
    %3936 = vmatpush1.bf16.msra.mxu0 0
    %3937 = vmatprep.subr.bf16.mxu0 0
    %3938 = vmatpush1.bf16.msra.mxu0 %v2746
    %3939 = vmatprep.subr.bf16.mxu0 0
    %3940 = vmatpush1.bf16.msra.mxu0 %v2745
    %3941 = vmatprep.subr.bf16.mxu0 0
    %3942 = vmatpush2.bf16.msra.mxu0 0
    %3943 = vmatprep.subr.bf16.mxu0 0
    %3944 = vmatpush2.bf16.msra.mxu0 0
    %3945 = vmatprep.subr.bf16.mxu0 0
    %3946 = vmatpush2.bf16.msra.mxu0 0
    %3947 = vmatprep.subr.bf16.mxu0 0
    %3948 = vmatpush2.bf16.msra.mxu0 0
    %3949 = vmatprep.subr.bf16.mxu0 0
    %3950 = vmatpush2.bf16.msra.mxu0 0
    %3951 = vmatprep.subr.bf16.mxu0 0
    %3952 = vmatpush2.bf16.msra.mxu0 0
    %3953 = vmatprep.subr.bf16.mxu0 0
    %3954 = vmatpush2.bf16.msra.mxu0 0
    %3955 = vmatprep.subr.bf16.mxu0 0
    %3956 = vmatpush2.bf16.msra.mxu0 0
    %3957 = vmatprep.mubr.bf16.mxu0 0
    %3958 = vmatmul.mubr.bf16.gmra.mxu0 %v3797
    %v3959 = vpop.f32.mrf.mxu0
    %v3960 = vadd.f32 0.0, %v3959
    %v3961 = vpop.f32.mrf.mxu0
    %v3962 = vpop.f32.mrf.mxu0
    %v3963 = vpop.f32.mrf.mxu0
    %3964 = vdwg.mxu0
    %v3965 = vadd.f32 %v3924, %v3960
    %v3966 = vxor.u32 %v3839, 2147483648
    %v3967 = vmul.f32 %v3966, 1.442695
    %v3968 = vpow.pop %v3967
    %v3969 = vadd.f32 %v3968, 1.0
    %v3970 = vrcp.pop %v3969
    %v3971 = vmul.f32 1.0, %v3970
    %v3972 = vxor.u32 %v3881, 2147483648
    %v3973 = vmul.f32 %v3972, 1.442695
    %v3974 = vpow.pop %v3973
    %v3975 = vadd.f32 %v3974, 1.0
    %v3976 = vrcp.pop %v3975
    %v3977 = vmul.f32 1.0, %v3976
    %v3978 = vtanh.pop %v3923
    %v3979 = vxor.u32 %v3965, 2147483648
    %v3980 = vmul.f32 %v3979, 1.442695
    %v3981 = vpow.pop %v3980
    %v3982 = vadd.f32 %v3981, 1.0
    %v3983 = vrcp.pop %v3982
    %v3984 = vmul.f32 1.0, %v3983
    %v3985 = vmul.f32 %v3977, %v3791
    %v3986 = vmul.f32 %v3971, %v3978
    %v3987 = vadd.f32 %v3985, %v3986
    %v3988 = vtanh.pop %v3987
    %v3989 = vmul.f32 %v3984, %v3988
    %v3990 = vpack.c.bf16 %v3989, %v3989
    %v3991 = vld [vmem:[#allocation2 + $0x38] sm:$0xff]
    %v3993 = vsel %vm220, %v3990, 0
    %3995 = vmatprep.subr.bf16.mxu0 0
    %3996 = vmatpush1.bf16.msra.mxu0 0
    %3997 = vmatprep.subr.bf16.mxu0 0
    %3998 = vmatpush1.bf16.msra.mxu0 0
    %3999 = vmatprep.subr.bf16.mxu0 0
    %4000 = vmatpush1.bf16.msra.mxu0 0
    %4001 = vmatprep.subr.bf16.mxu0 0
    %4002 = vmatpush1.bf16.msra.mxu0 0
    %4003 = vmatprep.subr.bf16.mxu0 0
    %4004 = vmatpush1.bf16.msra.mxu0 0
    %4005 = vmatprep.subr.bf16.mxu0 0
    %4006 = vmatpush1.bf16.msra.mxu0 0
    %4007 = vmatprep.subr.bf16.mxu0 0
    %4008 = vmatpush1.bf16.msra.mxu0 %v2584
    %4009 = vmatprep.subr.bf16.mxu0 0
    %4010 = vmatpush1.bf16.msra.mxu0 %v2583
    %4011 = vmatprep.subr.bf16.mxu0 0
    %4012 = vmatpush2.bf16.msra.mxu0 0
    %4013 = vmatprep.subr.bf16.mxu0 0
    %4014 = vmatpush2.bf16.msra.mxu0 0
    %4015 = vmatprep.subr.bf16.mxu0 0
    %4016 = vmatpush2.bf16.msra.mxu0 0
    %4017 = vmatprep.subr.bf16.mxu0 0
    %4018 = vmatpush2.bf16.msra.mxu0 0
    %4019 = vmatprep.subr.bf16.mxu0 0
    %4020 = vmatpush2.bf16.msra.mxu0 0
    %4021 = vmatprep.subr.bf16.mxu0 0
    %4022 = vmatpush2.bf16.msra.mxu0 0
    %4023 = vmatprep.subr.bf16.mxu0 0
    %4024 = vmatpush2.bf16.msra.mxu0 0
    %4025 = vmatprep.subr.bf16.mxu0 0
    %4026 = vmatpush2.bf16.msra.mxu0 0
    %4027 = vmatprep.mubr.bf16.mxu0 0
    %4028 = vmatmul.mubr.bf16.gmra.mxu0 %v3993
    %v4029 = vpop.f32.mrf.mxu0
    %v4030 = vadd.f32 0.0, %v4029
    %v4031 = vpop.f32.mrf.mxu0
    %v4032 = vpop.f32.mrf.mxu0
    %v4033 = vpop.f32.mrf.mxu0
    %4034 = vdwg.mxu0
    %v4035 = vadd.f32 %v3991, %v4030
    %v4036 = vld [vmem:[#allocation3 + $0x38] sm:$0xff]
    %4037 = vmatprep.subr.bf16.mxu0 0
    %4038 = vmatpush1.bf16.msra.mxu0 0
    %4039 = vmatprep.subr.bf16.mxu0 0
    %4040 = vmatpush1.bf16.msra.mxu0 0
    %4041 = vmatprep.subr.bf16.mxu0 0
    %4042 = vmatpush1.bf16.msra.mxu0 0
    %4043 = vmatprep.subr.bf16.mxu0 0
    %4044 = vmatpush1.bf16.msra.mxu0 0
    %4045 = vmatprep.subr.bf16.mxu0 0
    %4046 = vmatpush1.bf16.msra.mxu0 0
    %4047 = vmatprep.subr.bf16.mxu0 0
    %4048 = vmatpush1.bf16.msra.mxu0 0
    %4049 = vmatprep.subr.bf16.mxu0 0
    %4050 = vmatpush1.bf16.msra.mxu0 %v2638
    %4051 = vmatprep.subr.bf16.mxu0 0
    %4052 = vmatpush1.bf16.msra.mxu0 %v2637
    %4053 = vmatprep.subr.bf16.mxu0 0
    %4054 = vmatpush2.bf16.msra.mxu0 0
    %4055 = vmatprep.subr.bf16.mxu0 0
    %4056 = vmatpush2.bf16.msra.mxu0 0
    %4057 = vmatprep.subr.bf16.mxu0 0
    %4058 = vmatpush2.bf16.msra.mxu0 0
    %4059 = vmatprep.subr.bf16.mxu0 0
    %4060 = vmatpush2.bf16.msra.mxu0 0
    %4061 = vmatprep.subr.bf16.mxu0 0
    %4062 = vmatpush2.bf16.msra.mxu0 0
    %4063 = vmatprep.subr.bf16.mxu0 0
    %4064 = vmatpush2.bf16.msra.mxu0 0
    %4065 = vmatprep.subr.bf16.mxu0 0
    %4066 = vmatpush2.bf16.msra.mxu0 0
    %4067 = vmatprep.subr.bf16.mxu0 0
    %4068 = vmatpush2.bf16.msra.mxu0 0
    %4069 = vmatprep.mubr.bf16.mxu0 0
    %4070 = vmatmul.mubr.bf16.gmra.mxu0 %v3993
    %v4071 = vpop.f32.mrf.mxu0
    %v4072 = vadd.f32 0.0, %v4071
    %v4073 = vpop.f32.mrf.mxu0
    %v4074 = vpop.f32.mrf.mxu0
    %v4075 = vpop.f32.mrf.mxu0
    %4076 = vdwg.mxu0
    %v4077 = vadd.f32 %v4036, %v4072
    %v4078 = vld [vmem:[#allocation4 + $0x38] sm:$0xff]
    %4079 = vmatprep.subr.bf16.mxu0 0
    %4080 = vmatpush1.bf16.msra.mxu0 0
    %4081 = vmatprep.subr.bf16.mxu0 0
    %4082 = vmatpush1.bf16.msra.mxu0 0
    %4083 = vmatprep.subr.bf16.mxu0 0
    %4084 = vmatpush1.bf16.msra.mxu0 0
    %4085 = vmatprep.subr.bf16.mxu0 0
    %4086 = vmatpush1.bf16.msra.mxu0 0
    %4087 = vmatprep.subr.bf16.mxu0 0
    %4088 = vmatpush1.bf16.msra.mxu0 0
    %4089 = vmatprep.subr.bf16.mxu0 0
    %4090 = vmatpush1.bf16.msra.mxu0 0
    %4091 = vmatprep.subr.bf16.mxu0 0
    %4092 = vmatpush1.bf16.msra.mxu0 %v2692
    %4093 = vmatprep.subr.bf16.mxu0 0
    %4094 = vmatpush1.bf16.msra.mxu0 %v2691
    %4095 = vmatprep.subr.bf16.mxu0 0
    %4096 = vmatpush2.bf16.msra.mxu0 0
    %4097 = vmatprep.subr.bf16.mxu0 0
    %4098 = vmatpush2.bf16.msra.mxu0 0
    %4099 = vmatprep.subr.bf16.mxu0 0
    %4100 = vmatpush2.bf16.msra.mxu0 0
    %4101 = vmatprep.subr.bf16.mxu0 0
    %4102 = vmatpush2.bf16.msra.mxu0 0
    %4103 = vmatprep.subr.bf16.mxu0 0
    %4104 = vmatpush2.bf16.msra.mxu0 0
    %4105 = vmatprep.subr.bf16.mxu0 0
    %4106 = vmatpush2.bf16.msra.mxu0 0
    %4107 = vmatprep.subr.bf16.mxu0 0
    %4108 = vmatpush2.bf16.msra.mxu0 0
    %4109 = vmatprep.subr.bf16.mxu0 0
    %4110 = vmatpush2.bf16.msra.mxu0 0
    %4111 = vmatprep.mubr.bf16.mxu0 0
    %4112 = vmatmul.mubr.bf16.gmra.mxu0 %v3993
    %v4113 = vpop.f32.mrf.mxu0
    %v4114 = vadd.f32 0.0, %v4113
    %v4115 = vpop.f32.mrf.mxu0
    %v4116 = vpop.f32.mrf.mxu0
    %v4117 = vpop.f32.mrf.mxu0
    %4118 = vdwg.mxu0
    %v4119 = vadd.f32 %v4078, %v4114
    %v4120 = vld [vmem:[#allocation5 + $0x38] sm:$0xff]
    %4121 = vmatprep.subr.bf16.mxu0 0
    %4122 = vmatpush1.bf16.msra.mxu0 0
    %4123 = vmatprep.subr.bf16.mxu0 0
    %4124 = vmatpush1.bf16.msra.mxu0 0
    %4125 = vmatprep.subr.bf16.mxu0 0
    %4126 = vmatpush1.bf16.msra.mxu0 0
    %4127 = vmatprep.subr.bf16.mxu0 0
    %4128 = vmatpush1.bf16.msra.mxu0 0
    %4129 = vmatprep.subr.bf16.mxu0 0
    %4130 = vmatpush1.bf16.msra.mxu0 0
    %4131 = vmatprep.subr.bf16.mxu0 0
    %4132 = vmatpush1.bf16.msra.mxu0 0
    %4133 = vmatprep.subr.bf16.mxu0 0
    %4134 = vmatpush1.bf16.msra.mxu0 %v2746
    %4135 = vmatprep.subr.bf16.mxu0 0
    %4136 = vmatpush1.bf16.msra.mxu0 %v2745
    %4137 = vmatprep.subr.bf16.mxu0 0
    %4138 = vmatpush2.bf16.msra.mxu0 0
    %4139 = vmatprep.subr.bf16.mxu0 0
    %4140 = vmatpush2.bf16.msra.mxu0 0
    %4141 = vmatprep.subr.bf16.mxu0 0
    %4142 = vmatpush2.bf16.msra.mxu0 0
    %4143 = vmatprep.subr.bf16.mxu0 0
    %4144 = vmatpush2.bf16.msra.mxu0 0
    %4145 = vmatprep.subr.bf16.mxu0 0
    %4146 = vmatpush2.bf16.msra.mxu0 0
    %4147 = vmatprep.subr.bf16.mxu0 0
    %4148 = vmatpush2.bf16.msra.mxu0 0
    %4149 = vmatprep.subr.bf16.mxu0 0
    %4150 = vmatpush2.bf16.msra.mxu0 0
    %4151 = vmatprep.subr.bf16.mxu0 0
    %4152 = vmatpush2.bf16.msra.mxu0 0
    %4153 = vmatprep.mubr.bf16.mxu0 0
    %4154 = vmatmul.mubr.bf16.gmra.mxu0 %v3993
    %v4155 = vpop.f32.mrf.mxu0
    %v4156 = vadd.f32 0.0, %v4155
    %v4157 = vpop.f32.mrf.mxu0
    %v4158 = vpop.f32.mrf.mxu0
    %v4159 = vpop.f32.mrf.mxu0
    %4160 = vdwg.mxu0
    %v4161 = vadd.f32 %v4120, %v4156
    %v4162 = vxor.u32 %v4035, 2147483648
    %v4163 = vmul.f32 %v4162, 1.442695
    %v4164 = vpow.pop %v4163
    %v4165 = vadd.f32 %v4164, 1.0
    %v4166 = vrcp.pop %v4165
    %v4167 = vmul.f32 1.0, %v4166
    %v4168 = vxor.u32 %v4077, 2147483648
    %v4169 = vmul.f32 %v4168, 1.442695
    %v4170 = vpow.pop %v4169
    %v4171 = vadd.f32 %v4170, 1.0
    %v4172 = vrcp.pop %v4171
    %v4173 = vmul.f32 1.0, %v4172
    %v4174 = vtanh.pop %v4119
    %v4175 = vxor.u32 %v4161, 2147483648
    %v4176 = vmul.f32 %v4175, 1.442695
    %v4177 = vpow.pop %v4176
    %v4178 = vadd.f32 %v4177, 1.0
    %v4179 = vrcp.pop %v4178
    %v4180 = vmul.f32 1.0, %v4179
    %v4181 = vmul.f32 %v4173, %v3987
    %v4182 = vmul.f32 %v4167, %v4174
    %v4183 = vadd.f32 %v4181, %v4182
    %v4184 = vtanh.pop %v4183
    %v4185 = vmul.f32 %v4180, %v4184
    %v4186 = vld [vmem:[%s7] sm:$0xff]
    %v4187 = vld [vmem:[%s7 + $0x8] sm:$0xff]
    %v4188 = vld [vmem:[%s7 + $0x10] sm:$0xff]
    %v4189 = vld [vmem:[%s7 + $0x18] sm:$0xff]
    %v4190 = vld [vmem:[#allocation14] sm:$0x1]
    %v4192 = vlaneseq
    %v4193 = vshrl.u32 %v4192, 7
    %v4194 = vsub.s32 0, %v4193
    %v4195 = vrot.slane %v4190, %v4194
    %v4198 = vsel %vm220, %v4185, 0
    %4200 = vmatprep.subr.mxu0 0.0
    %4201 = vmatpush1.msra.mxu0 0.0
    %4202 = vmatprep.subr.mxu0 0.0
    %4203 = vmatpush1.msra.mxu0 0.0
    %4204 = vmatprep.subr.mxu0 0.0
    %4205 = vmatpush1.msra.mxu0 0.0
    %4206 = vmatprep.subr.mxu0 0.0
    %4207 = vmatpush1.msra.mxu0 0.0
    %4208 = vmatprep.subr.mxu0 0.0
    %4209 = vmatpush1.msra.mxu0 0.0
    %4210 = vmatprep.subr.mxu0 0.0
    %4211 = vmatpush1.msra.mxu0 0.0
    %4212 = vmatprep.subr.mxu0 0.0
    %4213 = vmatpush1.msra.mxu0 0.0
    %4214 = vmatprep.subr.mxu0 0.0
    %4215 = vmatpush1.msra.mxu0 0.0
    %4216 = vmatprep.subr.mxu0 0.0
    %4217 = vmatpush1.msra.mxu0 0.0
    %4218 = vmatprep.subr.mxu0 0.0
    %4219 = vmatpush1.msra.mxu0 0.0
    %4220 = vmatprep.subr.mxu0 0.0
    %4221 = vmatpush1.msra.mxu0 0.0
    %4222 = vmatprep.subr.mxu0 0.0
    %4223 = vmatpush1.msra.mxu0 0.0
    %4224 = vmatprep.subr.mxu0 0.0
    %4225 = vmatpush1.msra.mxu0 %v4189
    %4226 = vmatprep.subr.mxu0 0.0
    %4227 = vmatpush1.msra.mxu0 %v4188
    %4228 = vmatprep.subr.mxu0 0.0
    %4229 = vmatpush1.msra.mxu0 %v4187
    %4230 = vmatprep.subr.mxu0 0.0
    %4231 = vmatpush1.msra.mxu0 %v4186
    %4232 = vmatprep.subr.mxu0 0.0
    %4233 = vmatpush2.msra.mxu0 0.0
    %4234 = vmatprep.subr.mxu0 0.0
    %4235 = vmatpush2.msra.mxu0 0.0
    %4236 = vmatprep.subr.mxu0 0.0
    %4237 = vmatpush2.msra.mxu0 0.0
    %4238 = vmatprep.subr.mxu0 0.0
    %4239 = vmatpush2.msra.mxu0 0.0
    %4240 = vmatprep.subr.mxu0 0.0
    %4241 = vmatpush2.msra.mxu0 0.0
    %4242 = vmatprep.subr.mxu0 0.0
    %4243 = vmatpush2.msra.mxu0 0.0
    %4244 = vmatprep.subr.mxu0 0.0
    %4245 = vmatpush2.msra.mxu0 0.0
    %4246 = vmatprep.subr.mxu0 0.0
    %4247 = vmatpush2.msra.mxu0 0.0
    %4248 = vmatprep.subr.mxu0 0.0
    %4249 = vmatpush2.msra.mxu0 0.0
    %4250 = vmatprep.subr.mxu0 0.0
    %4251 = vmatpush2.msra.mxu0 0.0
    %4252 = vmatprep.subr.mxu0 0.0
    %4253 = vmatpush2.msra.mxu0 0.0
    %4254 = vmatprep.subr.mxu0 0.0
    %4255 = vmatpush2.msra.mxu0 0.0
    %4256 = vmatprep.subr.mxu0 0.0
    %4257 = vmatpush2.msra.mxu0 0.0
    %4258 = vmatprep.subr.mxu0 0.0
    %4259 = vmatpush2.msra.mxu0 0.0
    %4260 = vmatprep.subr.mxu0 0.0
    %4261 = vmatpush2.msra.mxu0 0.0
    %4262 = vmatprep.subr.mxu0 0.0
    %4263 = vmatpush2.msra.mxu0 0.0
    %4264 = vmatprep.mubr.f32.mxu0 0.0
    %4265 = vmatmul.mubr.f32.gmra.mxu0 %v4198
    %v4266 = vpop.f32.mrf.mxu0
    %v4267 = vadd.f32 %v4195, %v4266
    %v4268 = vpop.f32.mrf.mxu0
    %4269 = vdwg.mxu0
    %vm4270 = vcmask 31744
    %4271 = vst.msk [vmem:[%s9] sm:$0xff] %vm4270, %v4267
    // Predicated region
    $region58: #{lstm_model_forward.1} parent=1 // pred_check
      _
    $region59: #{lstm_model_forward.1} parent=1 // pred_check_branch
      %4273 = sbr.rel (0) target = $region61
    $region60: #{lstm_model_forward.1} parent=1 // pred_region
      _
    $region61: #{lstm_model_forward.1} parent=1 // pred_fallthru
      _
    // Predicated region
    $region62: #{lstm_model_forward.1} parent=1 // pred_check
      _
    $region63: #{lstm_model_forward.1} parent=1 // pred_check_branch
      %4275 = sbr.rel (0) target = $region65
    $region64: #{lstm_model_forward.1} parent=1 // pred_region
      _
    $region65: #{lstm_model_forward.1} parent=1 // pred_fallthru
      _
    %4276 = vsyncpa [#allocation8], 1
    %4277 = vsyncpa [#allocation10], 1
    %4278 = vsyncpa [#allocation13], 1

</llo_original>
